<compile_context>
chip_gen: v6e
topology: v6e:2x2x1
jax: 0.10.0
libtpu: 0.0.40
codegen_flags: <defaults>
</compile_context>

<pallas_src>
import jax
import jax.numpy as jnp
from jax.experimental import pallas as pl
from jax.experimental.pallas import tpu as pltpu

# --- hyperparameters from the PyTorch module -------------------------------
D_MODEL = 128
NUM_HEADS = 8
HEAD_DIM = D_MODEL // NUM_HEADS      # 16
HIDDEN_DIM = 512
NUM_LAYERS = 4
MAX_LEN = 7                          # real sequence length
S_PAD = 8                            # padded to a full sublane group
# The original script builds vocab/target dicts that end up empty (size 0);
# pick small deterministic sizes instead.
VOCAB_SIZE = 16
TARGET_SIZE = 8
OUT_PAD = 128                        # lane-dense classifier output width
LN_EPS = 1e-5
BATCH = 2
NEG_INF = -1e9


def _layernorm(x, gamma, beta):
    mean = jnp.mean(x, axis=-1, keepdims=True)
    var = jnp.mean((x - mean) * (x - mean), axis=-1, keepdims=True)
    return (x - mean) * jax.lax.rsqrt(var + LN_EPS) * gamma + beta


def encoder_kernel(x0_ref, mask_ref, emb_g_ref, emb_b_ref,
                   wqkv_ref, bqkv_ref, wo_ref, bo_ref,
                   w1_ref, b1_ref, w2_ref, b2_ref,
                   g1_ref, be1_ref, g2_ref, be2_ref,
                   wc_ref, bc_ref, out_ref, x_sc):
    l = pl.program_id(0)
    bf16 = jnp.bfloat16
    R = x0_ref.shape[0]                                  # folded batch rows (16)

    # ---- first grid step: embedding LayerNorm into the resident activation ----
    @pl.when(l == 0)
    def _():
        x_sc[...] = _layernorm(x0_ref[...], emb_g_ref[...], emb_b_ref[...])

    x = x_sc[...]                                        # (R, D) f32

    # ---- self attention: single (R,D)@(D,3D) bf16 MXU matmul for QKV ----
    # (1/sqrt(head_dim) is pre-folded into the Q columns on the host.)
    qkv = jnp.dot(x.astype(bf16), wqkv_ref[...],
                  preferred_element_type=jnp.float32) + bqkv_ref[...]    # (R, 3D)

    # Fold heads onto the sublane (row) axis -> (H*R, HEAD_DIM) slabs so the
    # whole attention is one score matmul + one softmax + one P@V.
    q_f = jnp.concatenate(
        [qkv[:, h * HEAD_DIM:(h + 1) * HEAD_DIM] for h in range(NUM_HEADS)],
        axis=0)
    k_f = jnp.concatenate(
        [qkv[:, D_MODEL + h * HEAD_DIM:D_MODEL + (h + 1) * HEAD_DIM]
         for h in range(NUM_HEADS)], axis=0)
    v_f = jnp.concatenate(
        [qkv[:, 2 * D_MODEL + h * HEAD_DIM:2 * D_MODEL + (h + 1) * HEAD_DIM]
         for h in range(NUM_HEADS)], axis=0)

    # scores: last-vs-last contraction (no explicit kh.T), bf16 operands
    s = jnp.einsum('qd,kd->qk', q_f.astype(bf16), k_f.astype(bf16),
                   preferred_element_type=jnp.float32) + mask_ref[...]   # (HR, HR)
    s = s - jnp.max(s, axis=-1, keepdims=True)
    p = jnp.exp(s)
    p = p * pl.reciprocal(jnp.sum(p, axis=-1, keepdims=True), approx=True)
    ctx_f = jnp.dot(p.astype(bf16), v_f.astype(bf16),
                    preferred_element_type=jnp.float32)                  # (HR, Dh)

    # heads back onto lanes (sublane-block slices are whole-vreg selects),
    # then a single output projection for all heads.
    ctx = jnp.concatenate(
        [ctx_f[h * R:(h + 1) * R, :] for h in range(NUM_HEADS)], axis=1)  # (R, D)
    attn = jnp.dot(ctx.astype(bf16), wo_ref[...],
                   preferred_element_type=jnp.float32) + bo_ref[...]
    x = _layernorm(x + attn, g1_ref[...], be1_ref[...])

    # ---- feed-forward (ReLU) ----
    ff = jnp.dot(x.astype(bf16), w1_ref[...],
                 preferred_element_type=jnp.float32) + b1_ref[...]
    ff = jnp.maximum(ff, 0.0)
    ff = jnp.dot(ff.astype(bf16), w2_ref[...],
                 preferred_element_type=jnp.float32) + b2_ref[...]
    x = _layernorm(x + ff, g2_ref[...], be2_ref[...])
    x_sc[...] = x

    # ---- last grid step: classifier (lane-dense); wrapper slices ----
    @pl.when(l == NUM_LAYERS - 1)
    def _():
        out_ref[...] = jnp.dot(x.astype(bf16), wc_ref[...],
                               preferred_element_type=jnp.float32) + bc_ref[...]


def prepare_params(p):
    """Pre-transpose / pad / scale-fold weights once on the host; bf16 matmul weights."""
    bf = jnp.bfloat16
    scale = 1.0 / (HEAD_DIM ** 0.5)

    # fold attention scale into the Q columns of the in-projection
    qscale = jnp.concatenate([jnp.full((D_MODEL,), scale, jnp.float32),
                              jnp.ones((2 * D_MODEL,), jnp.float32)])
    wqkv_t = jnp.transpose(p["wqkv"], (0, 2, 1)) * qscale[None, None, :]  # (L, D, 3D)
    bqkv = p["bqkv"] * qscale[None, None, :]                              # (L, 1, 3D)

    wc_pad = jnp.zeros((D_MODEL, OUT_PAD), jnp.float32).at[:, :TARGET_SIZE].set(p["wc"].T)
    bc_pad = jnp.zeros((1, OUT_PAD), jnp.float32).at[:, :TARGET_SIZE].set(p["bc"])
    return {
        "emb_g": p["emb_g"], "emb_b": p["emb_b"],
        "wqkv_t": wqkv_t.astype(bf), "bqkv": bqkv.astype(jnp.float32),
        "wo_t": jnp.transpose(p["wo"], (0, 2, 1)).astype(bf), "bo": p["bo"],
        "w1_t": jnp.transpose(p["w1"], (0, 2, 1)).astype(bf), "b1": p["b1"],
        "w2_t": jnp.transpose(p["w2"], (0, 2, 1)).astype(bf), "b2": p["b2"],
        "g1": p["g1"], "be1": p["be1"], "g2": p["g2"], "be2": p["be2"],
        "wc_t": wc_pad.astype(bf), "bc": bc_pad,
    }


def build_forward(params):
    """Hoist all host-side prep (weight transpose/cast, mask, pos) out of the
    per-call path and return a jitted forward(input_ids) -> (B, TARGET_SIZE)."""
    kp = prepare_params(params)
    R = BATCH * S_PAD
    HR = NUM_HEADS * R

    # Additive mask in the head-folded layout: allow only same-head, same-batch,
    # non-padded keys.
    row = jnp.arange(HR)
    head = row // R
    r = row % R
    b = r // S_PAD
    s = r % S_PAD
    allow = (head[:, None] == head[None, :]) & (b[:, None] == b[None, :]) & \
            (s[None, :] < MAX_LEN)
    mask = jnp.where(allow, 0.0, NEG_INF).astype(jnp.float32)            # (HR, HR)

    pos = jnp.pad(params["pos_embed"],
                  ((0, S_PAD - MAX_LEN), (0, 0))).astype(jnp.float32)    # (S_PAD, D)
    tok = params["tok_embed"].astype(jnp.float32)

    consts = [mask, kp["emb_g"], kp["emb_b"]]
    layer_ws = [kp["wqkv_t"], kp["bqkv"], kp["wo_t"], kp["bo"],
                kp["w1_t"], kp["b1"], kp["w2_t"], kp["b2"],
                kp["g1"], kp["be1"], kp["g2"], kp["be2"]]
    tail = [kp["wc_t"], kp["bc"]]

    def resident_spec(a):
        nd = a.ndim
        return pl.BlockSpec(a.shape, lambda l, _n=nd: (0,) * _n)

    def layer_spec(a):
        trailing = tuple(a.shape[1:])
        n = len(trailing)
        return pl.BlockSpec((None,) + trailing, lambda l, _n=n: (l,) + (0,) * _n)

    @jax.jit
    def forward(input_ids):
        B, S = input_ids.shape
        assert B == BATCH and S == MAX_LEN
        # Glue: embedding gather + pos add on the host; pad S 7->8, fold batch.
        emb = tok[input_ids] + pos[None, :S, :]                          # (B, S, D)
        emb = jnp.pad(emb, ((0, 0), (0, S_PAD - S), (0, 0)))
        x0 = emb.reshape(R, D_MODEL)

        operands = [x0] + consts + layer_ws + tail
        in_specs = ([resident_spec(x0)] + [resident_spec(a) for a in consts]
                    + [layer_spec(a) for a in layer_ws]
                    + [resident_spec(a) for a in tail])

        out = pl.pallas_call(
            encoder_kernel,
            out_shape=jax.ShapeDtypeStruct((R, OUT_PAD), jnp.float32),
            grid_spec=pltpu.PrefetchScalarGridSpec(
                num_scalar_prefetch=0,
                grid=(NUM_LAYERS,),
                in_specs=in_specs,
                out_specs=pl.BlockSpec((R, OUT_PAD), lambda l: (0, 0)),
                scratch_shapes=[pltpu.VMEM((R, D_MODEL), jnp.float32)],
            ),
            compiler_params=pltpu.CompilerParams(
                dimension_semantics=("arbitrary",),
                vmem_limit_bytes=16 << 20,
            ),
        )(*operands)

        # classifier uses token at position -2 of the *real* sequence (index 5)
        logits = out.reshape(B, S_PAD, OUT_PAD)[:, MAX_LEN - 2, :TARGET_SIZE]
        return logits

    return forward


def init_params(key):
    ks = list(jax.random.split(key, 16))
    n = lambda k, shape, s=0.02: (s * jax.random.normal(k, shape)).astype(jnp.float32)
    L, D, H, T = NUM_LAYERS, D_MODEL, HIDDEN_DIM, TARGET_SIZE
    return {
        # embedding
        "tok_embed": n(ks[0], (VOCAB_SIZE, D)),
        "pos_embed": n(ks[1], (MAX_LEN, D)),
        "emb_g": jnp.ones((1, D), jnp.float32),
        "emb_b": jnp.zeros((1, D), jnp.float32),
        # per-layer attention params (PyTorch (out, in) layout; transposed in prep)
        "wqkv": n(ks[2], (L, 3 * D, D)),
        "bqkv": n(ks[3], (L, 1, 3 * D)),
        "wo": n(ks[4], (L, D, D)),
        "bo": n(ks[5], (L, 1, D)),
        # per-layer FFN params
        "w1": n(ks[6], (L, HIDDEN_DIM, D)),
        "b1": n(ks[7], (L, 1, HIDDEN_DIM)),
        "w2": n(ks[8], (L, D, HIDDEN_DIM)),
        "b2": n(ks[9], (L, 1, D)),
        # per-layer norms
        "g1": jnp.ones((L, 1, D), jnp.float32),
        "be1": jnp.zeros((L, 1, D), jnp.float32),
        "g2": jnp.ones((L, 1, D), jnp.float32),
        "be2": jnp.zeros((L, 1, D), jnp.float32),
        # classifier
        "wc": n(ks[10], (T, D)),
        "bc": n(ks[11], (1, T)),
    }


if __name__ == "__main__":
    key = jax.random.PRNGKey(0)
    k_param, k_ids = jax.random.split(key)
    params = init_params(k_param)
    input_ids = jax.random.randint(k_ids, (BATCH, MAX_LEN), 0, VOCAB_SIZE,
                                   dtype=jnp.int32)

    forward = build_forward(params)          # one-time host prep + jit
    logits = forward(input_ids)
    jax.block_until_ready(logits)
    assert logits.shape == (BATCH, TARGET_SIZE)
    assert bool(jnp.all(jnp.isfinite(logits)))
    print("KERNEL_OK")
</pallas_src>

<mosaic_0001>
module attributes {stable_mosaic.version = 11 : i64} {
  func.func @encoder_kernel(%arg0: i32, %arg1: memref<16x128xf32, #tpu.memory_space<vmem>>, %arg2: memref<128x128xf32, #tpu.memory_space<vmem>>, %arg3: memref<1x128xf32, #tpu.memory_space<vmem>>, %arg4: memref<1x128xf32, #tpu.memory_space<vmem>>, %arg5: memref<1x128x384xbf16, #tpu.memory_space<vmem>>, %arg6: memref<1x1x384xf32, #tpu.memory_space<vmem>>, %arg7: memref<1x128x128xbf16, #tpu.memory_space<vmem>>, %arg8: memref<1x1x128xf32, #tpu.memory_space<vmem>>, %arg9: memref<1x128x512xbf16, #tpu.memory_space<vmem>>, %arg10: memref<1x1x512xf32, #tpu.memory_space<vmem>>, %arg11: memref<1x512x128xbf16, #tpu.memory_space<vmem>>, %arg12: memref<1x1x128xf32, #tpu.memory_space<vmem>>, %arg13: memref<1x1x128xf32, #tpu.memory_space<vmem>>, %arg14: memref<1x1x128xf32, #tpu.memory_space<vmem>>, %arg15: memref<1x1x128xf32, #tpu.memory_space<vmem>>, %arg16: memref<1x1x128xf32, #tpu.memory_space<vmem>>, %arg17: memref<128x128xbf16, #tpu.memory_space<vmem>>, %arg18: memref<1x128xf32, #tpu.memory_space<vmem>>, %arg19: memref<16x128xf32, #tpu.memory_space<vmem>>, %arg20: memref<16x128xf32, #tpu.memory_space<vmem>>) attributes {dimension_semantics = [#tpu.dimension_semantics<arbitrary>], iteration_bounds = array<i64: 4>, scalar_prefetch = 0 : i64, scratch_operands = 1 : i64, tpu.core_type = #tpu.core_type<tc>, window_params = [{pipeline_mode = #tpu.pipeline_mode<synchronous>, transform_indices = @transform_0, window_bounds = array<i64: 16, 128>}, {pipeline_mode = #tpu.pipeline_mode<synchronous>, transform_indices = @transform_1, window_bounds = array<i64: 128, 128>}, {pipeline_mode = #tpu.pipeline_mode<synchronous>, transform_indices = @transform_2, window_bounds = array<i64: 1, 128>}, {pipeline_mode = #tpu.pipeline_mode<synchronous>, transform_indices = @transform_3, window_bounds = array<i64: 1, 128>}, {transform_indices = @transform_4, window_bounds = array<i64: 1, 128, 384>}, {transform_indices = @transform_5, window_bounds = array<i64: 1, 1, 384>}, {transform_indices = @transform_6, window_bounds = array<i64: 1, 128, 128>}, {transform_indices = @transform_7, window_bounds = array<i64: 1, 1, 128>}, {transform_indices = @transform_8, window_bounds = array<i64: 1, 128, 512>}, {transform_indices = @transform_9, window_bounds = array<i64: 1, 1, 512>}, {transform_indices = @transform_10, window_bounds = array<i64: 1, 512, 128>}, {transform_indices = @transform_11, window_bounds = array<i64: 1, 1, 128>}, {transform_indices = @transform_12, window_bounds = array<i64: 1, 1, 128>}, {transform_indices = @transform_13, window_bounds = array<i64: 1, 1, 128>}, {transform_indices = @transform_14, window_bounds = array<i64: 1, 1, 128>}, {transform_indices = @transform_15, window_bounds = array<i64: 1, 1, 128>}, {pipeline_mode = #tpu.pipeline_mode<synchronous>, transform_indices = @transform_16, window_bounds = array<i64: 128, 128>}, {pipeline_mode = #tpu.pipeline_mode<synchronous>, transform_indices = @transform_17, window_bounds = array<i64: 1, 128>}, {pipeline_mode = #tpu.pipeline_mode<synchronous>, transform_indices = @transform_18, window_bounds = array<i64: 16, 128>}]} {
    %c0_i32 = arith.constant 0 : i32
    %0 = arith.cmpi eq, %arg0, %c0_i32 : i32
    %1 = arith.extui %0 : i1 to i32
    %c0_i32_0 = arith.constant 0 : i32
    %2 = arith.cmpi ne, %1, %c0_i32_0 : i32
    scf.if %2 {
      %c0_61 = arith.constant 0 : index
      %c0_62 = arith.constant 0 : index
      %154 = vector.load %arg1[%c0_61, %c0_62] : memref<16x128xf32, #tpu.memory_space<vmem>>, vector<16x128xf32>
      %c0_63 = arith.constant 0 : index
      %c0_64 = arith.constant 0 : index
      %155 = vector.load %arg3[%c0_63, %c0_64] : memref<1x128xf32, #tpu.memory_space<vmem>>, vector<1x128xf32>
      %c0_65 = arith.constant 0 : index
      %c0_66 = arith.constant 0 : index
      %156 = vector.load %arg4[%c0_65, %c0_66] : memref<1x128xf32, #tpu.memory_space<vmem>>, vector<1x128xf32>
      %cst_67 = arith.constant dense<0.000000e+00> : vector<16xf32>
      %157 = vector.multi_reduction <add>, %154, %cst_67 [1] : vector<16x128xf32> to vector<16xf32>
      %158 = vector.shape_cast %157 : vector<16xf32> to vector<16x1xf32>
      %cst_68 = arith.constant 1.280000e+02 : f32
      %159 = vector.broadcast %cst_68 : f32 to vector<16x1xf32>
      %160 = arith.divf %158, %159 : vector<16x1xf32>
      %161 = vector.broadcast %160 : vector<16x1xf32> to vector<16x128xf32>
      %162 = arith.subf %154, %161 : vector<16x128xf32>
      %163 = vector.broadcast %160 : vector<16x1xf32> to vector<16x128xf32>
      %164 = arith.subf %154, %163 : vector<16x128xf32>
      %165 = arith.mulf %162, %164 : vector<16x128xf32>
      %cst_69 = arith.constant dense<0.000000e+00> : vector<16xf32>
      %166 = vector.multi_reduction <add>, %165, %cst_69 [1] : vector<16x128xf32> to vector<16xf32>
      %167 = vector.shape_cast %166 : vector<16xf32> to vector<16x1xf32>
      %cst_70 = arith.constant 1.280000e+02 : f32
      %168 = vector.broadcast %cst_70 : f32 to vector<16x1xf32>
      %169 = arith.divf %167, %168 : vector<16x1xf32>
      %170 = vector.broadcast %160 : vector<16x1xf32> to vector<16x128xf32>
      %171 = arith.subf %154, %170 : vector<16x128xf32>
      %cst_71 = arith.constant 9.99999974E-6 : f32
      %172 = vector.broadcast %cst_71 : f32 to vector<16x1xf32>
      %173 = arith.addf %169, %172 : vector<16x1xf32>
      %174 = math.rsqrt %173 : vector<16x1xf32>
      %175 = vector.broadcast %174 : vector<16x1xf32> to vector<16x128xf32>
      %176 = arith.mulf %171, %175 : vector<16x128xf32>
      %177 = vector.broadcast %155 : vector<1x128xf32> to vector<16x128xf32>
      %178 = arith.mulf %176, %177 : vector<16x128xf32>
      %179 = vector.broadcast %156 : vector<1x128xf32> to vector<16x128xf32>
      %180 = arith.addf %178, %179 : vector<16x128xf32>
      %c0_72 = arith.constant 0 : index
      %c0_73 = arith.constant 0 : index
      %181 = vector.load %arg20[%c0_72, %c0_73] : memref<16x128xf32, #tpu.memory_space<vmem>>, vector<16x128xf32>
      tpu.vector_store %arg20[%c0_72, %c0_73], %180 {strides = array<i32>} : memref<16x128xf32, #tpu.memory_space<vmem>>, vector<16x128xf32>,
    } else {
    }
    %c0 = arith.constant 0 : index
    %c0_1 = arith.constant 0 : index
    %3 = vector.load %arg20[%c0, %c0_1] : memref<16x128xf32, #tpu.memory_space<vmem>>, vector<16x128xf32>
    %4 = arith.truncf %3 : vector<16x128xf32> to vector<16x128xbf16>
    %c0_2 = arith.constant 0 : index
    %c0_3 = arith.constant 0 : index
    %c0_4 = arith.constant 0 : index
    %5 = vector.load %arg5[%c0_2, %c0_3, %c0_4] : memref<1x128x384xbf16, #tpu.memory_space<vmem>>, vector<1x128x384xbf16>
    %6 = vector.shape_cast %5 : vector<1x128x384xbf16> to vector<128x384xbf16>
    %cst = arith.constant dense<0.000000e+00> : vector<16x384xf32>
    %7 = tpu.matmul %4, %6, %cst {dimension_numbers = #tpu.dot_dimension_numbers<[1], [0], [0], [1], [0, 0, 1, 1], [], []>} : vector<16x128xbf16>, vector<128x384xbf16>, vector<16x384xf32> -> vector<16x384xf32>
    %c0_5 = arith.constant 0 : index
    %c0_6 = arith.constant 0 : index
    %c0_7 = arith.constant 0 : index
    %8 = vector.load %arg6[%c0_5, %c0_6, %c0_7] : memref<1x1x384xf32, #tpu.memory_space<vmem>>, vector<1x1x384xf32>
    %9 = vector.shape_cast %8 : vector<1x1x384xf32> to vector<1x384xf32>
    %10 = vector.broadcast %9 : vector<1x384xf32> to vector<16x384xf32>
    %11 = arith.addf %7, %10 : vector<16x384xf32>
    %12 = vector.extract_strided_slice %11 {offsets = [0, 0], sizes = [16, 16], strides = [1, 1]} : vector<16x384xf32> to vector<16x16xf32>
    %13 = vector.extract_strided_slice %11 {offsets = [0, 16], sizes = [16, 16], strides = [1, 1]} : vector<16x384xf32> to vector<16x16xf32>
    %14 = vector.extract_strided_slice %11 {offsets = [0, 32], sizes = [16, 16], strides = [1, 1]} : vector<16x384xf32> to vector<16x16xf32>
    %15 = vector.extract_strided_slice %11 {offsets = [0, 48], sizes = [16, 16], strides = [1, 1]} : vector<16x384xf32> to vector<16x16xf32>
    %16 = vector.extract_strided_slice %11 {offsets = [0, 64], sizes = [16, 16], strides = [1, 1]} : vector<16x384xf32> to vector<16x16xf32>
    %17 = vector.extract_strided_slice %11 {offsets = [0, 80], sizes = [16, 16], strides = [1, 1]} : vector<16x384xf32> to vector<16x16xf32>
    %18 = vector.extract_strided_slice %11 {offsets = [0, 96], sizes = [16, 16], strides = [1, 1]} : vector<16x384xf32> to vector<16x16xf32>
    %19 = vector.extract_strided_slice %11 {offsets = [0, 112], sizes = [16, 16], strides = [1, 1]} : vector<16x384xf32> to vector<16x16xf32>
    %20 = tpu.concatenate %12, %13, %14, %15, %16, %17, %18, %19 in 0 : vector<16x16xf32>, vector<16x16xf32>, vector<16x16xf32>, vector<16x16xf32>, vector<16x16xf32>, vector<16x16xf32>, vector<16x16xf32>, vector<16x16xf32> -> vector<128x16xf32>
    %21 = vector.extract_strided_slice %11 {offsets = [0, 128], sizes = [16, 16], strides = [1, 1]} : vector<16x384xf32> to vector<16x16xf32>
    %22 = vector.extract_strided_slice %11 {offsets = [0, 144], sizes = [16, 16], strides = [1, 1]} : vector<16x384xf32> to vector<16x16xf32>
    %23 = vector.extract_strided_slice %11 {offsets = [0, 160], sizes = [16, 16], strides = [1, 1]} : vector<16x384xf32> to vector<16x16xf32>
    %24 = vector.extract_strided_slice %11 {offsets = [0, 176], sizes = [16, 16], strides = [1, 1]} : vector<16x384xf32> to vector<16x16xf32>
    %25 = vector.extract_strided_slice %11 {offsets = [0, 192], sizes = [16, 16], strides = [1, 1]} : vector<16x384xf32> to vector<16x16xf32>
    %26 = vector.extract_strided_slice %11 {offsets = [0, 208], sizes = [16, 16], strides = [1, 1]} : vector<16x384xf32> to vector<16x16xf32>
    %27 = vector.extract_strided_slice %11 {offsets = [0, 224], sizes = [16, 16], strides = [1, 1]} : vector<16x384xf32> to vector<16x16xf32>
    %28 = vector.extract_strided_slice %11 {offsets = [0, 240], sizes = [16, 16], strides = [1, 1]} : vector<16x384xf32> to vector<16x16xf32>
    %29 = tpu.concatenate %21, %22, %23, %24, %25, %26, %27, %28 in 0 : vector<16x16xf32>, vector<16x16xf32>, vector<16x16xf32>, vector<16x16xf32>, vector<16x16xf32>, vector<16x16xf32>, vector<16x16xf32>, vector<16x16xf32> -> vector<128x16xf32>
    %30 = vector.extract_strided_slice %11 {offsets = [0, 256], sizes = [16, 16], strides = [1, 1]} : vector<16x384xf32> to vector<16x16xf32>
    %31 = vector.extract_strided_slice %11 {offsets = [0, 272], sizes = [16, 16], strides = [1, 1]} : vector<16x384xf32> to vector<16x16xf32>
    %32 = vector.extract_strided_slice %11 {offsets = [0, 288], sizes = [16, 16], strides = [1, 1]} : vector<16x384xf32> to vector<16x16xf32>
    %33 = vector.extract_strided_slice %11 {offsets = [0, 304], sizes = [16, 16], strides = [1, 1]} : vector<16x384xf32> to vector<16x16xf32>
    %34 = vector.extract_strided_slice %11 {offsets = [0, 320], sizes = [16, 16], strides = [1, 1]} : vector<16x384xf32> to vector<16x16xf32>
    %35 = vector.extract_strided_slice %11 {offsets = [0, 336], sizes = [16, 16], strides = [1, 1]} : vector<16x384xf32> to vector<16x16xf32>
    %36 = vector.extract_strided_slice %11 {offsets = [0, 352], sizes = [16, 16], strides = [1, 1]} : vector<16x384xf32> to vector<16x16xf32>
    %37 = vector.extract_strided_slice %11 {offsets = [0, 368], sizes = [16, 16], strides = [1, 1]} : vector<16x384xf32> to vector<16x16xf32>
    %38 = tpu.concatenate %30, %31, %32, %33, %34, %35, %36, %37 in 0 : vector<16x16xf32>, vector<16x16xf32>, vector<16x16xf32>, vector<16x16xf32>, vector<16x16xf32>, vector<16x16xf32>, vector<16x16xf32>, vector<16x16xf32> -> vector<128x16xf32>
    %39 = arith.truncf %20 : vector<128x16xf32> to vector<128x16xbf16>
    %40 = arith.truncf %29 : vector<128x16xf32> to vector<128x16xbf16>
    "tpu.trace_start"() <{level = 10 : i32, message = "qd,kd->qk"}> : () -> ()
    %cst_8 = arith.constant dense<0.000000e+00> : vector<128x128xf32>
    %41 = tpu.matmul %39, %40, %cst_8 {dimension_numbers = #tpu.dot_dimension_numbers<[1], [1], [0], [0], [0, 0, 1, 0], [], []>} : vector<128x16xbf16>, vector<128x16xbf16>, vector<128x128xf32> -> vector<128x128xf32>
    "tpu.trace_stop"() : () -> ()
    %c0_9 = arith.constant 0 : index
    %c0_10 = arith.constant 0 : index
    %42 = vector.load %arg2[%c0_9, %c0_10] : memref<128x128xf32, #tpu.memory_space<vmem>>, vector<128x128xf32>
    %43 = arith.addf %41, %42 : vector<128x128xf32>
    %cst_11 = arith.constant dense<0xFF800000> : vector<128xf32>
    %44 = vector.multi_reduction <maximumf>, %43, %cst_11 [1] : vector<128x128xf32> to vector<128xf32>
    %45 = vector.shape_cast %44 : vector<128xf32> to vector<128x1xf32>
    %46 = vector.broadcast %45 : vector<128x1xf32> to vector<128x128xf32>
    %47 = arith.subf %43, %46 : vector<128x128xf32>
    %48 = math.exp %47 : vector<128x128xf32>
    %cst_12 = arith.constant dense<0.000000e+00> : vector<128xf32>
    %49 = vector.multi_reduction <add>, %48, %cst_12 [1] : vector<128x128xf32> to vector<128xf32>
    %50 = vector.shape_cast %49 : vector<128xf32> to vector<128x1xf32>
    %51 = tpu.reciprocal %50 {approx = true} : vector<128x1xf32> -> vector<128x1xf32>
    %52 = vector.broadcast %51 : vector<128x1xf32> to vector<128x128xf32>
    %53 = arith.mulf %48, %52 : vector<128x128xf32>
    %54 = arith.truncf %53 : vector<128x128xf32> to vector<128x128xbf16>
    %55 = arith.truncf %38 : vector<128x16xf32> to vector<128x16xbf16>
    %cst_13 = arith.constant dense<0.000000e+00> : vector<128x16xf32>
    %56 = tpu.matmul %54, %55, %cst_13 {dimension_numbers = #tpu.dot_dimension_numbers<[1], [0], [0], [1], [0, 0, 1, 1], [], []>} : vector<128x128xbf16>, vector<128x16xbf16>, vector<128x16xf32> -> vector<128x16xf32>
    %57 = vector.extract_strided_slice %56 {offsets = [0, 0], sizes = [16, 16], strides = [1, 1]} : vector<128x16xf32> to vector<16x16xf32>
    %58 = vector.extract_strided_slice %56 {offsets = [16, 0], sizes = [16, 16], strides = [1, 1]} : vector<128x16xf32> to vector<16x16xf32>
    %59 = vector.extract_strided_slice %56 {offsets = [32, 0], sizes = [16, 16], strides = [1, 1]} : vector<128x16xf32> to vector<16x16xf32>
    %60 = vector.extract_strided_slice %56 {offsets = [48, 0], sizes = [16, 16], strides = [1, 1]} : vector<128x16xf32> to vector<16x16xf32>
    %61 = vector.extract_strided_slice %56 {offsets = [64, 0], sizes = [16, 16], strides = [1, 1]} : vector<128x16xf32> to vector<16x16xf32>
    %62 = vector.extract_strided_slice %56 {offsets = [80, 0], sizes = [16, 16], strides = [1, 1]} : vector<128x16xf32> to vector<16x16xf32>
    %63 = vector.extract_strided_slice %56 {offsets = [96, 0], sizes = [16, 16], strides = [1, 1]} : vector<128x16xf32> to vector<16x16xf32>
    %64 = vector.extract_strided_slice %56 {offsets = [112, 0], sizes = [16, 16], strides = [1, 1]} : vector<128x16xf32> to vector<16x16xf32>
    %65 = tpu.concatenate %57, %58, %59, %60, %61, %62, %63, %64 in 1 : vector<16x16xf32>, vector<16x16xf32>, vector<16x16xf32>, vector<16x16xf32>, vector<16x16xf32>, vector<16x16xf32>, vector<16x16xf32>, vector<16x16xf32> -> vector<16x128xf32>
    %66 = arith.truncf %65 : vector<16x128xf32> to vector<16x128xbf16>
    %c0_14 = arith.constant 0 : index
    %c0_15 = arith.constant 0 : index
    %c0_16 = arith.constant 0 : index
    %67 = vector.load %arg7[%c0_14, %c0_15, %c0_16] : memref<1x128x128xbf16, #tpu.memory_space<vmem>>, vector<1x128x128xbf16>
    %68 = vector.shape_cast %67 : vector<1x128x128xbf16> to vector<128x128xbf16>
    %cst_17 = arith.constant dense<0.000000e+00> : vector<16x128xf32>
    %69 = tpu.matmul %66, %68, %cst_17 {dimension_numbers = #tpu.dot_dimension_numbers<[1], [0], [0], [1], [0, 0, 1, 1], [], []>} : vector<16x128xbf16>, vector<128x128xbf16>, vector<16x128xf32> -> vector<16x128xf32>
    %c0_18 = arith.constant 0 : index
    %c0_19 = arith.constant 0 : index
    %c0_20 = arith.constant 0 : index
    %70 = vector.load %arg8[%c0_18, %c0_19, %c0_20] : memref<1x1x128xf32, #tpu.memory_space<vmem>>, vector<1x1x128xf32>
    %71 = vector.shape_cast %70 : vector<1x1x128xf32> to vector<1x128xf32>
    %72 = vector.broadcast %71 : vector<1x128xf32> to vector<16x128xf32>
    %73 = arith.addf %69, %72 : vector<16x128xf32>
    %74 = arith.addf %3, %73 : vector<16x128xf32>
    %c0_21 = arith.constant 0 : index
    %c0_22 = arith.constant 0 : index
    %c0_23 = arith.constant 0 : index
    %75 = vector.load %arg13[%c0_21, %c0_22, %c0_23] : memref<1x1x128xf32, #tpu.memory_space<vmem>>, vector<1x1x128xf32>
    %76 = vector.shape_cast %75 : vector<1x1x128xf32> to vector<1x128xf32>
    %c0_24 = arith.constant 0 : index
    %c0_25 = arith.constant 0 : index
    %c0_26 = arith.constant 0 : index
    %77 = vector.load %arg14[%c0_24, %c0_25, %c0_26] : memref<1x1x128xf32, #tpu.memory_space<vmem>>, vector<1x1x128xf32>
    %78 = vector.shape_cast %77 : vector<1x1x128xf32> to vector<1x128xf32>
    %cst_27 = arith.constant dense<0.000000e+00> : vector<16xf32>
    %79 = vector.multi_reduction <add>, %74, %cst_27 [1] : vector<16x128xf32> to vector<16xf32>
    %80 = vector.shape_cast %79 : vector<16xf32> to vector<16x1xf32>
    %cst_28 = arith.constant 1.280000e+02 : f32
    %81 = vector.broadcast %cst_28 : f32 to vector<16x1xf32>
    %82 = arith.divf %80, %81 : vector<16x1xf32>
    %83 = vector.broadcast %82 : vector<16x1xf32> to vector<16x128xf32>
    %84 = arith.subf %74, %83 : vector<16x128xf32>
    %85 = vector.broadcast %82 : vector<16x1xf32> to vector<16x128xf32>
    %86 = arith.subf %74, %85 : vector<16x128xf32>
    %87 = arith.mulf %84, %86 : vector<16x128xf32>
    %cst_29 = arith.constant dense<0.000000e+00> : vector<16xf32>
    %88 = vector.multi_reduction <add>, %87, %cst_29 [1] : vector<16x128xf32> to vector<16xf32>
    %89 = vector.shape_cast %88 : vector<16xf32> to vector<16x1xf32>
    %cst_30 = arith.constant 1.280000e+02 : f32
    %90 = vector.broadcast %cst_30 : f32 to vector<16x1xf32>
    %91 = arith.divf %89, %90 : vector<16x1xf32>
    %92 = vector.broadcast %82 : vector<16x1xf32> to vector<16x128xf32>
    %93 = arith.subf %74, %92 : vector<16x128xf32>
    %cst_31 = arith.constant 9.99999974E-6 : f32
    %94 = vector.broadcast %cst_31 : f32 to vector<16x1xf32>
    %95 = arith.addf %91, %94 : vector<16x1xf32>
    %96 = math.rsqrt %95 : vector<16x1xf32>
    %97 = vector.broadcast %96 : vector<16x1xf32> to vector<16x128xf32>
    %98 = arith.mulf %93, %97 : vector<16x128xf32>
    %99 = vector.broadcast %76 : vector<1x128xf32> to vector<16x128xf32>
    %100 = arith.mulf %98, %99 : vector<16x128xf32>
    %101 = vector.broadcast %78 : vector<1x128xf32> to vector<16x128xf32>
    %102 = arith.addf %100, %101 : vector<16x128xf32>
    %103 = arith.truncf %102 : vector<16x128xf32> to vector<16x128xbf16>
    %c0_32 = arith.constant 0 : index
    %c0_33 = arith.constant 0 : index
    %c0_34 = arith.constant 0 : index
    %104 = vector.load %arg9[%c0_32, %c0_33, %c0_34] : memref<1x128x512xbf16, #tpu.memory_space<vmem>>, vector<1x128x512xbf16>
    %105 = vector.shape_cast %104 : vector<1x128x512xbf16> to vector<128x512xbf16>
    %cst_35 = arith.constant dense<0.000000e+00> : vector<16x512xf32>
    %106 = tpu.matmul %103, %105, %cst_35 {dimension_numbers = #tpu.dot_dimension_numbers<[1], [0], [0], [1], [0, 0, 1, 1], [], []>} : vector<16x128xbf16>, vector<128x512xbf16>, vector<16x512xf32> -> vector<16x512xf32>
    %c0_36 = arith.constant 0 : index
    %c0_37 = arith.constant 0 : index
    %c0_38 = arith.constant 0 : index
    %107 = vector.load %arg10[%c0_36, %c0_37, %c0_38] : memref<1x1x512xf32, #tpu.memory_space<vmem>>, vector<1x1x512xf32>
    %108 = vector.shape_cast %107 : vector<1x1x512xf32> to vector<1x512xf32>
    %109 = vector.broadcast %108 : vector<1x512xf32> to vector<16x512xf32>
    %110 = arith.addf %106, %109 : vector<16x512xf32>
    %cst_39 = arith.constant 0.000000e+00 : f32
    %111 = vector.broadcast %cst_39 : f32 to vector<16x512xf32>
    %112 = arith.maximumf %110, %111 : vector<16x512xf32>
    %113 = arith.truncf %112 : vector<16x512xf32> to vector<16x512xbf16>
    %c0_40 = arith.constant 0 : index
    %c0_41 = arith.constant 0 : index
    %c0_42 = arith.constant 0 : index
    %114 = vector.load %arg11[%c0_40, %c0_41, %c0_42] : memref<1x512x128xbf16, #tpu.memory_space<vmem>>, vector<1x512x128xbf16>
    %115 = vector.shape_cast %114 : vector<1x512x128xbf16> to vector<512x128xbf16>
    %cst_43 = arith.constant dense<0.000000e+00> : vector<16x128xf32>
    %116 = tpu.matmul %113, %115, %cst_43 {dimension_numbers = #tpu.dot_dimension_numbers<[1], [0], [0], [1], [0, 0, 1, 1], [], []>} : vector<16x512xbf16>, vector<512x128xbf16>, vector<16x128xf32> -> vector<16x128xf32>
    %c0_44 = arith.constant 0 : index
    %c0_45 = arith.constant 0 : index
    %c0_46 = arith.constant 0 : index
    %117 = vector.load %arg12[%c0_44, %c0_45, %c0_46] : memref<1x1x128xf32, #tpu.memory_space<vmem>>, vector<1x1x128xf32>
    %118 = vector.shape_cast %117 : vector<1x1x128xf32> to vector<1x128xf32>
    %119 = vector.broadcast %118 : vector<1x128xf32> to vector<16x128xf32>
    %120 = arith.addf %116, %119 : vector<16x128xf32>
    %121 = arith.addf %102, %120 : vector<16x128xf32>
    %c0_47 = arith.constant 0 : index
    %c0_48 = arith.constant 0 : index
    %c0_49 = arith.constant 0 : index
    %122 = vector.load %arg15[%c0_47, %c0_48, %c0_49] : memref<1x1x128xf32, #tpu.memory_space<vmem>>, vector<1x1x128xf32>
    %123 = vector.shape_cast %122 : vector<1x1x128xf32> to vector<1x128xf32>
    %c0_50 = arith.constant 0 : index
    %c0_51 = arith.constant 0 : index
    %c0_52 = arith.constant 0 : index
    %124 = vector.load %arg16[%c0_50, %c0_51, %c0_52] : memref<1x1x128xf32, #tpu.memory_space<vmem>>, vector<1x1x128xf32>
    %125 = vector.shape_cast %124 : vector<1x1x128xf32> to vector<1x128xf32>
    %cst_53 = arith.constant dense<0.000000e+00> : vector<16xf32>
    %126 = vector.multi_reduction <add>, %121, %cst_53 [1] : vector<16x128xf32> to vector<16xf32>
    %127 = vector.shape_cast %126 : vector<16xf32> to vector<16x1xf32>
    %cst_54 = arith.constant 1.280000e+02 : f32
    %128 = vector.broadcast %cst_54 : f32 to vector<16x1xf32>
    %129 = arith.divf %127, %128 : vector<16x1xf32>
    %130 = vector.broadcast %129 : vector<16x1xf32> to vector<16x128xf32>
    %131 = arith.subf %121, %130 : vector<16x128xf32>
    %132 = vector.broadcast %129 : vector<16x1xf32> to vector<16x128xf32>
    %133 = arith.subf %121, %132 : vector<16x128xf32>
    %134 = arith.mulf %131, %133 : vector<16x128xf32>
    %cst_55 = arith.constant dense<0.000000e+00> : vector<16xf32>
    %135 = vector.multi_reduction <add>, %134, %cst_55 [1] : vector<16x128xf32> to vector<16xf32>
    %136 = vector.shape_cast %135 : vector<16xf32> to vector<16x1xf32>
    %cst_56 = arith.constant 1.280000e+02 : f32
    %137 = vector.broadcast %cst_56 : f32 to vector<16x1xf32>
    %138 = arith.divf %136, %137 : vector<16x1xf32>
    %139 = vector.broadcast %129 : vector<16x1xf32> to vector<16x128xf32>
    %140 = arith.subf %121, %139 : vector<16x128xf32>
    %cst_57 = arith.constant 9.99999974E-6 : f32
    %141 = vector.broadcast %cst_57 : f32 to vector<16x1xf32>
    %142 = arith.addf %138, %141 : vector<16x1xf32>
    %143 = math.rsqrt %142 : vector<16x1xf32>
    %144 = vector.broadcast %143 : vector<16x1xf32> to vector<16x128xf32>
    %145 = arith.mulf %140, %144 : vector<16x128xf32>
    %146 = vector.broadcast %123 : vector<1x128xf32> to vector<16x128xf32>
    %147 = arith.mulf %145, %146 : vector<16x128xf32>
    %148 = vector.broadcast %125 : vector<1x128xf32> to vector<16x128xf32>
    %149 = arith.addf %147, %148 : vector<16x128xf32>
    %c0_58 = arith.constant 0 : index
    %c0_59 = arith.constant 0 : index
    %150 = vector.load %arg20[%c0_58, %c0_59] : memref<16x128xf32, #tpu.memory_space<vmem>>, vector<16x128xf32>
    tpu.vector_store %arg20[%c0_58, %c0_59], %149 {strides = array<i32>} : memref<16x128xf32, #tpu.memory_space<vmem>>, vector<16x128xf32>,
    %c3_i32 = arith.constant 3 : i32
    %151 = arith.cmpi eq, %arg0, %c3_i32 : i32
    %152 = arith.extui %151 : i1 to i32
    %c0_i32_60 = arith.constant 0 : i32
    %153 = arith.cmpi ne, %152, %c0_i32_60 : i32
    scf.if %153 {
      %154 = arith.truncf %149 : vector<16x128xf32> to vector<16x128xbf16>
      %c0_61 = arith.constant 0 : index
      %c0_62 = arith.constant 0 : index
      %155 = vector.load %arg17[%c0_61, %c0_62] : memref<128x128xbf16, #tpu.memory_space<vmem>>, vector<128x128xbf16>
      %cst_63 = arith.constant dense<0.000000e+00> : vector<16x128xf32>
      %156 = tpu.matmul %154, %155, %cst_63 {dimension_numbers = #tpu.dot_dimension_numbers<[1], [0], [0], [1], [0, 0, 1, 1], [], []>} : vector<16x128xbf16>, vector<128x128xbf16>, vector<16x128xf32> -> vector<16x128xf32>
      %c0_64 = arith.constant 0 : index
      %c0_65 = arith.constant 0 : index
      %157 = vector.load %arg18[%c0_64, %c0_65] : memref<1x128xf32, #tpu.memory_space<vmem>>, vector<1x128xf32>
      %158 = vector.broadcast %157 : vector<1x128xf32> to vector<16x128xf32>
      %159 = arith.addf %156, %158 : vector<16x128xf32>
      %c0_66 = arith.constant 0 : index
      %c0_67 = arith.constant 0 : index
      %160 = vector.load %arg19[%c0_66, %c0_67] : memref<16x128xf32, #tpu.memory_space<vmem>>, vector<16x128xf32>
      tpu.vector_store %arg19[%c0_66, %c0_67], %159 {strides = array<i32>} : memref<16x128xf32, #tpu.memory_space<vmem>>, vector<16x128xf32>,
    } else {
    }
    return
  }
  func.func @transform_0(%arg0: i32) -> (i32, i32) {
    %c0_i32 = arith.constant 0 : i32
    %c0_i32_0 = arith.constant 0 : i32
    %c0_i32_1 = arith.constant 0 : i32
    return %c0_i32, %c0_i32_0 : i32, i32
  }
  func.func @transform_1(%arg0: i32) -> (i32, i32) {
    %c0_i32 = arith.constant 0 : i32
    %c0_i32_0 = arith.constant 0 : i32
    %c0_i32_1 = arith.constant 0 : i32
    return %c0_i32, %c0_i32_0 : i32, i32
  }
  func.func @transform_2(%arg0: i32) -> (i32, i32) {
    %c0_i32 = arith.constant 0 : i32
    %c0_i32_0 = arith.constant 0 : i32
    %c0_i32_1 = arith.constant 0 : i32
    return %c0_i32, %c0_i32_0 : i32, i32
  }
  func.func @transform_3(%arg0: i32) -> (i32, i32) {
    %c0_i32 = arith.constant 0 : i32
    %c0_i32_0 = arith.constant 0 : i32
    %c0_i32_1 = arith.constant 0 : i32
    return %c0_i32, %c0_i32_0 : i32, i32
  }
  func.func @transform_4(%arg0: i32) -> (i32, i32, i32) {
    %c0_i32 = arith.constant 0 : i32
    %c0_i32_0 = arith.constant 0 : i32
    %c0_i32_1 = arith.constant 0 : i32
    return %arg0, %c0_i32, %c0_i32_0 : i32, i32, i32
  }
  func.func @transform_5(%arg0: i32) -> (i32, i32, i32) {
    %c0_i32 = arith.constant 0 : i32
    %c0_i32_0 = arith.constant 0 : i32
    %c0_i32_1 = arith.constant 0 : i32
    return %arg0, %c0_i32, %c0_i32_0 : i32, i32, i32
  }
  func.func @transform_6(%arg0: i32) -> (i32, i32, i32) {
    %c0_i32 = arith.constant 0 : i32
    %c0_i32_0 = arith.constant 0 : i32
    %c0_i32_1 = arith.constant 0 : i32
    return %arg0, %c0_i32, %c0_i32_0 : i32, i32, i32
  }
  func.func @transform_7(%arg0: i32) -> (i32, i32, i32) {
    %c0_i32 = arith.constant 0 : i32
    %c0_i32_0 = arith.constant 0 : i32
    %c0_i32_1 = arith.constant 0 : i32
    return %arg0, %c0_i32, %c0_i32_0 : i32, i32, i32
  }
  func.func @transform_8(%arg0: i32) -> (i32, i32, i32) {
    %c0_i32 = arith.constant 0 : i32
    %c0_i32_0 = arith.constant 0 : i32
    %c0_i32_1 = arith.constant 0 : i32
    return %arg0, %c0_i32, %c0_i32_0 : i32, i32, i32
  }
  func.func @transform_9(%arg0: i32) -> (i32, i32, i32) {
    %c0_i32 = arith.constant 0 : i32
    %c0_i32_0 = arith.constant 0 : i32
    %c0_i32_1 = arith.constant 0 : i32
    return %arg0, %c0_i32, %c0_i32_0 : i32, i32, i32
  }
  func.func @transform_10(%arg0: i32) -> (i32, i32, i32) {
    %c0_i32 = arith.constant 0 : i32
    %c0_i32_0 = arith.constant 0 : i32
    %c0_i32_1 = arith.constant 0 : i32
    return %arg0, %c0_i32, %c0_i32_0 : i32, i32, i32
  }
  func.func @transform_11(%arg0: i32) -> (i32, i32, i32) {
    %c0_i32 = arith.constant 0 : i32
    %c0_i32_0 = arith.constant 0 : i32
    %c0_i32_1 = arith.constant 0 : i32
    return %arg0, %c0_i32, %c0_i32_0 : i32, i32, i32
  }
  func.func @transform_12(%arg0: i32) -> (i32, i32, i32) {
    %c0_i32 = arith.constant 0 : i32
    %c0_i32_0 = arith.constant 0 : i32
    %c0_i32_1 = arith.constant 0 : i32
    return %arg0, %c0_i32, %c0_i32_0 : i32, i32, i32
  }
  func.func @transform_13(%arg0: i32) -> (i32, i32, i32) {
    %c0_i32 = arith.constant 0 : i32
    %c0_i32_0 = arith.constant 0 : i32
    %c0_i32_1 = arith.constant 0 : i32
    return %arg0, %c0_i32, %c0_i32_0 : i32, i32, i32
  }
  func.func @transform_14(%arg0: i32) -> (i32, i32, i32) {
    %c0_i32 = arith.constant 0 : i32
    %c0_i32_0 = arith.constant 0 : i32
    %c0_i32_1 = arith.constant 0 : i32
    return %arg0, %c0_i32, %c0_i32_0 : i32, i32, i32
  }
  func.func @transform_15(%arg0: i32) -> (i32, i32, i32) {
    %c0_i32 = arith.constant 0 : i32
    %c0_i32_0 = arith.constant 0 : i32
    %c0_i32_1 = arith.constant 0 : i32
    return %arg0, %c0_i32, %c0_i32_0 : i32, i32, i32
  }
  func.func @transform_16(%arg0: i32) -> (i32, i32) {
    %c0_i32 = arith.constant 0 : i32
    %c0_i32_0 = arith.constant 0 : i32
    %c0_i32_1 = arith.constant 0 : i32
    return %c0_i32, %c0_i32_0 : i32, i32
  }
  func.func @transform_17(%arg0: i32) -> (i32, i32) {
    %c0_i32 = arith.constant 0 : i32
    %c0_i32_0 = arith.constant 0 : i32
    %c0_i32_1 = arith.constant 0 : i32
    return %c0_i32, %c0_i32_0 : i32, i32
  }
  func.func @transform_18(%arg0: i32) -> (i32, i32) {
    %c0_i32 = arith.constant 0 : i32
    %c0_i32_0 = arith.constant 0 : i32
    %c0_i32_1 = arith.constant 0 : i32
    return %c0_i32, %c0_i32_0 : i32, i32
  }
}

</mosaic_0001>

<llo_original>
// kernel: forward.1
$region0: #{forward.1}
  #allocation0 [shape = 'u32[]', space=smem, size = 0x4, offset = 0x4, fixed_abs, tag = 'smem constant byte address 0x4 - core index']
  #allocation1 [shape = 'u32[144,128]{1,0:T(1,128)}', space=vmem, size = 0x12000, scoped, tag = 'internal scratch']
  #allocation2 [shape = 'f32[16,128]{1,0:T(8,128)}', space=vmem, size = 0x2000, scoped, tag = 'scratch operand']
  %s0 = inlined_call_operand.vmem [shape: f32[16,128], index: 0, kind: input, shape index: {}]
  %s1 = inlined_call_operand.hbm [shape: f32[128,128], index: 1, kind: input, shape index: {}]
  %s2 = inlined_call_operand.vmem [shape: f32[1,128], index: 2, kind: input, shape index: {}]
  %s3 = inlined_call_operand.vmem [shape: f32[1,128], index: 3, kind: input, shape index: {}]
  %s4 = inlined_call_operand.hbm [shape: bf16[4,128,384], index: 4, kind: input, shape index: {}]
  %s5 = inlined_call_operand.hbm [shape: f32[4,1,384], index: 5, kind: input, shape index: {}]
  %s6 = inlined_call_operand.vmem [shape: bf16[4,128,128], index: 6, kind: input, shape index: {}]
  %s7 = inlined_call_operand.hbm [shape: f32[4,1,128], index: 7, kind: input, shape index: {}]
  %s8 = inlined_call_operand.hbm [shape: bf16[4,128,512], index: 8, kind: input, shape index: {}]
  %s9 = inlined_call_operand.vmem [shape: f32[4,1,512], index: 9, kind: input, shape index: {}]
  %s10 = inlined_call_operand.hbm [shape: bf16[4,512,128], index: 10, kind: input, shape index: {}]
  %s11 = inlined_call_operand.hbm [shape: f32[4,1,128], index: 11, kind: input, shape index: {}]
  %s12 = inlined_call_operand.vmem [shape: f32[4,1,128], index: 12, kind: input, shape index: {}, may-alias: {12,14}]
  %s13 = inlined_call_operand.vmem [shape: f32[4,1,128], index: 13, kind: input, shape index: {}, may-alias: {13,15}]
  %s14 = inlined_call_operand.vmem [shape: f32[4,1,128], index: 14, kind: input, shape index: {}, may-alias: {12,14}]
  %s15 = inlined_call_operand.vmem [shape: f32[4,1,128], index: 15, kind: input, shape index: {}, may-alias: {13,15}]
  %s16 = inlined_call_operand.hbm [shape: bf16[128,128], index: 16, kind: input, shape index: {}]
  %s17 = inlined_call_operand.vmem [shape: f32[1,128], index: 17, kind: input, shape index: {}]
  %s18 = inlined_call_operand.vmem [shape: f32[16,128], index: 18, kind: output, shape index: {}]
  %s19 = sld [smem:[#allocation0]]
  $region145: #{forward.1} parent=0
    _
  %s21 = ssub.s32 1, %s19
  %s22 = scalar_select 0, %s21, %s19
  $region1: #{forward.1} parent=0
    #allocation3 [shape = 'u8[65536]{0}', space=vmem, size = 0x10000, scoped, tag = 'input window, operand 1, single buffered']
    #allocation4 [shape = 's32[2]{0}', space=sflag, size = 0x8, scoped, tag = 'scoped memory for forward.1']
    #allocation5 [shape = 'u8[196608]{0}', space=vmem, size = 0x30000, scoped, tag = 'input window, operand 4']
    #allocation6 [shape = 's32[2]{0}', space=sflag, size = 0x8, scoped, tag = 'scoped memory for forward.1']
    #allocation7 [shape = 'u8[3072]{0}', space=vmem, size = 0xc00, scoped, tag = 'input window, operand 5']
    #allocation8 [shape = 'u8[1024]{0}', space=vmem, size = 0x400, scoped, tag = 'input window, operand 7']
    #allocation9 [shape = 's32[2]{0}', space=sflag, size = 0x8, scoped, tag = 'scoped memory for forward.1']
    #allocation10 [shape = 'u8[262144]{0}', space=vmem, size = 0x40000, scoped, tag = 'input window, operand 8']
    #allocation11 [shape = 'u8[262144]{0}', space=vmem, size = 0x40000, scoped, tag = 'input window, operand 10']
    #allocation12 [shape = 's32[2]{0}', space=sflag, size = 0x8, scoped, tag = 'scoped memory for forward.1']
    #allocation13 [shape = 'u8[1024]{0}', space=vmem, size = 0x400, scoped, tag = 'input window, operand 11']
    #allocation14 [shape = 'u8[32768]{0}', space=vmem, size = 0x8000, scoped, tag = 'input window, operand 16, single buffered']
    #allocation15 [shape = 's32[1]{0}', space=sflag, size = 0x4, scoped, tag = 'scoped memory for forward.1']
    %23 = vsyncpa [#allocation4], 0
    %24 = vsyncpa [#allocation6], 0
    %s25 = scalar_lea.sflag [#allocation6], 1
    %26 = vsyncpa %s25, 0
    %27 = vsyncpa [#allocation9], 0
    %s28 = scalar_lea.sflag [#allocation9], 1
    %29 = vsyncpa %s28, 0
    %30 = vsyncpa [#allocation12], 0
    %s31 = scalar_lea.sflag [#allocation12], 1
    %32 = vsyncpa %s31, 0
    %33 = vsyncpa [#allocation15], 0
    loop: start=0, step=1, limit=6
    $region2: #{forward.1} parent=1 // loop_pre_header
      _
    $region3: #{forward.1} parent=1 // loop_header
      %s35 = sphi 0, %s39
      %p36 = scmp.ge.s32.totalorder %s35, 6
      %s43 = sphi 0, %s43
      %s45 = sphi 0, %s43
      %s46 = sphi 0, %s45
      %s60 = sphi 0, %s46
      %s64 = sphi 0, %s64
      %s66 = sphi 0, %s64
      %s67 = sphi 0, %s66
      %s81 = sphi 0, %s67
      %s85 = sphi 0, %s85
      %s87 = sphi 0, %s85
      %s88 = sphi 0, %s87
      %s102 = sphi 0, %s88
      %s106 = sphi 0, %s106
      %s108 = sphi 0, %s106
      %s109 = sphi 0, %s108
      %s123 = sphi 0, %s109
      %s129 = sphi 0, %s131
      %s132 = sphi 0, %s129
      %s133 = sphi 0, %s132
      %s149 = sphi 0, %s133
      %s155 = sphi 0, %s157
      %s158 = sphi 0, %s155
      %s159 = sphi 0, %s158
      %s175 = sphi 0, %s159
      %s181 = sphi 0, %s183
      %s184 = sphi 0, %s181
      %s185 = sphi 0, %s184
      %s201 = sphi 0, %s185
      %s207 = sphi 0, %s209
      %s210 = sphi 0, %s207
      %s211 = sphi 0, %s210
      %s227 = sphi 0, %s211
      %s233 = sphi 0, %s235
      %s236 = sphi 0, %s233
      %s237 = sphi 0, %s236
      %s253 = sphi 0, %s237
      %s259 = sphi 0, %s261
      %s262 = sphi 0, %s259
      %s263 = sphi 0, %s262
      %s279 = sphi 0, %s263
      %s285 = sphi 0, %s287
      %s288 = sphi 0, %s285
      %s289 = sphi 0, %s288
      %s305 = sphi 0, %s289
      %s311 = sphi 0, %s313
      %s314 = sphi 0, %s311
      %s315 = sphi 0, %s314
      %s331 = sphi 0, %s315
      %s337 = sphi 0, %s339
      %s340 = sphi 0, %s337
      %s341 = sphi 0, %s340
      %s357 = sphi 0, %s341
      %s363 = sphi 0, %s365
      %s366 = sphi 0, %s363
      %s367 = sphi 0, %s366
      %s383 = sphi 0, %s367
      %s389 = sphi 0, %s391
      %s392 = sphi 0, %s389
      %s393 = sphi 0, %s392
      %s409 = sphi 0, %s393
      %s415 = sphi 0, %s417
      %s418 = sphi 0, %s415
      %s419 = sphi 0, %s418
      %s435 = sphi 0, %s419
      %s439 = sphi 0, %s439
      %s441 = sphi 0, %s439
      %s442 = sphi 0, %s441
      %s456 = sphi 0, %s442
      %s460 = sphi 0, %s460
      %s462 = sphi 0, %s460
      %s463 = sphi 0, %s462
      %s477 = sphi 0, %s463
      %s481 = sphi 0, %s481
      %s483 = sphi 0, %s481
      %s484 = sphi 0, %s483
      %s498 = sphi 0, %s484
    $region4: #{forward.1} parent=1 // loop_header_branch
      %38 = sbr.rel (%p36) target = $region8
    $region5: #{forward.1} parent=1 // loop_body
      %s40 = ssub.s32 %s35, 1
      %s41 = ssub.s32 %s35, 2
      %s42 = sadd.s32 %s35, 1
      %s44 = sadd.s32 %s43, 1
      %p47 = scmp.eq.s32.totalorder %s35, 3
      %p48 = scmp.ne.s32.totalorder %s43, %s45
      %p49 = scmp.eq.s32.totalorder %s35, 0
      %p50 = por %p48, %p49
      %p51 = scmp.ne.s32.totalorder %s43, %s45
      %p52 = scmp.eq.s32.totalorder %s40, 3
      %p53 = por %p51, %p52
      %p54 = scmp.ne.s32.totalorder %s45, %s46
      %p55 = scmp.eq.s32.totalorder %s40, 0
      %p56 = por %p54, %p55
      %p57 = scmp.ne.s32.totalorder %s45, %s46
      %p58 = scmp.eq.s32.totalorder %s41, 3
      %p59 = por %p57, %p58
      %p61 = scmp.ne.s32.totalorder %s46, %s60
      %p62 = scmp.eq.s32.totalorder %s41, 0
      %p63 = por %p61, %p62
      %s65 = sadd.s32 %s64, 1
      %p68 = scmp.eq.s32.totalorder %s35, 3
      %p69 = scmp.ne.s32.totalorder %s64, %s66
      %p70 = scmp.eq.s32.totalorder %s35, 0
      %p71 = por %p69, %p70
      %p72 = scmp.ne.s32.totalorder %s64, %s66
      %p73 = scmp.eq.s32.totalorder %s40, 3
      %p74 = por %p72, %p73
      %p75 = scmp.ne.s32.totalorder %s66, %s67
      %p76 = scmp.eq.s32.totalorder %s40, 0
      %p77 = por %p75, %p76
      %p78 = scmp.ne.s32.totalorder %s66, %s67
      %p79 = scmp.eq.s32.totalorder %s41, 3
      %p80 = por %p78, %p79
      %p82 = scmp.ne.s32.totalorder %s67, %s81
      %p83 = scmp.eq.s32.totalorder %s41, 0
      %p84 = por %p82, %p83
      %s86 = sadd.s32 %s85, 1
      %p89 = scmp.eq.s32.totalorder %s35, 3
      %p90 = scmp.ne.s32.totalorder %s85, %s87
      %p91 = scmp.eq.s32.totalorder %s35, 0
      %p92 = por %p90, %p91
      %p93 = scmp.ne.s32.totalorder %s85, %s87
      %p94 = scmp.eq.s32.totalorder %s40, 3
      %p95 = por %p93, %p94
      %p96 = scmp.ne.s32.totalorder %s87, %s88
      %p97 = scmp.eq.s32.totalorder %s40, 0
      %p98 = por %p96, %p97
      %p99 = scmp.ne.s32.totalorder %s87, %s88
      %p100 = scmp.eq.s32.totalorder %s41, 3
      %p101 = por %p99, %p100
      %p103 = scmp.ne.s32.totalorder %s88, %s102
      %p104 = scmp.eq.s32.totalorder %s41, 0
      %p105 = por %p103, %p104
      %s107 = sadd.s32 %s106, 1
      %p110 = scmp.eq.s32.totalorder %s35, 3
      %p111 = scmp.ne.s32.totalorder %s106, %s108
      %p112 = scmp.eq.s32.totalorder %s35, 0
      %p113 = por %p111, %p112
      %p114 = scmp.ne.s32.totalorder %s106, %s108
      %p115 = scmp.eq.s32.totalorder %s40, 3
      %p116 = por %p114, %p115
      %p117 = scmp.ne.s32.totalorder %s108, %s109
      %p118 = scmp.eq.s32.totalorder %s40, 0
      %p119 = por %p117, %p118
      %p120 = scmp.ne.s32.totalorder %s108, %s109
      %p121 = scmp.eq.s32.totalorder %s41, 3
      %p122 = por %p120, %p121
      %p124 = scmp.ne.s32.totalorder %s109, %s123
      %p125 = scmp.eq.s32.totalorder %s41, 0
      %p126 = por %p124, %p125
      %s127 = ssub.s32 %s35, %s42
      %p128 = scmp.eq.s32.totalorder %s127, 0
      %s130 = sadd.s32 %s129, 1
      %s131 = scalar_select %p128, %s129, %s130
      %p134 = pneg %p128
      %p135 = scmp.eq.s32.totalorder %s35, 3
      %p136 = por %p134, %p135
      %p137 = scmp.ne.s32.totalorder %s129, %s132
      %p138 = scmp.eq.s32.totalorder %s35, 0
      %p139 = por %p137, %p138
      %p140 = scmp.ne.s32.totalorder %s129, %s132
      %p141 = scmp.eq.s32.totalorder %s40, 3
      %p142 = por %p140, %p141
      %p143 = scmp.ne.s32.totalorder %s132, %s133
      %p144 = scmp.eq.s32.totalorder %s40, 0
      %p145 = por %p143, %p144
      %p146 = scmp.ne.s32.totalorder %s132, %s133
      %p147 = scmp.eq.s32.totalorder %s41, 3
      %p148 = por %p146, %p147
      %p150 = scmp.ne.s32.totalorder %s133, %s149
      %p151 = scmp.eq.s32.totalorder %s41, 0
      %p152 = por %p150, %p151
      %s153 = ssub.s32 %s35, %s42
      %p154 = scmp.eq.s32.totalorder %s153, 0
      %s156 = sadd.s32 %s155, 1
      %s157 = scalar_select %p154, %s155, %s156
      %p160 = pneg %p154
      %p161 = scmp.eq.s32.totalorder %s35, 3
      %p162 = por %p160, %p161
      %p163 = scmp.ne.s32.totalorder %s155, %s158
      %p164 = scmp.eq.s32.totalorder %s35, 0
      %p165 = por %p163, %p164
      %p166 = scmp.ne.s32.totalorder %s155, %s158
      %p167 = scmp.eq.s32.totalorder %s40, 3
      %p168 = por %p166, %p167
      %p169 = scmp.ne.s32.totalorder %s158, %s159
      %p170 = scmp.eq.s32.totalorder %s40, 0
      %p171 = por %p169, %p170
      %p172 = scmp.ne.s32.totalorder %s158, %s159
      %p173 = scmp.eq.s32.totalorder %s41, 3
      %p174 = por %p172, %p173
      %p176 = scmp.ne.s32.totalorder %s159, %s175
      %p177 = scmp.eq.s32.totalorder %s41, 0
      %p178 = por %p176, %p177
      %s179 = ssub.s32 %s35, %s42
      %p180 = scmp.eq.s32.totalorder %s179, 0
      %s182 = sadd.s32 %s181, 1
      %s183 = scalar_select %p180, %s181, %s182
      %p186 = pneg %p180
      %p187 = scmp.eq.s32.totalorder %s35, 3
      %p188 = por %p186, %p187
      %p189 = scmp.ne.s32.totalorder %s181, %s184
      %p190 = scmp.eq.s32.totalorder %s35, 0
      %p191 = por %p189, %p190
      %p192 = scmp.ne.s32.totalorder %s181, %s184
      %p193 = scmp.eq.s32.totalorder %s40, 3
      %p194 = por %p192, %p193
      %p195 = scmp.ne.s32.totalorder %s184, %s185
      %p196 = scmp.eq.s32.totalorder %s40, 0
      %p197 = por %p195, %p196
      %p198 = scmp.ne.s32.totalorder %s184, %s185
      %p199 = scmp.eq.s32.totalorder %s41, 3
      %p200 = por %p198, %p199
      %p202 = scmp.ne.s32.totalorder %s185, %s201
      %p203 = scmp.eq.s32.totalorder %s41, 0
      %p204 = por %p202, %p203
      %s205 = ssub.s32 %s35, %s42
      %p206 = scmp.eq.s32.totalorder %s205, 0
      %s208 = sadd.s32 %s207, 1
      %s209 = scalar_select %p206, %s207, %s208
      %p212 = pneg %p206
      %p213 = scmp.eq.s32.totalorder %s35, 3
      %p214 = por %p212, %p213
      %p215 = scmp.ne.s32.totalorder %s207, %s210
      %p216 = scmp.eq.s32.totalorder %s35, 0
      %p217 = por %p215, %p216
      %p218 = scmp.ne.s32.totalorder %s207, %s210
      %p219 = scmp.eq.s32.totalorder %s40, 3
      %p220 = por %p218, %p219
      %p221 = scmp.ne.s32.totalorder %s210, %s211
      %p222 = scmp.eq.s32.totalorder %s40, 0
      %p223 = por %p221, %p222
      %p224 = scmp.ne.s32.totalorder %s210, %s211
      %p225 = scmp.eq.s32.totalorder %s41, 3
      %p226 = por %p224, %p225
      %p228 = scmp.ne.s32.totalorder %s211, %s227
      %p229 = scmp.eq.s32.totalorder %s41, 0
      %p230 = por %p228, %p229
      %s231 = ssub.s32 %s35, %s42
      %p232 = scmp.eq.s32.totalorder %s231, 0
      %s234 = sadd.s32 %s233, 1
      %s235 = scalar_select %p232, %s233, %s234
      %p238 = pneg %p232
      %p239 = scmp.eq.s32.totalorder %s35, 3
      %p240 = por %p238, %p239
      %p241 = scmp.ne.s32.totalorder %s233, %s236
      %p242 = scmp.eq.s32.totalorder %s35, 0
      %p243 = por %p241, %p242
      %p244 = scmp.ne.s32.totalorder %s233, %s236
      %p245 = scmp.eq.s32.totalorder %s40, 3
      %p246 = por %p244, %p245
      %p247 = scmp.ne.s32.totalorder %s236, %s237
      %p248 = scmp.eq.s32.totalorder %s40, 0
      %p249 = por %p247, %p248
      %p250 = scmp.ne.s32.totalorder %s236, %s237
      %p251 = scmp.eq.s32.totalorder %s41, 3
      %p252 = por %p250, %p251
      %p254 = scmp.ne.s32.totalorder %s237, %s253
      %p255 = scmp.eq.s32.totalorder %s41, 0
      %p256 = por %p254, %p255
      %s257 = ssub.s32 %s35, %s42
      %p258 = scmp.eq.s32.totalorder %s257, 0
      %s260 = sadd.s32 %s259, 1
      %s261 = scalar_select %p258, %s259, %s260
      %p264 = pneg %p258
      %p265 = scmp.eq.s32.totalorder %s35, 3
      %p266 = por %p264, %p265
      %p267 = scmp.ne.s32.totalorder %s259, %s262
      %p268 = scmp.eq.s32.totalorder %s35, 0
      %p269 = por %p267, %p268
      %p270 = scmp.ne.s32.totalorder %s259, %s262
      %p271 = scmp.eq.s32.totalorder %s40, 3
      %p272 = por %p270, %p271
      %p273 = scmp.ne.s32.totalorder %s262, %s263
      %p274 = scmp.eq.s32.totalorder %s40, 0
      %p275 = por %p273, %p274
      %p276 = scmp.ne.s32.totalorder %s262, %s263
      %p277 = scmp.eq.s32.totalorder %s41, 3
      %p278 = por %p276, %p277
      %p280 = scmp.ne.s32.totalorder %s263, %s279
      %p281 = scmp.eq.s32.totalorder %s41, 0
      %p282 = por %p280, %p281
      %s283 = ssub.s32 %s35, %s42
      %p284 = scmp.eq.s32.totalorder %s283, 0
      %s286 = sadd.s32 %s285, 1
      %s287 = scalar_select %p284, %s285, %s286
      %p290 = pneg %p284
      %p291 = scmp.eq.s32.totalorder %s35, 3
      %p292 = por %p290, %p291
      %p293 = scmp.ne.s32.totalorder %s285, %s288
      %p294 = scmp.eq.s32.totalorder %s35, 0
      %p295 = por %p293, %p294
      %p296 = scmp.ne.s32.totalorder %s285, %s288
      %p297 = scmp.eq.s32.totalorder %s40, 3
      %p298 = por %p296, %p297
      %p299 = scmp.ne.s32.totalorder %s288, %s289
      %p300 = scmp.eq.s32.totalorder %s40, 0
      %p301 = por %p299, %p300
      %p302 = scmp.ne.s32.totalorder %s288, %s289
      %p303 = scmp.eq.s32.totalorder %s41, 3
      %p304 = por %p302, %p303
      %p306 = scmp.ne.s32.totalorder %s289, %s305
      %p307 = scmp.eq.s32.totalorder %s41, 0
      %p308 = por %p306, %p307
      %s309 = ssub.s32 %s35, %s42
      %p310 = scmp.eq.s32.totalorder %s309, 0
      %s312 = sadd.s32 %s311, 1
      %s313 = scalar_select %p310, %s311, %s312
      %p316 = pneg %p310
      %p317 = scmp.eq.s32.totalorder %s35, 3
      %p318 = por %p316, %p317
      %p319 = scmp.ne.s32.totalorder %s311, %s314
      %p320 = scmp.eq.s32.totalorder %s35, 0
      %p321 = por %p319, %p320
      %p322 = scmp.ne.s32.totalorder %s311, %s314
      %p323 = scmp.eq.s32.totalorder %s40, 3
      %p324 = por %p322, %p323
      %p325 = scmp.ne.s32.totalorder %s314, %s315
      %p326 = scmp.eq.s32.totalorder %s40, 0
      %p327 = por %p325, %p326
      %p328 = scmp.ne.s32.totalorder %s314, %s315
      %p329 = scmp.eq.s32.totalorder %s41, 3
      %p330 = por %p328, %p329
      %p332 = scmp.ne.s32.totalorder %s315, %s331
      %p333 = scmp.eq.s32.totalorder %s41, 0
      %p334 = por %p332, %p333
      %s335 = ssub.s32 %s35, %s42
      %p336 = scmp.eq.s32.totalorder %s335, 0
      %s338 = sadd.s32 %s337, 1
      %s339 = scalar_select %p336, %s337, %s338
      %p342 = pneg %p336
      %p343 = scmp.eq.s32.totalorder %s35, 3
      %p344 = por %p342, %p343
      %p345 = scmp.ne.s32.totalorder %s337, %s340
      %p346 = scmp.eq.s32.totalorder %s35, 0
      %p347 = por %p345, %p346
      %p348 = scmp.ne.s32.totalorder %s337, %s340
      %p349 = scmp.eq.s32.totalorder %s40, 3
      %p350 = por %p348, %p349
      %p351 = scmp.ne.s32.totalorder %s340, %s341
      %p352 = scmp.eq.s32.totalorder %s40, 0
      %p353 = por %p351, %p352
      %p354 = scmp.ne.s32.totalorder %s340, %s341
      %p355 = scmp.eq.s32.totalorder %s41, 3
      %p356 = por %p354, %p355
      %p358 = scmp.ne.s32.totalorder %s341, %s357
      %p359 = scmp.eq.s32.totalorder %s41, 0
      %p360 = por %p358, %p359
      %s361 = ssub.s32 %s35, %s42
      %p362 = scmp.eq.s32.totalorder %s361, 0
      %s364 = sadd.s32 %s363, 1
      %s365 = scalar_select %p362, %s363, %s364
      %p368 = pneg %p362
      %p369 = scmp.eq.s32.totalorder %s35, 3
      %p370 = por %p368, %p369
      %p371 = scmp.ne.s32.totalorder %s363, %s366
      %p372 = scmp.eq.s32.totalorder %s35, 0
      %p373 = por %p371, %p372
      %p374 = scmp.ne.s32.totalorder %s363, %s366
      %p375 = scmp.eq.s32.totalorder %s40, 3
      %p376 = por %p374, %p375
      %p377 = scmp.ne.s32.totalorder %s366, %s367
      %p378 = scmp.eq.s32.totalorder %s40, 0
      %p379 = por %p377, %p378
      %p380 = scmp.ne.s32.totalorder %s366, %s367
      %p381 = scmp.eq.s32.totalorder %s41, 3
      %p382 = por %p380, %p381
      %p384 = scmp.ne.s32.totalorder %s367, %s383
      %p385 = scmp.eq.s32.totalorder %s41, 0
      %p386 = por %p384, %p385
      %s387 = ssub.s32 %s35, %s42
      %p388 = scmp.eq.s32.totalorder %s387, 0
      %s390 = sadd.s32 %s389, 1
      %s391 = scalar_select %p388, %s389, %s390
      %p394 = pneg %p388
      %p395 = scmp.eq.s32.totalorder %s35, 3
      %p396 = por %p394, %p395
      %p397 = scmp.ne.s32.totalorder %s389, %s392
      %p398 = scmp.eq.s32.totalorder %s35, 0
      %p399 = por %p397, %p398
      %p400 = scmp.ne.s32.totalorder %s389, %s392
      %p401 = scmp.eq.s32.totalorder %s40, 3
      %p402 = por %p400, %p401
      %p403 = scmp.ne.s32.totalorder %s392, %s393
      %p404 = scmp.eq.s32.totalorder %s40, 0
      %p405 = por %p403, %p404
      %p406 = scmp.ne.s32.totalorder %s392, %s393
      %p407 = scmp.eq.s32.totalorder %s41, 3
      %p408 = por %p406, %p407
      %p410 = scmp.ne.s32.totalorder %s393, %s409
      %p411 = scmp.eq.s32.totalorder %s41, 0
      %p412 = por %p410, %p411
      %s413 = ssub.s32 %s35, %s42
      %p414 = scmp.eq.s32.totalorder %s413, 0
      %s416 = sadd.s32 %s415, 1
      %s417 = scalar_select %p414, %s415, %s416
      %p420 = pneg %p414
      %p421 = scmp.eq.s32.totalorder %s35, 3
      %p422 = por %p420, %p421
      %p423 = scmp.ne.s32.totalorder %s415, %s418
      %p424 = scmp.eq.s32.totalorder %s35, 0
      %p425 = por %p423, %p424
      %p426 = scmp.ne.s32.totalorder %s415, %s418
      %p427 = scmp.eq.s32.totalorder %s40, 3
      %p428 = por %p426, %p427
      %p429 = scmp.ne.s32.totalorder %s418, %s419
      %p430 = scmp.eq.s32.totalorder %s40, 0
      %p431 = por %p429, %p430
      %p432 = scmp.ne.s32.totalorder %s418, %s419
      %p433 = scmp.eq.s32.totalorder %s41, 3
      %p434 = por %p432, %p433
      %p436 = scmp.ne.s32.totalorder %s419, %s435
      %p437 = scmp.eq.s32.totalorder %s41, 0
      %p438 = por %p436, %p437
      %s440 = sadd.s32 %s439, 1
      %p443 = scmp.eq.s32.totalorder %s35, 3
      %p444 = scmp.ne.s32.totalorder %s439, %s441
      %p445 = scmp.eq.s32.totalorder %s35, 0
      %p446 = por %p444, %p445
      %p447 = scmp.ne.s32.totalorder %s439, %s441
      %p448 = scmp.eq.s32.totalorder %s40, 3
      %p449 = por %p447, %p448
      %p450 = scmp.ne.s32.totalorder %s441, %s442
      %p451 = scmp.eq.s32.totalorder %s40, 0
      %p452 = por %p450, %p451
      %p453 = scmp.ne.s32.totalorder %s441, %s442
      %p454 = scmp.eq.s32.totalorder %s41, 3
      %p455 = por %p453, %p454
      %p457 = scmp.ne.s32.totalorder %s442, %s456
      %p458 = scmp.eq.s32.totalorder %s41, 0
      %p459 = por %p457, %p458
      %s461 = sadd.s32 %s460, 1
      %p464 = scmp.eq.s32.totalorder %s35, 3
      %p465 = scmp.ne.s32.totalorder %s460, %s462
      %p466 = scmp.eq.s32.totalorder %s35, 0
      %p467 = por %p465, %p466
      %p468 = scmp.ne.s32.totalorder %s460, %s462
      %p469 = scmp.eq.s32.totalorder %s40, 3
      %p470 = por %p468, %p469
      %p471 = scmp.ne.s32.totalorder %s462, %s463
      %p472 = scmp.eq.s32.totalorder %s40, 0
      %p473 = por %p471, %p472
      %p474 = scmp.ne.s32.totalorder %s462, %s463
      %p475 = scmp.eq.s32.totalorder %s41, 3
      %p476 = por %p474, %p475
      %p478 = scmp.ne.s32.totalorder %s463, %s477
      %p479 = scmp.eq.s32.totalorder %s41, 0
      %p480 = por %p478, %p479
      %s482 = sadd.s32 %s481, 1
      %p485 = scmp.eq.s32.totalorder %s35, 3
      %p486 = scmp.ne.s32.totalorder %s481, %s483
      %p487 = scmp.eq.s32.totalorder %s35, 0
      %p488 = por %p486, %p487
      %p489 = scmp.ne.s32.totalorder %s481, %s483
      %p490 = scmp.eq.s32.totalorder %s40, 3
      %p491 = por %p489, %p490
      %p492 = scmp.ne.s32.totalorder %s483, %s484
      %p493 = scmp.eq.s32.totalorder %s40, 0
      %p494 = por %p492, %p493
      %p495 = scmp.ne.s32.totalorder %s483, %s484
      %p496 = scmp.eq.s32.totalorder %s41, 3
      %p497 = por %p495, %p496
      %p499 = scmp.ne.s32.totalorder %s484, %s498
      %p500 = scmp.eq.s32.totalorder %s41, 0
      %p501 = por %p499, %p500
      %p502 = scmp.le.s32.totalorder 1, %s35
      %p503 = scmp.lt.s32.totalorder %s35, 5
      %p504 = pnand %p502, %p503
      %p505 = pneg %p504
      // Predicated region
      $region9: #{forward.1} parent=5 // pred_check
        _
      $region10: #{forward.1} parent=5 // pred_check_branch
        %507 = sbr.rel (%p504) target = $region12
      $region11: #{forward.1} parent=5 // pred_region
        %s508 = ssub.s32 %s35, 1
        // Predicated region
        $region13: #{forward.1} parent=11 // pred_check
          %p509 = pneg %p56
        $region14: #{forward.1} parent=11 // pred_check_branch
          %511 = sbr.rel (%p509) target = $region16
        $region15: #{forward.1} parent=11 // pred_region
          _
        $region16: #{forward.1} parent=11 // pred_fallthru
          _
        // Predicated region
        $region17: #{forward.1} parent=11 // pred_check
          %p512 = pneg %p77
        $region18: #{forward.1} parent=11 // pred_check_branch
          %514 = sbr.rel (%p512) target = $region20
        $region19: #{forward.1} parent=11 // pred_region
          %s516 = ssub.s32 2048, 2048
          %517 = vsyncadd [#allocation4], %s516
          %s518 = sshll.u32 [#allocation3], 4
          %s519 = int_to_ptr.vmem [resolvable:$true] %s518
          %524 = dma.hbm_to_vmem [thread:$0]  %s1, 2048, %s519, [#allocation4], 128, 128, 8
        $region20: #{forward.1} parent=11 // pred_fallthru
          _
        // Predicated region
        $region21: #{forward.1} parent=11 // pred_check
          %p525 = pneg %p98
        $region22: #{forward.1} parent=11 // pred_check_branch
          %527 = sbr.rel (%p525) target = $region24
        $region23: #{forward.1} parent=11 // pred_region
          _
        $region24: #{forward.1} parent=11 // pred_fallthru
          _
        // Predicated region
        $region25: #{forward.1} parent=11 // pred_check
          %p528 = pneg %p119
        $region26: #{forward.1} parent=11 // pred_check_branch
          %530 = sbr.rel (%p528) target = $region28
        $region27: #{forward.1} parent=11 // pred_region
          _
        $region28: #{forward.1} parent=11 // pred_fallthru
          _
        // Predicated region
        $region29: #{forward.1} parent=11 // pred_check
          %p531 = pneg %p452
        $region30: #{forward.1} parent=11 // pred_check_branch
          %533 = sbr.rel (%p531) target = $region32
        $region31: #{forward.1} parent=11 // pred_region
          %s535 = ssub.s32 1024, 1024
          %536 = vsyncadd [#allocation15], %s535
          %s537 = sshll.u32 [#allocation14], 4
          %s538 = int_to_ptr.vmem [resolvable:$true] %s537
          %543 = dma.hbm_to_vmem [thread:$0]  %s16, 1024, %s538, [#allocation15], 64, 64, 4
        $region32: #{forward.1} parent=11 // pred_fallthru
          _
        // Predicated region
        $region33: #{forward.1} parent=11 // pred_check
          %p544 = pneg %p473
        $region34: #{forward.1} parent=11 // pred_check_branch
          %546 = sbr.rel (%p544) target = $region36
        $region35: #{forward.1} parent=11 // pred_region
          _
        $region36: #{forward.1} parent=11 // pred_fallthru
          _
      $region12: #{forward.1} parent=5 // pred_fallthru
        _
      %p547 = scmp.lt.s32.totalorder %s35, 4
      // Predicated region
      $region37: #{forward.1} parent=5 // pred_check
        %p548 = pneg %p547
      $region38: #{forward.1} parent=5 // pred_check_branch
        %550 = sbr.rel (%p548) target = $region40
      $region39: #{forward.1} parent=5 // pred_region
        // Predicated region
        $region41: #{forward.1} parent=39 // pred_check
          %p551 = pneg %p139
        $region42: #{forward.1} parent=39 // pred_check_branch
          %553 = sbr.rel (%p551) target = $region44
        $region43: #{forward.1} parent=39 // pred_region
          %s554 = sand.u32 %s35, 1
          %s555 = scalar_lea.sflag [#allocation6], %s554
          %s556 = sand.u32 %s129, 1
          %s557 = smul.addr %s556, 192
          %s558 = scalar_lea.vmem [#allocation5], %s557
          %s560 = ssub.s32 3072, 3072
          %561 = vsyncadd %s555, %s560
          %s562 = smul.addr %s35, 48
          %s563 = smul.addr %s562, 64
          %s564 = scalar_lea.hbm %s4, %s563
          %s565 = sshll.u32 %s558, 4
          %s566 = int_to_ptr.vmem [resolvable:$true] %s565
          %571 = dma.hbm_to_vmem [thread:$0]  %s564, 3072, %s566, %s555, 192, 192, 12
        $region44: #{forward.1} parent=39 // pred_fallthru
          _
        // Predicated region
        $region45: #{forward.1} parent=39 // pred_check
          %p572 = pneg %p165
        $region46: #{forward.1} parent=39 // pred_check_branch
          %574 = sbr.rel (%p572) target = $region48
        $region47: #{forward.1} parent=39 // pred_region
          %s575 = sand.u32 %s35, 1
          %s576 = scalar_lea.sflag [#allocation6], %s575
          %s577 = sand.u32 %s155, 1
          %s578 = smul.addr %s577, 3
          %s579 = scalar_lea.vmem [#allocation7], %s578
          %s581 = ssub.s32 48, 48
          %582 = vsyncadd %s576, %s581
          %s583 = smul.addr %s35, 3
          %s584 = smul.addr %s583, 16
          %s585 = scalar_lea.hbm %s5, %s584
          %s587 = sshll.u32 %s579, 4
          %s588 = int_to_ptr.vmem [resolvable:$true] %s587
          %590 = dma.hbm_to_vmem [thread:$0]  %s585, 48, %s588, %s576
        $region48: #{forward.1} parent=39 // pred_fallthru
          _
        // Predicated region
        $region49: #{forward.1} parent=39 // pred_check
          %p591 = pneg %p191
        $region50: #{forward.1} parent=39 // pred_check_branch
          %593 = sbr.rel (%p591) target = $region52
        $region51: #{forward.1} parent=39 // pred_region
          %p594 = scmp.lt.s32.totalorder %s35, 3
          %s595 = scalar_select %p594, %s35, 3
          %s596 = smul.addr %s595, 16
          %s597 = smul.addr %s596, 4
          %s598 = scalar_lea.vmem %s6, %s597
        $region52: #{forward.1} parent=39 // pred_fallthru
          _
        // Predicated region
        $region53: #{forward.1} parent=39 // pred_check
          %p599 = pneg %p217
        $region54: #{forward.1} parent=39 // pred_check_branch
          %601 = sbr.rel (%p599) target = $region56
        $region55: #{forward.1} parent=39 // pred_region
          %s602 = sand.u32 %s35, 1
          %s603 = scalar_lea.sflag [#allocation9], %s602
          %s604 = sand.u32 %s207, 1
          %s605 = scalar_lea.vmem [#allocation8], %s604
          %s607 = ssub.s32 16, 16
          %608 = vsyncadd %s603, %s607
          %s609 = smul.addr %s35, 16
          %s610 = scalar_lea.hbm %s7, %s609
          %s612 = sshll.u32 %s605, 4
          %s613 = int_to_ptr.vmem [resolvable:$true] %s612
          %615 = dma.hbm_to_vmem [thread:$0]  %s610, 16, %s613, %s603
        $region56: #{forward.1} parent=39 // pred_fallthru
          _
        // Predicated region
        $region57: #{forward.1} parent=39 // pred_check
          %p616 = pneg %p243
        $region58: #{forward.1} parent=39 // pred_check_branch
          %618 = sbr.rel (%p616) target = $region60
        $region59: #{forward.1} parent=39 // pred_region
          %s619 = sand.u32 %s35, 1
          %s620 = scalar_lea.sflag [#allocation9], %s619
          %s621 = sand.u32 %s233, 1
          %s622 = smul.addr %s621, 256
          %s623 = scalar_lea.vmem [#allocation10], %s622
          %s625 = ssub.s32 4096, 4096
          %626 = vsyncadd %s620, %s625
          %s627 = smul.addr %s35, 64
          %s628 = smul.addr %s627, 64
          %s629 = scalar_lea.hbm %s8, %s628
          %s630 = sshll.u32 %s623, 4
          %s631 = int_to_ptr.vmem [resolvable:$true] %s630
          %636 = dma.hbm_to_vmem [thread:$0]  %s629, 4096, %s631, %s620, 256, 256, 16
        $region60: #{forward.1} parent=39 // pred_fallthru
          _
        // Predicated region
        $region61: #{forward.1} parent=39 // pred_check
          %p637 = pneg %p269
        $region62: #{forward.1} parent=39 // pred_check_branch
          %639 = sbr.rel (%p637) target = $region64
        $region63: #{forward.1} parent=39 // pred_region
          %p640 = scmp.lt.s32.totalorder %s35, 3
          %s641 = scalar_select %p640, %s35, 3
          %s642 = smul.addr %s641, 4
          %s643 = scalar_lea.vmem %s9, %s642
        $region64: #{forward.1} parent=39 // pred_fallthru
          _
        // Predicated region
        $region65: #{forward.1} parent=39 // pred_check
          %p644 = pneg %p295
        $region66: #{forward.1} parent=39 // pred_check_branch
          %646 = sbr.rel (%p644) target = $region68
        $region67: #{forward.1} parent=39 // pred_region
          %s647 = sand.u32 %s35, 1
          %s648 = scalar_lea.sflag [#allocation12], %s647
          %s649 = sand.u32 %s285, 1
          %s650 = smul.addr %s649, 256
          %s651 = scalar_lea.vmem [#allocation11], %s650
          %s653 = ssub.s32 4096, 4096
          %654 = vsyncadd %s648, %s653
          %s655 = smul.addr %s35, 64
          %s656 = smul.addr %s655, 64
          %s657 = scalar_lea.hbm %s10, %s656
          %s658 = sshll.u32 %s651, 4
          %s659 = int_to_ptr.vmem [resolvable:$true] %s658
          %664 = dma.hbm_to_vmem [thread:$0]  %s657, 4096, %s659, %s648, 64, 64, 4
        $region68: #{forward.1} parent=39 // pred_fallthru
          _
        // Predicated region
        $region69: #{forward.1} parent=39 // pred_check
          %p665 = pneg %p321
        $region70: #{forward.1} parent=39 // pred_check_branch
          %667 = sbr.rel (%p665) target = $region72
        $region71: #{forward.1} parent=39 // pred_region
          %s668 = sand.u32 %s35, 1
          %s669 = scalar_lea.sflag [#allocation12], %s668
          %s670 = sand.u32 %s311, 1
          %s671 = scalar_lea.vmem [#allocation13], %s670
          %s673 = ssub.s32 16, 16
          %674 = vsyncadd %s669, %s673
          %s675 = smul.addr %s35, 16
          %s676 = scalar_lea.hbm %s11, %s675
          %s678 = sshll.u32 %s671, 4
          %s679 = int_to_ptr.vmem [resolvable:$true] %s678
          %681 = dma.hbm_to_vmem [thread:$0]  %s676, 16, %s679, %s669
        $region72: #{forward.1} parent=39 // pred_fallthru
          _
        // Predicated region
        $region73: #{forward.1} parent=39 // pred_check
          %p682 = pneg %p347
        $region74: #{forward.1} parent=39 // pred_check_branch
          %684 = sbr.rel (%p682) target = $region76
        $region75: #{forward.1} parent=39 // pred_region
          %p685 = scmp.lt.s32.totalorder %s35, 3
          %s686 = scalar_select %p685, %s35, 3
          %s687 = scalar_lea.vmem %s12, %s686
        $region76: #{forward.1} parent=39 // pred_fallthru
          _
        // Predicated region
        $region77: #{forward.1} parent=39 // pred_check
          %p688 = pneg %p373
        $region78: #{forward.1} parent=39 // pred_check_branch
          %690 = sbr.rel (%p688) target = $region80
        $region79: #{forward.1} parent=39 // pred_region
          %p691 = scmp.lt.s32.totalorder %s35, 3
          %s692 = scalar_select %p691, %s35, 3
          %s693 = scalar_lea.vmem %s13, %s692
        $region80: #{forward.1} parent=39 // pred_fallthru
          _
        // Predicated region
        $region81: #{forward.1} parent=39 // pred_check
          %p694 = pneg %p399
        $region82: #{forward.1} parent=39 // pred_check_branch
          %696 = sbr.rel (%p694) target = $region84
        $region83: #{forward.1} parent=39 // pred_region
          %p697 = scmp.lt.s32.totalorder %s35, 3
          %s698 = scalar_select %p697, %s35, 3
          %s699 = scalar_lea.vmem %s14, %s698
        $region84: #{forward.1} parent=39 // pred_fallthru
          _
        // Predicated region
        $region85: #{forward.1} parent=39 // pred_check
          %p700 = pneg %p425
        $region86: #{forward.1} parent=39 // pred_check_branch
          %702 = sbr.rel (%p700) target = $region88
        $region87: #{forward.1} parent=39 // pred_region
          %p703 = scmp.lt.s32.totalorder %s35, 3
          %s704 = scalar_select %p703, %s35, 3
          %s705 = scalar_lea.vmem %s15, %s704
        $region88: #{forward.1} parent=39 // pred_fallthru
          _
      $region40: #{forward.1} parent=5 // pred_fallthru
        _
      %p706 = scmp.le.s32.totalorder 1, %s35
      %p707 = scmp.lt.s32.totalorder %s35, 5
      %p708 = pnand %p706, %p707
      %p709 = pneg %p708
      // Predicated region
      $region89: #{forward.1} parent=5 // pred_check
        _
      $region90: #{forward.1} parent=5 // pred_check_branch
        %711 = sbr.rel (%p708) target = $region92
      $region91: #{forward.1} parent=5 // pred_region
        %s712 = ssub.s32 %s35, 1
        // Predicated region
        $region93: #{forward.1} parent=91 // pred_check
          %p713 = pneg %p77
        $region94: #{forward.1} parent=91 // pred_check_branch
          %715 = sbr.rel (%p713) target = $region96
        $region95: #{forward.1} parent=91 // pred_region
          %716 = dma.done [#allocation4], 2048
        $region96: #{forward.1} parent=91 // pred_fallthru
          _
        %s717 = sand.u32 %s40, 1
        %s718 = scalar_lea.sflag [#allocation6], %s717
        %s719 = sand.u32 %s132, 1
        %s720 = smul.addr %s719, 192
        %s721 = scalar_lea.vmem [#allocation5], %s720
        // Predicated region
        $region97: #{forward.1} parent=91 // pred_check
          %p722 = pneg %p145
        $region98: #{forward.1} parent=91 // pred_check_branch
          %724 = sbr.rel (%p722) target = $region100
        $region99: #{forward.1} parent=91 // pred_region
          %725 = dma.done %s718, 3072
        $region100: #{forward.1} parent=91 // pred_fallthru
          _
        %s726 = sand.u32 %s40, 1
        %s727 = scalar_lea.sflag [#allocation6], %s726
        %s728 = sand.u32 %s158, 1
        %s729 = smul.addr %s728, 3
        %s730 = scalar_lea.vmem [#allocation7], %s729
        // Predicated region
        $region101: #{forward.1} parent=91 // pred_check
          %p731 = pneg %p171
        $region102: #{forward.1} parent=91 // pred_check_branch
          %733 = sbr.rel (%p731) target = $region104
        $region103: #{forward.1} parent=91 // pred_region
          %734 = dma.done %s727, 48
        $region104: #{forward.1} parent=91 // pred_fallthru
          _
        %s735 = sand.u32 %s40, 1
        %s736 = scalar_lea.sflag [#allocation9], %s735
        %s737 = sand.u32 %s210, 1
        %s738 = scalar_lea.vmem [#allocation8], %s737
        // Predicated region
        $region105: #{forward.1} parent=91 // pred_check
          %p739 = pneg %p223
        $region106: #{forward.1} parent=91 // pred_check_branch
          %741 = sbr.rel (%p739) target = $region108
        $region107: #{forward.1} parent=91 // pred_region
          %742 = dma.done %s736, 16
        $region108: #{forward.1} parent=91 // pred_fallthru
          _
        %s743 = sand.u32 %s40, 1
        %s744 = scalar_lea.sflag [#allocation9], %s743
        %s745 = sand.u32 %s236, 1
        %s746 = smul.addr %s745, 256
        %s747 = scalar_lea.vmem [#allocation10], %s746
        // Predicated region
        $region109: #{forward.1} parent=91 // pred_check
          %p748 = pneg %p249
        $region110: #{forward.1} parent=91 // pred_check_branch
          %750 = sbr.rel (%p748) target = $region112
        $region111: #{forward.1} parent=91 // pred_region
          %751 = dma.done %s744, 4096
        $region112: #{forward.1} parent=91 // pred_fallthru
          _
        %s752 = sand.u32 %s40, 1
        %s753 = scalar_lea.sflag [#allocation12], %s752
        %s754 = sand.u32 %s288, 1
        %s755 = smul.addr %s754, 256
        %s756 = scalar_lea.vmem [#allocation11], %s755
        // Predicated region
        $region113: #{forward.1} parent=91 // pred_check
          %p757 = pneg %p301
        $region114: #{forward.1} parent=91 // pred_check_branch
          %759 = sbr.rel (%p757) target = $region116
        $region115: #{forward.1} parent=91 // pred_region
          %760 = dma.done %s753, 4096
        $region116: #{forward.1} parent=91 // pred_fallthru
          _
        %s761 = sand.u32 %s40, 1
        %s762 = scalar_lea.sflag [#allocation12], %s761
        %s763 = sand.u32 %s314, 1
        %s764 = scalar_lea.vmem [#allocation13], %s763
        // Predicated region
        $region117: #{forward.1} parent=91 // pred_check
          %p765 = pneg %p327
        $region118: #{forward.1} parent=91 // pred_check_branch
          %767 = sbr.rel (%p765) target = $region120
        $region119: #{forward.1} parent=91 // pred_region
          %768 = dma.done %s762, 16
        $region120: #{forward.1} parent=91 // pred_fallthru
          _
        // Predicated region
        $region121: #{forward.1} parent=91 // pred_check
          %p769 = pneg %p452
        $region122: #{forward.1} parent=91 // pred_check_branch
          %771 = sbr.rel (%p769) target = $region124
        $region123: #{forward.1} parent=91 // pred_region
          %772 = dma.done [#allocation15], 1024
        $region124: #{forward.1} parent=91 // pred_fallthru
          _
        %p773 = pneg %p56
        %p774 = pneg %p53
        %p775 = pneg %p77
        %p776 = pneg %p74
        %p777 = pneg %p98
        %p778 = pneg %p95
        %p779 = pneg %p119
        %p780 = pneg %p116
        %s781 = sand.u32 %s40, 1
        %s782 = scalar_lea.sflag [#allocation6], %s781
        %s783 = sand.u32 %s132, 1
        %s784 = smul.addr %s783, 192
        %s785 = scalar_lea.vmem [#allocation5], %s784
        %p786 = pneg %p145
        %p787 = pneg %p142
        %s788 = sand.u32 %s40, 1
        %s789 = scalar_lea.sflag [#allocation6], %s788
        %s790 = sand.u32 %s158, 1
        %s791 = smul.addr %s790, 3
        %s792 = scalar_lea.vmem [#allocation7], %s791
        %p793 = pneg %p171
        %p794 = pneg %p168
        %p795 = scmp.lt.s32.totalorder %s40, 3
        %s796 = scalar_select %p795, %s40, 3
        %s797 = smul.addr %s796, 16
        %s798 = smul.addr %s797, 4
        %s799 = scalar_lea.vmem %s6, %s798
        %p800 = pneg %p197
        %p801 = pneg %p194
        %s802 = sand.u32 %s40, 1
        %s803 = scalar_lea.sflag [#allocation9], %s802
        %s804 = sand.u32 %s210, 1
        %s805 = scalar_lea.vmem [#allocation8], %s804
        %p806 = pneg %p223
        %p807 = pneg %p220
        %s808 = sand.u32 %s40, 1
        %s809 = scalar_lea.sflag [#allocation9], %s808
        %s810 = sand.u32 %s236, 1
        %s811 = smul.addr %s810, 256
        %s812 = scalar_lea.vmem [#allocation10], %s811
        %p813 = pneg %p249
        %p814 = pneg %p246
        %p815 = scmp.lt.s32.totalorder %s40, 3
        %s816 = scalar_select %p815, %s40, 3
        %s817 = smul.addr %s816, 4
        %s818 = scalar_lea.vmem %s9, %s817
        %p819 = pneg %p275
        %p820 = pneg %p272
        %s821 = sand.u32 %s40, 1
        %s822 = scalar_lea.sflag [#allocation12], %s821
        %s823 = sand.u32 %s288, 1
        %s824 = smul.addr %s823, 256
        %s825 = scalar_lea.vmem [#allocation11], %s824
        %p826 = pneg %p301
        %p827 = pneg %p298
        %s828 = sand.u32 %s40, 1
        %s829 = scalar_lea.sflag [#allocation12], %s828
        %s830 = sand.u32 %s314, 1
        %s831 = scalar_lea.vmem [#allocation13], %s830
        %p832 = pneg %p327
        %p833 = pneg %p324
        %p834 = scmp.lt.s32.totalorder %s40, 3
        %s835 = scalar_select %p834, %s40, 3
        %s836 = scalar_lea.vmem %s12, %s835
        %p837 = pneg %p353
        %p838 = pneg %p350
        %p839 = scmp.lt.s32.totalorder %s40, 3
        %s840 = scalar_select %p839, %s40, 3
        %s841 = scalar_lea.vmem %s13, %s840
        %p842 = pneg %p379
        %p843 = pneg %p376
        %p844 = scmp.lt.s32.totalorder %s40, 3
        %s845 = scalar_select %p844, %s40, 3
        %s846 = scalar_lea.vmem %s14, %s845
        %p847 = pneg %p405
        %p848 = pneg %p402
        %p849 = scmp.lt.s32.totalorder %s40, 3
        %s850 = scalar_select %p849, %s40, 3
        %s851 = scalar_lea.vmem %s15, %s850
        %p852 = pneg %p431
        %p853 = pneg %p428
        %p854 = pneg %p452
        %p855 = pneg %p449
        %p856 = pneg %p473
        %p857 = pneg %p470
        %p858 = pneg %p494
        %p859 = pneg %p491
        %p860 = scmp.lt.s32.totalorder %s40, 3
        %s861 = scalar_select %p860, %s40, 3
        %s862 = smul.addr %s861, 16
        %s863 = smul.addr %s862, 4
        %s864 = scalar_lea.vmem %s6, %s863
        %p865 = scmp.lt.s32.totalorder %s40, 3
        %s866 = scalar_select %p865, %s40, 3
        %s867 = smul.addr %s866, 4
        %s868 = scalar_lea.vmem %s9, %s867
        %p869 = scmp.lt.s32.totalorder %s40, 3
        %s870 = scalar_select %p869, %s40, 3
        %s871 = scalar_lea.vmem %s12, %s870
        %p872 = scmp.lt.s32.totalorder %s40, 3
        %s873 = scalar_select %p872, %s40, 3
        %s874 = scalar_lea.vmem %s13, %s873
        %p875 = scmp.lt.s32.totalorder %s40, 3
        %s876 = scalar_select %p875, %s40, 3
        %s877 = scalar_lea.vmem %s14, %s876
        %p878 = scmp.lt.s32.totalorder %s40, 3
        %s879 = scalar_select %p878, %s40, 3
        %s880 = scalar_lea.vmem %s15, %s879
        %p882 = scmp.eq.s32.totalorder %s40, 0
        // Predicated region
        $region125: #{forward.1} parent=91 // pred_check
          %p883 = pneg %p882
        $region126: #{forward.1} parent=91 // pred_check_branch
          %885 = sbr.rel (%p883) target = $region128
        $region127: #{forward.1} parent=91 // pred_region
          %v886 = vld [vmem:[%s0] sm:$0xff]
          %v887 = vld [vmem:[%s0 + $0x8] sm:$0xff]
          %v888 = vld [vmem:[%s2] sm:$0x1]
          %v889 = vld [vmem:[%s3] sm:$0x1]
          %890 = vadd.xlane.f32.xlu0 %v886
          %v891 = vpop.xlane.xlu0 %890
          %892 = vadd.xlane.f32.xlu0 %v887
          %v893 = vpop.xlane.xlu0 %892
          %v894 = vrcp.pop 128.0
          %v895 = vmul.f32 %v891, %v894
          %v896 = vmul.f32 %v893, %v894
          %v897 = vsub.f32 %v886, %v895
          %v898 = vsub.f32 %v887, %v896
          %v899 = vmul.f32 %v897, %v897
          %v900 = vmul.f32 %v898, %v898
          %901 = vadd.xlane.f32.xlu0 %v899
          %v902 = vpop.xlane.xlu0 %901
          %903 = vadd.xlane.f32.xlu0 %v900
          %v904 = vpop.xlane.xlu0 %903
          %v905 = vmul.f32 %v902, %v894
          %v906 = vmul.f32 %v904, %v894
          %v907 = vadd.f32 %v905, 1e-05
          %v908 = vadd.f32 %v906, 1e-05
          %v909 = vrsqrt.pop %v907
          %v910 = vrsqrt.pop %v908
          %v911 = vmul.f32 %v897, %v909
          %v912 = vmul.f32 %v898, %v910
          %v914 = vlaneseq
          %v915 = vshrl.u32 %v914, 7
          %v916 = vsub.s32 0, %v915
          %v917 = vrot.slane %v888, %v916
          %v919 = vmul.f32 %v911, %v917
          %v920 = vmul.f32 %v912, %v917
          %v922 = vlaneseq
          %v923 = vshrl.u32 %v922, 7
          %v924 = vsub.s32 0, %v923
          %v925 = vrot.slane %v889, %v924
          %v927 = vadd.f32 %v919, %v925
          %v928 = vadd.f32 %v920, %v925
          %929 = vst [vmem:[#allocation2] sm:$0xff] %v927
          %930 = vst [vmem:[#allocation2 + $0x8] sm:$0xff] %v928
        $region128: #{forward.1} parent=91 // pred_fallthru
          _
        %v931 = vld [vmem:[#allocation2] sm:$0xff]
        %v932 = vld [vmem:[#allocation2 + $0x8] sm:$0xff]
        %v933 = vpack.c.bf16 %v932, %v931
        %v934 = vld [vmem:[%s721] sm:$0xff]
        %v935 = vld [vmem:[%s721 + $0x8] sm:$0xf]
        %v936 = vld [vmem:[%s721 + $0xc] sm:$0xff]
        %v937 = vld [vmem:[%s721 + $0x14] sm:$0xf]
        %v938 = vld [vmem:[%s721 + $0x18] sm:$0xff]
        %v939 = vld [vmem:[%s721 + $0x20] sm:$0xf]
        %v940 = vld [vmem:[%s721 + $0x24] sm:$0xff]
        %v941 = vld [vmem:[%s721 + $0x2c] sm:$0xf]
        %v942 = vld [vmem:[%s721 + $0x30] sm:$0xff]
        %v943 = vld [vmem:[%s721 + $0x38] sm:$0xf]
        %v944 = vld [vmem:[%s721 + $0x3c] sm:$0xff]
        %v945 = vld [vmem:[%s721 + $0x44] sm:$0xf]
        %v946 = vld [vmem:[%s721 + $0x48] sm:$0xff]
        %v947 = vld [vmem:[%s721 + $0x50] sm:$0xf]
        %v948 = vld [vmem:[%s721 + $0x54] sm:$0xff]
        %v949 = vld [vmem:[%s721 + $0x5c] sm:$0xf]
        %v950 = vld [vmem:[%s721 + $0x60] sm:$0xff]
        %v951 = vld [vmem:[%s721 + $0x68] sm:$0xf]
        %v952 = vld [vmem:[%s721 + $0x6c] sm:$0xff]
        %v953 = vld [vmem:[%s721 + $0x74] sm:$0xf]
        %v954 = vld [vmem:[%s721 + $0x78] sm:$0xff]
        %v955 = vld [vmem:[%s721 + $0x80] sm:$0xf]
        %v956 = vld [vmem:[%s721 + $0x84] sm:$0xff]
        %v957 = vld [vmem:[%s721 + $0x8c] sm:$0xf]
        %v958 = vld [vmem:[%s721 + $0x90] sm:$0xff]
        %v959 = vld [vmem:[%s721 + $0x98] sm:$0xf]
        %v960 = vld [vmem:[%s721 + $0x9c] sm:$0xff]
        %v961 = vld [vmem:[%s721 + $0xa4] sm:$0xf]
        %v962 = vld [vmem:[%s721 + $0xa8] sm:$0xff]
        %v963 = vld [vmem:[%s721 + $0xb0] sm:$0xf]
        %v964 = vld [vmem:[%s721 + $0xb4] sm:$0xff]
        %v965 = vld [vmem:[%s721 + $0xbc] sm:$0xf]
        %v966 = vld [vmem:[%s730] sm:$0x7]
        %v968 = vlaneseq
        %v969 = vshrl.u32 %v968, 7
        %v970 = vsub.s32 0, %v969
        %v971 = vrot.slane %v966, %v970
        %v972 = vlaneseq
        %v973 = vshrl.u32 %v972, 7
        %v974 = vsub.s32 1, %v973
        %v975 = vrot.slane %v966, %v974
        %v976 = vlaneseq
        %v977 = vshrl.u32 %v976, 7
        %v978 = vsub.s32 2, %v977
        %v979 = vrot.slane %v966, %v978
        %v1015 = vunpack.c.l.b16 %v934
        %v1016 = vunpack.c.h.b16 %v934
        %v1017 = vunpack.c.l.b16 %v935
        %v1018 = vunpack.c.l.b16 %v936
        %v1019 = vunpack.c.h.b16 %v936
        %v1020 = vunpack.c.l.b16 %v937
        %v1021 = vunpack.c.l.b16 %v938
        %v1022 = vunpack.c.h.b16 %v938
        %v1023 = vunpack.c.l.b16 %v939
        %v1024 = vunpack.c.l.b16 %v940
        %v1025 = vunpack.c.h.b16 %v940
        %v1026 = vunpack.c.l.b16 %v941
        %v1027 = vunpack.c.l.b16 %v942
        %v1028 = vunpack.c.h.b16 %v942
        %v1029 = vunpack.c.l.b16 %v943
        %v1030 = vunpack.c.l.b16 %v944
        %v1031 = vunpack.c.h.b16 %v944
        %v1032 = vunpack.c.l.b16 %v945
        %v1033 = vunpack.c.l.b16 %v946
        %v1034 = vunpack.c.h.b16 %v946
        %v1035 = vunpack.c.l.b16 %v947
        %v1036 = vunpack.c.l.b16 %v948
        %v1037 = vunpack.c.h.b16 %v948
        %v1038 = vunpack.c.l.b16 %v949
        %v1039 = vunpack.c.l.b16 %v950
        %v1040 = vunpack.c.h.b16 %v950
        %v1041 = vunpack.c.l.b16 %v951
        %v1042 = vunpack.c.l.b16 %v952
        %v1043 = vunpack.c.h.b16 %v952
        %v1044 = vunpack.c.l.b16 %v953
        %v1045 = vunpack.c.l.b16 %v954
        %v1046 = vunpack.c.h.b16 %v954
        %v1047 = vunpack.c.l.b16 %v955
        %v1048 = vunpack.c.l.b16 %v956
        %v1049 = vunpack.c.h.b16 %v956
        %v1050 = vunpack.c.l.b16 %v957
        %v1051 = vunpack.c.l.b16 %v958
        %v1052 = vunpack.c.h.b16 %v958
        %v1053 = vunpack.c.l.b16 %v959
        %v1054 = vunpack.c.l.b16 %v960
        %v1055 = vunpack.c.h.b16 %v960
        %v1056 = vunpack.c.l.b16 %v961
        %v1057 = vunpack.c.l.b16 %v962
        %v1058 = vunpack.c.h.b16 %v962
        %v1059 = vunpack.c.l.b16 %v963
        %v1060 = vunpack.c.l.b16 %v964
        %v1061 = vunpack.c.h.b16 %v964
        %v1062 = vunpack.c.l.b16 %v965
        %v1063 = vpack.c.b16 %v1018, %v1015
        %v1064 = vpack.c.b16 %v1019, %v1016
        %v1065 = vpack.c.b16 %v1020, %v1017
        %v1066 = vpack.c.b16 %v1024, %v1021
        %v1067 = vpack.c.b16 %v1025, %v1022
        %v1068 = vpack.c.b16 %v1026, %v1023
        %v1069 = vpack.c.b16 %v1030, %v1027
        %v1070 = vpack.c.b16 %v1031, %v1028
        %v1071 = vpack.c.b16 %v1032, %v1029
        %v1072 = vpack.c.b16 %v1036, %v1033
        %v1073 = vpack.c.b16 %v1037, %v1034
        %v1074 = vpack.c.b16 %v1038, %v1035
        %v1075 = vpack.c.b16 %v1042, %v1039
        %v1076 = vpack.c.b16 %v1043, %v1040
        %v1077 = vpack.c.b16 %v1044, %v1041
        %v1078 = vpack.c.b16 %v1048, %v1045
        %v1079 = vpack.c.b16 %v1049, %v1046
        %v1080 = vpack.c.b16 %v1050, %v1047
        %v1081 = vpack.c.b16 %v1054, %v1051
        %v1082 = vpack.c.b16 %v1055, %v1052
        %v1083 = vpack.c.b16 %v1056, %v1053
        %v1084 = vpack.c.b16 %v1060, %v1057
        %v1085 = vpack.c.b16 %v1061, %v1058
        %v1086 = vpack.c.b16 %v1062, %v1059
        %1111 = vmatprep.subr.bf16.mxu0 %v1085
        %1112 = vmatpush1.bf16.msra.mxu0 %v1084
        %1113 = vmatprep.subr.bf16.mxu0 %v1082
        %1114 = vmatpush1.bf16.msra.mxu0 %v1081
        %1115 = vmatprep.subr.bf16.mxu0 %v1079
        %1116 = vmatpush1.bf16.msra.mxu0 %v1078
        %1117 = vmatprep.subr.bf16.mxu0 %v1076
        %1118 = vmatpush1.bf16.msra.mxu0 %v1075
        %1119 = vmatprep.subr.bf16.mxu0 %v1073
        %1120 = vmatpush1.bf16.msra.mxu0 %v1072
        %1121 = vmatprep.subr.bf16.mxu0 %v1070
        %1122 = vmatpush1.bf16.msra.mxu0 %v1069
        %1123 = vmatprep.subr.bf16.mxu0 %v1067
        %1124 = vmatpush1.bf16.msra.mxu0 %v1066
        %1125 = vmatprep.subr.bf16.mxu0 %v1064
        %1126 = vmatpush1.bf16.msra.mxu0 %v1063
        %1127 = vmatprep.subr.bf16.mxu0 0
        %1128 = vmatpush2.bf16.msra.mxu0 0
        %1129 = vmatprep.subr.bf16.mxu0 0
        %1130 = vmatpush2.bf16.msra.mxu0 0
        %1131 = vmatprep.subr.bf16.mxu0 0
        %1132 = vmatpush2.bf16.msra.mxu0 0
        %1133 = vmatprep.subr.bf16.mxu0 0
        %1134 = vmatpush2.bf16.msra.mxu0 0
        %1135 = vmatprep.subr.bf16.mxu0 0
        %1136 = vmatpush2.bf16.msra.mxu0 0
        %1137 = vmatprep.subr.bf16.mxu0 0
        %1138 = vmatpush2.bf16.msra.mxu0 0
        %1139 = vmatprep.subr.bf16.mxu0 0
        %1140 = vmatpush2.bf16.msra.mxu0 0
        %1141 = vmatprep.subr.bf16.mxu0 0
        %1142 = vmatpush2.bf16.msra.mxu0 0
        %1143 = vmatprep.mubr.bf16.mxu0 0
        %1144 = vmatmul.mubr.bf16.gmra.mxu0 %v933
        %v1145 = vpop.f32.mrf.mxu0
        %v1146 = vadd.f32 %v971, %v1145
        %v1147 = vpop.f32.mrf.mxu0
        %v1148 = vadd.f32 %v975, %v1147
        %v1149 = vpop.f32.mrf.mxu0
        %v1150 = vadd.f32 %v971, %v1149
        %v1151 = vpop.f32.mrf.mxu0
        %v1152 = vadd.f32 %v975, %v1151
        %1153 = vdwg.mxu0
        %1154 = vmatprep.subr.bf16.mxu0 0
        %1155 = vmatpush1.bf16.msra.mxu0 %v1086
        %1156 = vmatprep.subr.bf16.mxu0 0
        %1157 = vmatpush1.bf16.msra.mxu0 %v1083
        %1158 = vmatprep.subr.bf16.mxu0 0
        %1159 = vmatpush1.bf16.msra.mxu0 %v1080
        %1160 = vmatprep.subr.bf16.mxu0 0
        %1161 = vmatpush1.bf16.msra.mxu0 %v1077
        %1162 = vmatprep.subr.bf16.mxu0 0
        %1163 = vmatpush1.bf16.msra.mxu0 %v1074
        %1164 = vmatprep.subr.bf16.mxu0 0
        %1165 = vmatpush1.bf16.msra.mxu0 %v1071
        %1166 = vmatprep.subr.bf16.mxu0 0
        %1167 = vmatpush1.bf16.msra.mxu0 %v1068
        %1168 = vmatprep.subr.bf16.mxu0 0
        %1169 = vmatpush1.bf16.msra.mxu0 %v1065
        %1170 = vmatprep.subr.bf16.mxu0 0
        %1171 = vmatpush2.bf16.msra.mxu0 0
        %1172 = vmatprep.subr.bf16.mxu0 0
        %1173 = vmatpush2.bf16.msra.mxu0 0
        %1174 = vmatprep.subr.bf16.mxu0 0
        %1175 = vmatpush2.bf16.msra.mxu0 0
        %1176 = vmatprep.subr.bf16.mxu0 0
        %1177 = vmatpush2.bf16.msra.mxu0 0
        %1178 = vmatprep.subr.bf16.mxu0 0
        %1179 = vmatpush2.bf16.msra.mxu0 0
        %1180 = vmatprep.subr.bf16.mxu0 0
        %1181 = vmatpush2.bf16.msra.mxu0 0
        %1182 = vmatprep.subr.bf16.mxu0 0
        %1183 = vmatpush2.bf16.msra.mxu0 0
        %1184 = vmatprep.subr.bf16.mxu0 0
        %1185 = vmatpush2.bf16.msra.mxu0 0
        %1186 = vmatprep.mubr.bf16.mxu0 0
        %1187 = vmatmul.mubr.bf16.gmra.mxu0 %v933
        %v1188 = vpop.f32.mrf.mxu0
        %v1189 = vadd.f32 %v979, %v1188
        %v1190 = vpop.f32.mrf.mxu0
        %v1191 = vpop.f32.mrf.mxu0
        %v1192 = vadd.f32 %v979, %v1191
        %v1193 = vpop.f32.mrf.mxu0
        %1194 = vdwg.mxu0
        %1197 = vrot.lane.b32.xlu0 %v1146, 112
        %v1198 = vpop.permute.xlu0 %1197
        %1199 = vrot.lane.b32.xlu0 %v1150, 112
        %v1200 = vpop.permute.xlu0 %1199
        %1203 = vrot.lane.b32.xlu0 %v1146, 96
        %v1204 = vpop.permute.xlu0 %1203
        %1205 = vrot.lane.b32.xlu0 %v1150, 96
        %v1206 = vpop.permute.xlu0 %1205
        %1209 = vrot.lane.b32.xlu0 %v1146, 80
        %v1210 = vpop.permute.xlu0 %1209
        %1211 = vrot.lane.b32.xlu0 %v1150, 80
        %v1212 = vpop.permute.xlu0 %1211
        %1215 = vrot.lane.b32.xlu0 %v1146, 64
        %v1216 = vpop.permute.xlu0 %1215
        %1217 = vrot.lane.b32.xlu0 %v1150, 64
        %v1218 = vpop.permute.xlu0 %1217
        %1221 = vrot.lane.b32.xlu0 %v1146, 48
        %v1222 = vpop.permute.xlu0 %1221
        %1223 = vrot.lane.b32.xlu0 %v1150, 48
        %v1224 = vpop.permute.xlu0 %1223
        %1227 = vrot.lane.b32.xlu0 %v1146, 32
        %v1228 = vpop.permute.xlu0 %1227
        %1229 = vrot.lane.b32.xlu0 %v1150, 32
        %v1230 = vpop.permute.xlu0 %1229
        %1233 = vrot.lane.b32.xlu0 %v1146, 16
        %v1234 = vpop.permute.xlu0 %1233
        %1235 = vrot.lane.b32.xlu0 %v1150, 16
        %v1236 = vpop.permute.xlu0 %1235
        %1241 = vrot.lane.b32.xlu0 %v1148, 112
        %v1242 = vpop.permute.xlu0 %1241
        %1243 = vrot.lane.b32.xlu0 %v1152, 112
        %v1244 = vpop.permute.xlu0 %1243
        %1247 = vrot.lane.b32.xlu0 %v1148, 96
        %v1248 = vpop.permute.xlu0 %1247
        %1249 = vrot.lane.b32.xlu0 %v1152, 96
        %v1250 = vpop.permute.xlu0 %1249
        %1253 = vrot.lane.b32.xlu0 %v1148, 80
        %v1254 = vpop.permute.xlu0 %1253
        %1255 = vrot.lane.b32.xlu0 %v1152, 80
        %v1256 = vpop.permute.xlu0 %1255
        %1259 = vrot.lane.b32.xlu0 %v1148, 64
        %v1260 = vpop.permute.xlu0 %1259
        %1261 = vrot.lane.b32.xlu0 %v1152, 64
        %v1262 = vpop.permute.xlu0 %1261
        %1265 = vrot.lane.b32.xlu0 %v1148, 48
        %v1266 = vpop.permute.xlu0 %1265
        %1267 = vrot.lane.b32.xlu0 %v1152, 48
        %v1268 = vpop.permute.xlu0 %1267
        %1271 = vrot.lane.b32.xlu0 %v1148, 32
        %v1272 = vpop.permute.xlu0 %1271
        %1273 = vrot.lane.b32.xlu0 %v1152, 32
        %v1274 = vpop.permute.xlu0 %1273
        %1277 = vrot.lane.b32.xlu0 %v1148, 16
        %v1278 = vpop.permute.xlu0 %1277
        %1279 = vrot.lane.b32.xlu0 %v1152, 16
        %v1280 = vpop.permute.xlu0 %1279
        %1285 = vrot.lane.b32.xlu0 %v1189, 112
        %v1286 = vpop.permute.xlu0 %1285
        %1287 = vrot.lane.b32.xlu0 %v1192, 112
        %v1288 = vpop.permute.xlu0 %1287
        %1291 = vrot.lane.b32.xlu0 %v1189, 96
        %v1292 = vpop.permute.xlu0 %1291
        %1293 = vrot.lane.b32.xlu0 %v1192, 96
        %v1294 = vpop.permute.xlu0 %1293
        %1297 = vrot.lane.b32.xlu0 %v1189, 80
        %v1298 = vpop.permute.xlu0 %1297
        %1299 = vrot.lane.b32.xlu0 %v1192, 80
        %v1300 = vpop.permute.xlu0 %1299
        %1303 = vrot.lane.b32.xlu0 %v1189, 64
        %v1304 = vpop.permute.xlu0 %1303
        %1305 = vrot.lane.b32.xlu0 %v1192, 64
        %v1306 = vpop.permute.xlu0 %1305
        %1309 = vrot.lane.b32.xlu0 %v1189, 48
        %v1310 = vpop.permute.xlu0 %1309
        %1311 = vrot.lane.b32.xlu0 %v1192, 48
        %v1312 = vpop.permute.xlu0 %1311
        %1315 = vrot.lane.b32.xlu0 %v1189, 32
        %v1316 = vpop.permute.xlu0 %1315
        %1317 = vrot.lane.b32.xlu0 %v1192, 32
        %v1318 = vpop.permute.xlu0 %1317
        %1321 = vrot.lane.b32.xlu0 %v1189, 16
        %v1322 = vpop.permute.xlu0 %1321
        %1323 = vrot.lane.b32.xlu0 %v1192, 16
        %v1324 = vpop.permute.xlu0 %1323
        %v1327 = vpack.c.bf16 %v1150, %v1146
        %v1328 = vpack.c.bf16 %v1200, %v1198
        %v1329 = vpack.c.bf16 %v1206, %v1204
        %v1330 = vpack.c.bf16 %v1212, %v1210
        %v1331 = vpack.c.bf16 %v1218, %v1216
        %v1332 = vpack.c.bf16 %v1224, %v1222
        %v1333 = vpack.c.bf16 %v1230, %v1228
        %v1334 = vpack.c.bf16 %v1236, %v1234
        %v1335 = vpack.c.bf16 %v1152, %v1148
        %v1336 = vpack.c.bf16 %v1244, %v1242
        %v1337 = vpack.c.bf16 %v1250, %v1248
        %v1338 = vpack.c.bf16 %v1256, %v1254
        %v1339 = vpack.c.bf16 %v1262, %v1260
        %v1340 = vpack.c.bf16 %v1268, %v1266
        %v1341 = vpack.c.bf16 %v1274, %v1272
        %v1342 = vpack.c.bf16 %v1280, %v1278
        %v1343 = vld [vmem:[#allocation3] sm:$0xff]
        %v1344 = vld [vmem:[#allocation3 + $0x8] sm:$0xff]
        %v1345 = vld [vmem:[#allocation3 + $0x10] sm:$0xff]
        %v1346 = vld [vmem:[#allocation3 + $0x18] sm:$0xff]
        %v1347 = vld [vmem:[#allocation3 + $0x20] sm:$0xff]
        %v1348 = vld [vmem:[#allocation3 + $0x28] sm:$0xff]
        %v1349 = vld [vmem:[#allocation3 + $0x30] sm:$0xff]
        %v1350 = vld [vmem:[#allocation3 + $0x38] sm:$0xff]
        %v1351 = vld [vmem:[#allocation3 + $0x40] sm:$0xff]
        %v1352 = vld [vmem:[#allocation3 + $0x48] sm:$0xff]
        %v1353 = vld [vmem:[#allocation3 + $0x50] sm:$0xff]
        %v1354 = vld [vmem:[#allocation3 + $0x58] sm:$0xff]
        %v1355 = vld [vmem:[#allocation3 + $0x60] sm:$0xff]
        %v1356 = vld [vmem:[#allocation3 + $0x68] sm:$0xff]
        %v1357 = vld [vmem:[#allocation3 + $0x70] sm:$0xff]
        %v1358 = vld [vmem:[#allocation3 + $0x78] sm:$0xff]
        %vm1359 = vcmask 130048
        %v1361 = vsel %vm1359, %v1327, 0
        %v1364 = vsel %vm1359, %v1328, 0
        %v1367 = vsel %vm1359, %v1329, 0
        %v1370 = vsel %vm1359, %v1330, 0
        %v1373 = vsel %vm1359, %v1331, 0
        %v1376 = vsel %vm1359, %v1332, 0
        %v1379 = vsel %vm1359, %v1333, 0
        %v1382 = vsel %vm1359, %v1334, 0
        %v1385 = vsel %vm1359, %v1335, 0
        %v1388 = vsel %vm1359, %v1336, 0
        %v1391 = vsel %vm1359, %v1337, 0
        %v1394 = vsel %vm1359, %v1338, 0
        %v1397 = vsel %vm1359, %v1339, 0
        %v1400 = vsel %vm1359, %v1340, 0
        %v1403 = vsel %vm1359, %v1341, 0
        %v1406 = vsel %vm1359, %v1342, 0
        %1408 = vmatprep.subr.bf16.mxu0 0
        %1409 = vmatpush1.bf16.xpose.msra.mxu0 %v1406
        %1410 = vmatprep.subr.bf16.mxu0 0
        %1411 = vmatpush1.bf16.xpose.msra.mxu0 %v1403
        %1412 = vmatprep.subr.bf16.mxu0 0
        %1413 = vmatpush1.bf16.xpose.msra.mxu0 %v1400
        %1414 = vmatprep.subr.bf16.mxu0 0
        %1415 = vmatpush1.bf16.xpose.msra.mxu0 %v1397
        %1416 = vmatprep.subr.bf16.mxu0 0
        %1417 = vmatpush1.bf16.xpose.msra.mxu0 %v1394
        %1418 = vmatprep.subr.bf16.mxu0 0
        %1419 = vmatpush1.bf16.xpose.msra.mxu0 %v1391
        %1420 = vmatprep.subr.bf16.mxu0 0
        %1421 = vmatpush1.bf16.xpose.msra.mxu0 %v1388
        %1422 = vmatprep.subr.bf16.mxu0 0
        %1423 = vmatpush1.bf16.xpose.msra.mxu0 %v1385
        %1424 = vmatprep.subr.bf16.mxu0 0
        %1425 = vmatpush2.bf16.xpose.msra.mxu0 0
        %1426 = vmatprep.subr.bf16.mxu0 0
        %1427 = vmatpush2.bf16.xpose.msra.mxu0 0
        %1428 = vmatprep.subr.bf16.mxu0 0
        %1429 = vmatpush2.bf16.xpose.msra.mxu0 0
        %1430 = vmatprep.subr.bf16.mxu0 0
        %1431 = vmatpush2.bf16.xpose.msra.mxu0 0
        %1432 = vmatprep.subr.bf16.mxu0 0
        %1433 = vmatpush2.bf16.xpose.msra.mxu0 0
        %1434 = vmatprep.subr.bf16.mxu0 0
        %1435 = vmatpush2.bf16.xpose.msra.mxu0 0
        %1436 = vmatprep.subr.bf16.mxu0 0
        %1437 = vmatpush2.bf16.xpose.msra.mxu0 0
        %1438 = vmatprep.subr.bf16.mxu0 0
        %1439 = vmatpush2.bf16.xpose.msra.mxu0 0
        %1440 = vmatprep.mubr.bf16.mxu0 0
        %1441 = vmatmul.mubr.bf16.gmra.mxu0 %v1361
        %v1442 = vpop.f32.mrf.mxu0
        %v1443 = vadd.f32 %v1343, %v1442
        %v1444 = vpop.f32.mrf.mxu0
        %v1445 = vpop.f32.mrf.mxu0
        %v1446 = vadd.f32 %v1344, %v1445
        %v1447 = vpop.f32.mrf.mxu0
        %1448 = vmatprep.mubr.bf16.mxu0 0
        %1449 = vmatmul.mubr.bf16.gmra.mxu0 %v1364
        %v1450 = vpop.f32.mrf.mxu0
        %v1451 = vadd.f32 %v1345, %v1450
        %v1452 = vpop.f32.mrf.mxu0
        %v1453 = vpop.f32.mrf.mxu0
        %v1454 = vadd.f32 %v1346, %v1453
        %v1455 = vpop.f32.mrf.mxu0
        %1456 = vmatprep.mubr.bf16.mxu0 0
        %1457 = vmatmul.mubr.bf16.gmra.mxu0 %v1367
        %v1458 = vpop.f32.mrf.mxu0
        %v1459 = vadd.f32 %v1347, %v1458
        %v1460 = vpop.f32.mrf.mxu0
        %v1461 = vpop.f32.mrf.mxu0
        %v1462 = vadd.f32 %v1348, %v1461
        %v1463 = vpop.f32.mrf.mxu0
        %1464 = vmatprep.mubr.bf16.mxu0 0
        %1465 = vmatmul.mubr.bf16.gmra.mxu0 %v1370
        %v1466 = vpop.f32.mrf.mxu0
        %v1467 = vadd.f32 %v1349, %v1466
        %v1468 = vpop.f32.mrf.mxu0
        %v1469 = vpop.f32.mrf.mxu0
        %v1470 = vadd.f32 %v1350, %v1469
        %v1471 = vpop.f32.mrf.mxu0
        %1472 = vmatprep.mubr.bf16.mxu0 0
        %1473 = vmatmul.mubr.bf16.gmra.mxu0 %v1373
        %v1474 = vpop.f32.mrf.mxu0
        %v1475 = vadd.f32 %v1351, %v1474
        %v1476 = vpop.f32.mrf.mxu0
        %v1477 = vpop.f32.mrf.mxu0
        %v1478 = vadd.f32 %v1352, %v1477
        %v1479 = vpop.f32.mrf.mxu0
        %1480 = vmatprep.mubr.bf16.mxu0 0
        %1481 = vmatmul.mubr.bf16.gmra.mxu0 %v1376
        %v1482 = vpop.f32.mrf.mxu0
        %v1483 = vadd.f32 %v1353, %v1482
        %v1484 = vpop.f32.mrf.mxu0
        %v1485 = vpop.f32.mrf.mxu0
        %v1486 = vadd.f32 %v1354, %v1485
        %v1487 = vpop.f32.mrf.mxu0
        %1488 = vmatprep.mubr.bf16.mxu0 0
        %1489 = vmatmul.mubr.bf16.gmra.mxu0 %v1379
        %v1490 = vpop.f32.mrf.mxu0
        %v1491 = vadd.f32 %v1355, %v1490
        %v1492 = vpop.f32.mrf.mxu0
        %v1493 = vpop.f32.mrf.mxu0
        %v1494 = vadd.f32 %v1356, %v1493
        %v1495 = vpop.f32.mrf.mxu0
        %1496 = vmatprep.mubr.bf16.mxu0 0
        %1497 = vmatmul.mubr.bf16.gmra.mxu0 %v1382
        %v1498 = vpop.f32.mrf.mxu0
        %v1499 = vadd.f32 %v1357, %v1498
        %v1500 = vpop.f32.mrf.mxu0
        %v1501 = vpop.f32.mrf.mxu0
        %v1502 = vadd.f32 %v1358, %v1501
        %v1503 = vpop.f32.mrf.mxu0
        %1504 = vdwg.mxu0
        %1505 = vmax.xlane.f32.xlu0 %v1443
        %v1506 = vpop.xlane.xlu0 %1505
        %1507 = vmax.xlane.f32.xlu0 %v1446
        %v1508 = vpop.xlane.xlu0 %1507
        %1509 = vmax.xlane.f32.xlu0 %v1451
        %v1510 = vpop.xlane.xlu0 %1509
        %1511 = vmax.xlane.f32.xlu0 %v1454
        %v1512 = vpop.xlane.xlu0 %1511
        %1513 = vmax.xlane.f32.xlu0 %v1459
        %v1514 = vpop.xlane.xlu0 %1513
        %1515 = vmax.xlane.f32.xlu0 %v1462
        %v1516 = vpop.xlane.xlu0 %1515
        %1517 = vmax.xlane.f32.xlu0 %v1467
        %v1518 = vpop.xlane.xlu0 %1517
        %1519 = vmax.xlane.f32.xlu0 %v1470
        %v1520 = vpop.xlane.xlu0 %1519
        %1521 = vmax.xlane.f32.xlu0 %v1475
        %v1522 = vpop.xlane.xlu0 %1521
        %1523 = vmax.xlane.f32.xlu0 %v1478
        %v1524 = vpop.xlane.xlu0 %1523
        %1525 = vmax.xlane.f32.xlu0 %v1483
        %v1526 = vpop.xlane.xlu0 %1525
        %1527 = vmax.xlane.f32.xlu0 %v1486
        %v1528 = vpop.xlane.xlu0 %1527
        %1529 = vmax.xlane.f32.xlu0 %v1491
        %v1530 = vpop.xlane.xlu0 %1529
        %1531 = vmax.xlane.f32.xlu0 %v1494
        %v1532 = vpop.xlane.xlu0 %1531
        %1533 = vmax.xlane.f32.xlu0 %v1499
        %v1534 = vpop.xlane.xlu0 %1533
        %1535 = vmax.xlane.f32.xlu0 %v1502
        %v1536 = vpop.xlane.xlu0 %1535
        %v1537 = vsub.f32 %v1443, %v1506
        %v1538 = vsub.f32 %v1446, %v1508
        %v1539 = vsub.f32 %v1451, %v1510
        %v1540 = vsub.f32 %v1454, %v1512
        %v1541 = vsub.f32 %v1459, %v1514
        %v1542 = vsub.f32 %v1462, %v1516
        %v1543 = vsub.f32 %v1467, %v1518
        %v1544 = vsub.f32 %v1470, %v1520
        %v1545 = vsub.f32 %v1475, %v1522
        %v1546 = vsub.f32 %v1478, %v1524
        %v1547 = vsub.f32 %v1483, %v1526
        %v1548 = vsub.f32 %v1486, %v1528
        %v1549 = vsub.f32 %v1491, %v1530
        %v1550 = vsub.f32 %v1494, %v1532
        %v1551 = vsub.f32 %v1499, %v1534
        %v1552 = vsub.f32 %v1502, %v1536
        %v1553 = vmul.f32 %v1537, 1.442695
        %v1554 = vpow.pop %v1553
        %v1555 = vmul.f32 %v1538, 1.442695
        %v1556 = vpow.pop %v1555
        %v1557 = vmul.f32 %v1539, 1.442695
        %v1558 = vpow.pop %v1557
        %v1559 = vmul.f32 %v1540, 1.442695
        %v1560 = vpow.pop %v1559
        %v1561 = vmul.f32 %v1541, 1.442695
        %v1562 = vpow.pop %v1561
        %v1563 = vmul.f32 %v1542, 1.442695
        %v1564 = vpow.pop %v1563
        %v1565 = vmul.f32 %v1543, 1.442695
        %v1566 = vpow.pop %v1565
        %v1567 = vmul.f32 %v1544, 1.442695
        %v1568 = vpow.pop %v1567
        %v1569 = vmul.f32 %v1545, 1.442695
        %v1570 = vpow.pop %v1569
        %v1571 = vmul.f32 %v1546, 1.442695
        %v1572 = vpow.pop %v1571
        %v1573 = vmul.f32 %v1547, 1.442695
        %v1574 = vpow.pop %v1573
        %v1575 = vmul.f32 %v1548, 1.442695
        %v1576 = vpow.pop %v1575
        %v1577 = vmul.f32 %v1549, 1.442695
        %v1578 = vpow.pop %v1577
        %v1579 = vmul.f32 %v1550, 1.442695
        %v1580 = vpow.pop %v1579
        %v1581 = vmul.f32 %v1551, 1.442695
        %v1582 = vpow.pop %v1581
        %v1583 = vmul.f32 %v1552, 1.442695
        %v1584 = vpow.pop %v1583
        %1585 = vadd.xlane.f32.xlu0 %v1554
        %v1586 = vpop.xlane.xlu0 %1585
        %1587 = vadd.xlane.f32.xlu0 %v1556
        %v1588 = vpop.xlane.xlu0 %1587
        %1589 = vadd.xlane.f32.xlu0 %v1558
        %v1590 = vpop.xlane.xlu0 %1589
        %1591 = vadd.xlane.f32.xlu0 %v1560
        %v1592 = vpop.xlane.xlu0 %1591
        %1593 = vadd.xlane.f32.xlu0 %v1562
        %v1594 = vpop.xlane.xlu0 %1593
        %1595 = vadd.xlane.f32.xlu0 %v1564
        %v1596 = vpop.xlane.xlu0 %1595
        %1597 = vadd.xlane.f32.xlu0 %v1566
        %v1598 = vpop.xlane.xlu0 %1597
        %1599 = vadd.xlane.f32.xlu0 %v1568
        %v1600 = vpop.xlane.xlu0 %1599
        %1601 = vadd.xlane.f32.xlu0 %v1570
        %v1602 = vpop.xlane.xlu0 %1601
        %1603 = vadd.xlane.f32.xlu0 %v1572
        %v1604 = vpop.xlane.xlu0 %1603
        %1605 = vadd.xlane.f32.xlu0 %v1574
        %v1606 = vpop.xlane.xlu0 %1605
        %1607 = vadd.xlane.f32.xlu0 %v1576
        %v1608 = vpop.xlane.xlu0 %1607
        %1609 = vadd.xlane.f32.xlu0 %v1578
        %v1610 = vpop.xlane.xlu0 %1609
        %1611 = vadd.xlane.f32.xlu0 %v1580
        %v1612 = vpop.xlane.xlu0 %1611
        %1613 = vadd.xlane.f32.xlu0 %v1582
        %v1614 = vpop.xlane.xlu0 %1613
        %1615 = vadd.xlane.f32.xlu0 %v1584
        %v1616 = vpop.xlane.xlu0 %1615
        %v1617 = vrcp.pop %v1586
        %v1618 = vrcp.pop %v1588
        %v1619 = vrcp.pop %v1590
        %v1620 = vrcp.pop %v1592
        %v1621 = vrcp.pop %v1594
        %v1622 = vrcp.pop %v1596
        %v1623 = vrcp.pop %v1598
        %v1624 = vrcp.pop %v1600
        %v1625 = vrcp.pop %v1602
        %v1626 = vrcp.pop %v1604
        %v1627 = vrcp.pop %v1606
        %v1628 = vrcp.pop %v1608
        %v1629 = vrcp.pop %v1610
        %v1630 = vrcp.pop %v1612
        %v1631 = vrcp.pop %v1614
        %v1632 = vrcp.pop %v1616
        %v1633 = vmul.f32 %v1554, %v1617
        %v1634 = vmul.f32 %v1556, %v1618
        %v1635 = vmul.f32 %v1558, %v1619
        %v1636 = vmul.f32 %v1560, %v1620
        %v1637 = vmul.f32 %v1562, %v1621
        %v1638 = vmul.f32 %v1564, %v1622
        %v1639 = vmul.f32 %v1566, %v1623
        %v1640 = vmul.f32 %v1568, %v1624
        %v1641 = vmul.f32 %v1570, %v1625
        %v1642 = vmul.f32 %v1572, %v1626
        %v1643 = vmul.f32 %v1574, %v1627
        %v1644 = vmul.f32 %v1576, %v1628
        %v1645 = vmul.f32 %v1578, %v1629
        %v1646 = vmul.f32 %v1580, %v1630
        %v1647 = vmul.f32 %v1582, %v1631
        %v1648 = vmul.f32 %v1584, %v1632
        %v1649 = vpack.c.bf16 %v1634, %v1633
        %v1650 = vpack.c.bf16 %v1636, %v1635
        %v1651 = vpack.c.bf16 %v1638, %v1637
        %v1652 = vpack.c.bf16 %v1640, %v1639
        %v1653 = vpack.c.bf16 %v1642, %v1641
        %v1654 = vpack.c.bf16 %v1644, %v1643
        %v1655 = vpack.c.bf16 %v1646, %v1645
        %v1656 = vpack.c.bf16 %v1648, %v1647
        %v1657 = vpack.c.bf16 %v1192, %v1189
        %v1658 = vpack.c.bf16 %v1288, %v1286
        %v1659 = vpack.c.bf16 %v1294, %v1292
        %v1660 = vpack.c.bf16 %v1300, %v1298
        %v1661 = vpack.c.bf16 %v1306, %v1304
        %v1662 = vpack.c.bf16 %v1312, %v1310
        %v1663 = vpack.c.bf16 %v1318, %v1316
        %v1664 = vpack.c.bf16 %v1324, %v1322
        %1665 = vmatprep.subr.bf16.mxu0 0
        %1666 = vmatpush1.bf16.msra.mxu0 %v1664
        %1667 = vmatprep.subr.bf16.mxu0 0
        %1668 = vmatpush1.bf16.msra.mxu0 %v1663
        %1669 = vmatprep.subr.bf16.mxu0 0
        %1670 = vmatpush1.bf16.msra.mxu0 %v1662
        %1671 = vmatprep.subr.bf16.mxu0 0
        %1672 = vmatpush1.bf16.msra.mxu0 %v1661
        %1673 = vmatprep.subr.bf16.mxu0 0
        %1674 = vmatpush1.bf16.msra.mxu0 %v1660
        %1675 = vmatprep.subr.bf16.mxu0 0
        %1676 = vmatpush1.bf16.msra.mxu0 %v1659
        %1677 = vmatprep.subr.bf16.mxu0 0
        %1678 = vmatpush1.bf16.msra.mxu0 %v1658
        %1679 = vmatprep.subr.bf16.mxu0 0
        %1680 = vmatpush1.bf16.msra.mxu0 %v1657
        %1681 = vmatprep.subr.bf16.mxu0 0
        %1682 = vmatpush2.bf16.msra.mxu0 0
        %1683 = vmatprep.subr.bf16.mxu0 0
        %1684 = vmatpush2.bf16.msra.mxu0 0
        %1685 = vmatprep.subr.bf16.mxu0 0
        %1686 = vmatpush2.bf16.msra.mxu0 0
        %1687 = vmatprep.subr.bf16.mxu0 0
        %1688 = vmatpush2.bf16.msra.mxu0 0
        %1689 = vmatprep.subr.bf16.mxu0 0
        %1690 = vmatpush2.bf16.msra.mxu0 0
        %1691 = vmatprep.subr.bf16.mxu0 0
        %1692 = vmatpush2.bf16.msra.mxu0 0
        %1693 = vmatprep.subr.bf16.mxu0 0
        %1694 = vmatpush2.bf16.msra.mxu0 0
        %1695 = vmatprep.subr.bf16.mxu0 0
        %1696 = vmatpush2.bf16.msra.mxu0 0
        %1697 = vmatprep.mubr.bf16.mxu0 0
        %1698 = vmatmul.mubr.bf16.gmra.mxu0 %v1649
        %v1699 = vpop.f32.mrf.mxu0
        %v1700 = vadd.f32 0.0, %v1699
        %v1701 = vpop.f32.mrf.mxu0
        %v1702 = vpop.f32.mrf.mxu0
        %v1703 = vadd.f32 0.0, %v1702
        %v1704 = vpop.f32.mrf.mxu0
        %1705 = vmatprep.mubr.bf16.mxu0 0
        %1706 = vmatmul.mubr.bf16.gmra.mxu0 %v1650
        %v1707 = vpop.f32.mrf.mxu0
        %v1708 = vadd.f32 0.0, %v1707
        %v1709 = vpop.f32.mrf.mxu0
        %v1710 = vpop.f32.mrf.mxu0
        %v1711 = vadd.f32 0.0, %v1710
        %v1712 = vpop.f32.mrf.mxu0
        %1713 = vmatprep.mubr.bf16.mxu0 0
        %1714 = vmatmul.mubr.bf16.gmra.mxu0 %v1651
        %v1715 = vpop.f32.mrf.mxu0
        %v1716 = vadd.f32 0.0, %v1715
        %v1717 = vpop.f32.mrf.mxu0
        %v1718 = vpop.f32.mrf.mxu0
        %v1719 = vadd.f32 0.0, %v1718
        %v1720 = vpop.f32.mrf.mxu0
        %1721 = vmatprep.mubr.bf16.mxu0 0
        %1722 = vmatmul.mubr.bf16.gmra.mxu0 %v1652
        %v1723 = vpop.f32.mrf.mxu0
        %v1724 = vadd.f32 0.0, %v1723
        %v1725 = vpop.f32.mrf.mxu0
        %v1726 = vpop.f32.mrf.mxu0
        %v1727 = vadd.f32 0.0, %v1726
        %v1728 = vpop.f32.mrf.mxu0
        %1729 = vmatprep.mubr.bf16.mxu0 0
        %1730 = vmatmul.mubr.bf16.gmra.mxu0 %v1653
        %v1731 = vpop.f32.mrf.mxu0
        %v1732 = vadd.f32 0.0, %v1731
        %v1733 = vpop.f32.mrf.mxu0
        %v1734 = vpop.f32.mrf.mxu0
        %v1735 = vadd.f32 0.0, %v1734
        %v1736 = vpop.f32.mrf.mxu0
        %1737 = vmatprep.mubr.bf16.mxu0 0
        %1738 = vmatmul.mubr.bf16.gmra.mxu0 %v1654
        %v1739 = vpop.f32.mrf.mxu0
        %v1740 = vadd.f32 0.0, %v1739
        %v1741 = vpop.f32.mrf.mxu0
        %v1742 = vpop.f32.mrf.mxu0
        %v1743 = vadd.f32 0.0, %v1742
        %v1744 = vpop.f32.mrf.mxu0
        %1745 = vmatprep.mubr.bf16.mxu0 0
        %1746 = vmatmul.mubr.bf16.gmra.mxu0 %v1655
        %v1747 = vpop.f32.mrf.mxu0
        %v1748 = vadd.f32 0.0, %v1747
        %v1749 = vpop.f32.mrf.mxu0
        %v1750 = vpop.f32.mrf.mxu0
        %v1751 = vadd.f32 0.0, %v1750
        %v1752 = vpop.f32.mrf.mxu0
        %1753 = vmatprep.mubr.bf16.mxu0 0
        %1754 = vmatmul.mubr.bf16.gmra.mxu0 %v1656
        %v1755 = vpop.f32.mrf.mxu0
        %v1756 = vadd.f32 0.0, %v1755
        %v1757 = vpop.f32.mrf.mxu0
        %v1758 = vpop.f32.mrf.mxu0
        %v1759 = vadd.f32 0.0, %v1758
        %v1760 = vpop.f32.mrf.mxu0
        %1761 = vdwg.mxu0
        %1764 = vrot.lane.b32.xlu0 %v1708, 16
        %v1765 = vpop.permute.xlu0 %1764
        %1766 = vrot.lane.b32.xlu0 %v1711, 16
        %v1767 = vpop.permute.xlu0 %1766
        %1772 = vrot.lane.b32.xlu0 %v1716, 32
        %v1773 = vpop.permute.xlu0 %1772
        %1774 = vrot.lane.b32.xlu0 %v1719, 32
        %v1775 = vpop.permute.xlu0 %1774
        %1780 = vrot.lane.b32.xlu0 %v1724, 48
        %v1781 = vpop.permute.xlu0 %1780
        %1782 = vrot.lane.b32.xlu0 %v1727, 48
        %v1783 = vpop.permute.xlu0 %1782
        %1788 = vrot.lane.b32.xlu0 %v1732, 64
        %v1789 = vpop.permute.xlu0 %1788
        %1790 = vrot.lane.b32.xlu0 %v1735, 64
        %v1791 = vpop.permute.xlu0 %1790
        %1796 = vrot.lane.b32.xlu0 %v1740, 80
        %v1797 = vpop.permute.xlu0 %1796
        %1798 = vrot.lane.b32.xlu0 %v1743, 80
        %v1799 = vpop.permute.xlu0 %1798
        %1804 = vrot.lane.b32.xlu0 %v1748, 96
        %v1805 = vpop.permute.xlu0 %1804
        %1806 = vrot.lane.b32.xlu0 %v1751, 96
        %v1807 = vpop.permute.xlu0 %1806
        %1812 = vrot.lane.b32.xlu0 %v1756, 112
        %v1813 = vpop.permute.xlu0 %1812
        %1814 = vrot.lane.b32.xlu0 %v1759, 112
        %v1815 = vpop.permute.xlu0 %1814
        %v1818 = vsel %vm1359, %v1700, %v1765
        %v1819 = vsel %vm1359, %v1703, %v1767
        %vm1820 = vcmask 261120
        %v1821 = vsel %vm1820, %v1818, %v1773
        %v1822 = vsel %vm1820, %v1819, %v1775
        %vm1823 = vcmask 392192
        %v1824 = vsel %vm1823, %v1821, %v1781
        %v1825 = vsel %vm1823, %v1822, %v1783
        %vm1826 = vcmask 523264
        %v1827 = vsel %vm1826, %v1824, %v1789
        %v1828 = vsel %vm1826, %v1825, %v1791
        %vm1829 = vcmask 654336
        %v1830 = vsel %vm1829, %v1827, %v1797
        %v1831 = vsel %vm1829, %v1828, %v1799
        %vm1832 = vcmask 785408
        %v1833 = vsel %vm1832, %v1830, %v1805
        %v1834 = vsel %vm1832, %v1831, %v1807
        %vm1835 = vcmask 916480
        %v1836 = vsel %vm1835, %v1833, %v1813
        %v1837 = vsel %vm1835, %v1834, %v1815
        %v1838 = vpack.c.bf16 %v1837, %v1836
        %v1839 = vld [vmem:[%s864] sm:$0xf]
        %v1840 = vld [vmem:[%s864 + $0x4] sm:$0xf]
        %v1841 = vld [vmem:[%s864 + $0x8] sm:$0xf]
        %v1842 = vld [vmem:[%s864 + $0xc] sm:$0xf]
        %v1843 = vld [vmem:[%s864 + $0x10] sm:$0xf]
        %v1844 = vld [vmem:[%s864 + $0x14] sm:$0xf]
        %v1845 = vld [vmem:[%s864 + $0x18] sm:$0xf]
        %v1846 = vld [vmem:[%s864 + $0x1c] sm:$0xf]
        %v1847 = vld [vmem:[%s864 + $0x20] sm:$0xf]
        %v1848 = vld [vmem:[%s864 + $0x24] sm:$0xf]
        %v1849 = vld [vmem:[%s864 + $0x28] sm:$0xf]
        %v1850 = vld [vmem:[%s864 + $0x2c] sm:$0xf]
        %v1851 = vld [vmem:[%s864 + $0x30] sm:$0xf]
        %v1852 = vld [vmem:[%s864 + $0x34] sm:$0xf]
        %v1853 = vld [vmem:[%s864 + $0x38] sm:$0xf]
        %v1854 = vld [vmem:[%s864 + $0x3c] sm:$0xf]
        %v1855 = vld [vmem:[%s738] sm:$0x1]
        %v1857 = vlaneseq
        %v1858 = vshrl.u32 %v1857, 7
        %v1859 = vsub.s32 0, %v1858
        %v1860 = vrot.slane %v1855, %v1859
        %v1878 = vunpack.c.l.b16 %v1839
        %v1879 = vunpack.c.l.b16 %v1840
        %v1880 = vunpack.c.l.b16 %v1841
        %v1881 = vunpack.c.l.b16 %v1842
        %v1882 = vunpack.c.l.b16 %v1843
        %v1883 = vunpack.c.l.b16 %v1844
        %v1884 = vunpack.c.l.b16 %v1845
        %v1885 = vunpack.c.l.b16 %v1846
        %v1886 = vunpack.c.l.b16 %v1847
        %v1887 = vunpack.c.l.b16 %v1848
        %v1888 = vunpack.c.l.b16 %v1849
        %v1889 = vunpack.c.l.b16 %v1850
        %v1890 = vunpack.c.l.b16 %v1851
        %v1891 = vunpack.c.l.b16 %v1852
        %v1892 = vunpack.c.l.b16 %v1853
        %v1893 = vunpack.c.l.b16 %v1854
        %v1894 = vpack.c.b16 %v1879, %v1878
        %v1895 = vpack.c.b16 %v1881, %v1880
        %v1896 = vpack.c.b16 %v1883, %v1882
        %v1897 = vpack.c.b16 %v1885, %v1884
        %v1898 = vpack.c.b16 %v1887, %v1886
        %v1899 = vpack.c.b16 %v1889, %v1888
        %v1900 = vpack.c.b16 %v1891, %v1890
        %v1901 = vpack.c.b16 %v1893, %v1892
        %1910 = vmatprep.subr.bf16.mxu0 0
        %1911 = vmatpush1.bf16.msra.mxu0 %v1901
        %1912 = vmatprep.subr.bf16.mxu0 0
        %1913 = vmatpush1.bf16.msra.mxu0 %v1900
        %1914 = vmatprep.subr.bf16.mxu0 0
        %1915 = vmatpush1.bf16.msra.mxu0 %v1899
        %1916 = vmatprep.subr.bf16.mxu0 0
        %1917 = vmatpush1.bf16.msra.mxu0 %v1898
        %1918 = vmatprep.subr.bf16.mxu0 0
        %1919 = vmatpush1.bf16.msra.mxu0 %v1897
        %1920 = vmatprep.subr.bf16.mxu0 0
        %1921 = vmatpush1.bf16.msra.mxu0 %v1896
        %1922 = vmatprep.subr.bf16.mxu0 0
        %1923 = vmatpush1.bf16.msra.mxu0 %v1895
        %1924 = vmatprep.subr.bf16.mxu0 0
        %1925 = vmatpush1.bf16.msra.mxu0 %v1894
        %1926 = vmatprep.subr.bf16.mxu0 0
        %1927 = vmatpush2.bf16.msra.mxu0 0
        %1928 = vmatprep.subr.bf16.mxu0 0
        %1929 = vmatpush2.bf16.msra.mxu0 0
        %1930 = vmatprep.subr.bf16.mxu0 0
        %1931 = vmatpush2.bf16.msra.mxu0 0
        %1932 = vmatprep.subr.bf16.mxu0 0
        %1933 = vmatpush2.bf16.msra.mxu0 0
        %1934 = vmatprep.subr.bf16.mxu0 0
        %1935 = vmatpush2.bf16.msra.mxu0 0
        %1936 = vmatprep.subr.bf16.mxu0 0
        %1937 = vmatpush2.bf16.msra.mxu0 0
        %1938 = vmatprep.subr.bf16.mxu0 0
        %1939 = vmatpush2.bf16.msra.mxu0 0
        %1940 = vmatprep.subr.bf16.mxu0 0
        %1941 = vmatpush2.bf16.msra.mxu0 0
        %1942 = vmatprep.mubr.bf16.mxu0 0
        %1943 = vmatmul.mubr.bf16.gmra.mxu0 %v1838
        %v1944 = vpop.f32.mrf.mxu0
        %v1945 = vadd.f32 %v1860, %v1944
        %v1946 = vpop.f32.mrf.mxu0
        %v1947 = vpop.f32.mrf.mxu0
        %v1948 = vadd.f32 %v1860, %v1947
        %v1949 = vpop.f32.mrf.mxu0
        %1950 = vdwg.mxu0
        %v1951 = vadd.f32 %v931, %v1945
        %v1952 = vadd.f32 %v932, %v1948
        %v1953 = vld [vmem:[%s871] sm:$0x1]
        %v1954 = vld [vmem:[%s874] sm:$0x1]
        %1955 = vadd.xlane.f32.xlu0 %v1951
        %v1956 = vpop.xlane.xlu0 %1955
        %1957 = vadd.xlane.f32.xlu0 %v1952
        %v1958 = vpop.xlane.xlu0 %1957
        %v1959 = vrcp.pop 128.0
        %v1960 = vmul.f32 %v1956, %v1959
        %v1961 = vmul.f32 %v1958, %v1959
        %v1962 = vsub.f32 %v1951, %v1960
        %v1963 = vsub.f32 %v1952, %v1961
        %v1964 = vmul.f32 %v1962, %v1962
        %v1965 = vmul.f32 %v1963, %v1963
        %1966 = vadd.xlane.f32.xlu0 %v1964
        %v1967 = vpop.xlane.xlu0 %1966
        %1968 = vadd.xlane.f32.xlu0 %v1965
        %v1969 = vpop.xlane.xlu0 %1968
        %v1970 = vmul.f32 %v1967, %v1959
        %v1971 = vmul.f32 %v1969, %v1959
        %v1972 = vadd.f32 %v1970, 1e-05
        %v1973 = vadd.f32 %v1971, 1e-05
        %v1974 = vrsqrt.pop %v1972
        %v1975 = vrsqrt.pop %v1973
        %v1976 = vmul.f32 %v1962, %v1974
        %v1977 = vmul.f32 %v1963, %v1975
        %v1979 = vlaneseq
        %v1980 = vshrl.u32 %v1979, 7
        %v1981 = vsub.s32 0, %v1980
        %v1982 = vrot.slane %v1953, %v1981
        %v1984 = vmul.f32 %v1976, %v1982
        %v1985 = vmul.f32 %v1977, %v1982
        %v1987 = vlaneseq
        %v1988 = vshrl.u32 %v1987, 7
        %v1989 = vsub.s32 0, %v1988
        %v1990 = vrot.slane %v1954, %v1989
        %v1992 = vadd.f32 %v1984, %v1990
        %v1993 = vadd.f32 %v1985, %v1990
        %v1994 = vpack.c.bf16 %v1993, %v1992
        %v1995 = vld [vmem:[%s747] sm:$0xff]
        %v1996 = vld [vmem:[%s747 + $0x8] sm:$0xff]
        %v1997 = vld [vmem:[%s747 + $0x10] sm:$0xff]
        %v1998 = vld [vmem:[%s747 + $0x18] sm:$0xff]
        %v1999 = vld [vmem:[%s747 + $0x20] sm:$0xff]
        %v2000 = vld [vmem:[%s747 + $0x28] sm:$0xff]
        %v2001 = vld [vmem:[%s747 + $0x30] sm:$0xff]
        %v2002 = vld [vmem:[%s747 + $0x38] sm:$0xff]
        %v2003 = vld [vmem:[%s747 + $0x40] sm:$0xff]
        %v2004 = vld [vmem:[%s747 + $0x48] sm:$0xff]
        %v2005 = vld [vmem:[%s747 + $0x50] sm:$0xff]
        %v2006 = vld [vmem:[%s747 + $0x58] sm:$0xff]
        %v2007 = vld [vmem:[%s747 + $0x60] sm:$0xff]
        %v2008 = vld [vmem:[%s747 + $0x68] sm:$0xff]
        %v2009 = vld [vmem:[%s747 + $0x70] sm:$0xff]
        %v2010 = vld [vmem:[%s747 + $0x78] sm:$0xff]
        %v2011 = vld [vmem:[%s747 + $0x80] sm:$0xff]
        %v2012 = vld [vmem:[%s747 + $0x88] sm:$0xff]
        %v2013 = vld [vmem:[%s747 + $0x90] sm:$0xff]
        %v2014 = vld [vmem:[%s747 + $0x98] sm:$0xff]
        %v2015 = vld [vmem:[%s747 + $0xa0] sm:$0xff]
        %v2016 = vld [vmem:[%s747 + $0xa8] sm:$0xff]
        %v2017 = vld [vmem:[%s747 + $0xb0] sm:$0xff]
        %v2018 = vld [vmem:[%s747 + $0xb8] sm:$0xff]
        %v2019 = vld [vmem:[%s747 + $0xc0] sm:$0xff]
        %v2020 = vld [vmem:[%s747 + $0xc8] sm:$0xff]
        %v2021 = vld [vmem:[%s747 + $0xd0] sm:$0xff]
        %v2022 = vld [vmem:[%s747 + $0xd8] sm:$0xff]
        %v2023 = vld [vmem:[%s747 + $0xe0] sm:$0xff]
        %v2024 = vld [vmem:[%s747 + $0xe8] sm:$0xff]
        %v2025 = vld [vmem:[%s747 + $0xf0] sm:$0xff]
        %v2026 = vld [vmem:[%s747 + $0xf8] sm:$0xff]
        %v2027 = vld [vmem:[%s868] sm:$0xf]
        %v2029 = vlaneseq
        %v2030 = vshrl.u32 %v2029, 7
        %v2031 = vsub.s32 0, %v2030
        %v2032 = vrot.slane %v2027, %v2031
        %v2033 = vlaneseq
        %v2034 = vshrl.u32 %v2033, 7
        %v2035 = vsub.s32 1, %v2034
        %v2036 = vrot.slane %v2027, %v2035
        %v2037 = vlaneseq
        %v2038 = vshrl.u32 %v2037, 7
        %v2039 = vsub.s32 2, %v2038
        %v2040 = vrot.slane %v2027, %v2039
        %v2041 = vlaneseq
        %v2042 = vshrl.u32 %v2041, 7
        %v2043 = vsub.s32 3, %v2042
        %v2044 = vrot.slane %v2027, %v2043
        %v2081 = vunpack.c.l.b16 %v1995
        %v2082 = vunpack.c.h.b16 %v1995
        %v2083 = vunpack.c.l.b16 %v1996
        %v2084 = vunpack.c.h.b16 %v1996
        %v2085 = vunpack.c.l.b16 %v1997
        %v2086 = vunpack.c.h.b16 %v1997
        %v2087 = vunpack.c.l.b16 %v1998
        %v2088 = vunpack.c.h.b16 %v1998
        %v2089 = vunpack.c.l.b16 %v1999
        %v2090 = vunpack.c.h.b16 %v1999
        %v2091 = vunpack.c.l.b16 %v2000
        %v2092 = vunpack.c.h.b16 %v2000
        %v2093 = vunpack.c.l.b16 %v2001
        %v2094 = vunpack.c.h.b16 %v2001
        %v2095 = vunpack.c.l.b16 %v2002
        %v2096 = vunpack.c.h.b16 %v2002
        %v2097 = vunpack.c.l.b16 %v2003
        %v2098 = vunpack.c.h.b16 %v2003
        %v2099 = vunpack.c.l.b16 %v2004
        %v2100 = vunpack.c.h.b16 %v2004
        %v2101 = vunpack.c.l.b16 %v2005
        %v2102 = vunpack.c.h.b16 %v2005
        %v2103 = vunpack.c.l.b16 %v2006
        %v2104 = vunpack.c.h.b16 %v2006
        %v2105 = vunpack.c.l.b16 %v2007
        %v2106 = vunpack.c.h.b16 %v2007
        %v2107 = vunpack.c.l.b16 %v2008
        %v2108 = vunpack.c.h.b16 %v2008
        %v2109 = vunpack.c.l.b16 %v2009
        %v2110 = vunpack.c.h.b16 %v2009
        %v2111 = vunpack.c.l.b16 %v2010
        %v2112 = vunpack.c.h.b16 %v2010
        %v2113 = vunpack.c.l.b16 %v2011
        %v2114 = vunpack.c.h.b16 %v2011
        %v2115 = vunpack.c.l.b16 %v2012
        %v2116 = vunpack.c.h.b16 %v2012
        %v2117 = vunpack.c.l.b16 %v2013
        %v2118 = vunpack.c.h.b16 %v2013
        %v2119 = vunpack.c.l.b16 %v2014
        %v2120 = vunpack.c.h.b16 %v2014
        %v2121 = vunpack.c.l.b16 %v2015
        %v2122 = vunpack.c.h.b16 %v2015
        %v2123 = vunpack.c.l.b16 %v2016
        %v2124 = vunpack.c.h.b16 %v2016
        %v2125 = vunpack.c.l.b16 %v2017
        %v2126 = vunpack.c.h.b16 %v2017
        %v2127 = vunpack.c.l.b16 %v2018
        %v2128 = vunpack.c.h.b16 %v2018
        %v2129 = vunpack.c.l.b16 %v2019
        %v2130 = vunpack.c.h.b16 %v2019
        %v2131 = vunpack.c.l.b16 %v2020
        %v2132 = vunpack.c.h.b16 %v2020
        %v2133 = vunpack.c.l.b16 %v2021
        %v2134 = vunpack.c.h.b16 %v2021
        %v2135 = vunpack.c.l.b16 %v2022
        %v2136 = vunpack.c.h.b16 %v2022
        %v2137 = vunpack.c.l.b16 %v2023
        %v2138 = vunpack.c.h.b16 %v2023
        %v2139 = vunpack.c.l.b16 %v2024
        %v2140 = vunpack.c.h.b16 %v2024
        %v2141 = vunpack.c.l.b16 %v2025
        %v2142 = vunpack.c.h.b16 %v2025
        %v2143 = vunpack.c.l.b16 %v2026
        %v2144 = vunpack.c.h.b16 %v2026
        %v2145 = vpack.c.b16 %v2085, %v2081
        %v2146 = vpack.c.b16 %v2086, %v2082
        %v2147 = vpack.c.b16 %v2087, %v2083
        %v2148 = vpack.c.b16 %v2088, %v2084
        %v2149 = vpack.c.b16 %v2093, %v2089
        %v2150 = vpack.c.b16 %v2094, %v2090
        %v2151 = vpack.c.b16 %v2095, %v2091
        %v2152 = vpack.c.b16 %v2096, %v2092
        %v2153 = vpack.c.b16 %v2101, %v2097
        %v2154 = vpack.c.b16 %v2102, %v2098
        %v2155 = vpack.c.b16 %v2103, %v2099
        %v2156 = vpack.c.b16 %v2104, %v2100
        %v2157 = vpack.c.b16 %v2109, %v2105
        %v2158 = vpack.c.b16 %v2110, %v2106
        %v2159 = vpack.c.b16 %v2111, %v2107
        %v2160 = vpack.c.b16 %v2112, %v2108
        %v2161 = vpack.c.b16 %v2117, %v2113
        %v2162 = vpack.c.b16 %v2118, %v2114
        %v2163 = vpack.c.b16 %v2119, %v2115
        %v2164 = vpack.c.b16 %v2120, %v2116
        %v2165 = vpack.c.b16 %v2125, %v2121
        %v2166 = vpack.c.b16 %v2126, %v2122
        %v2167 = vpack.c.b16 %v2127, %v2123
        %v2168 = vpack.c.b16 %v2128, %v2124
        %v2169 = vpack.c.b16 %v2133, %v2129
        %v2170 = vpack.c.b16 %v2134, %v2130
        %v2171 = vpack.c.b16 %v2135, %v2131
        %v2172 = vpack.c.b16 %v2136, %v2132
        %v2173 = vpack.c.b16 %v2141, %v2137
        %v2174 = vpack.c.b16 %v2142, %v2138
        %v2175 = vpack.c.b16 %v2143, %v2139
        %v2176 = vpack.c.b16 %v2144, %v2140
        %2209 = vmatprep.subr.bf16.mxu0 %v2174
        %2210 = vmatpush1.bf16.msra.mxu0 %v2173
        %2211 = vmatprep.subr.bf16.mxu0 %v2170
        %2212 = vmatpush1.bf16.msra.mxu0 %v2169
        %2213 = vmatprep.subr.bf16.mxu0 %v2166
        %2214 = vmatpush1.bf16.msra.mxu0 %v2165
        %2215 = vmatprep.subr.bf16.mxu0 %v2162
        %2216 = vmatpush1.bf16.msra.mxu0 %v2161
        %2217 = vmatprep.subr.bf16.mxu0 %v2158
        %2218 = vmatpush1.bf16.msra.mxu0 %v2157
        %2219 = vmatprep.subr.bf16.mxu0 %v2154
        %2220 = vmatpush1.bf16.msra.mxu0 %v2153
        %2221 = vmatprep.subr.bf16.mxu0 %v2150
        %2222 = vmatpush1.bf16.msra.mxu0 %v2149
        %2223 = vmatprep.subr.bf16.mxu0 %v2146
        %2224 = vmatpush1.bf16.msra.mxu0 %v2145
        %2225 = vmatprep.subr.bf16.mxu0 0
        %2226 = vmatpush2.bf16.msra.mxu0 0
        %2227 = vmatprep.subr.bf16.mxu0 0
        %2228 = vmatpush2.bf16.msra.mxu0 0
        %2229 = vmatprep.subr.bf16.mxu0 0
        %2230 = vmatpush2.bf16.msra.mxu0 0
        %2231 = vmatprep.subr.bf16.mxu0 0
        %2232 = vmatpush2.bf16.msra.mxu0 0
        %2233 = vmatprep.subr.bf16.mxu0 0
        %2234 = vmatpush2.bf16.msra.mxu0 0
        %2235 = vmatprep.subr.bf16.mxu0 0
        %2236 = vmatpush2.bf16.msra.mxu0 0
        %2237 = vmatprep.subr.bf16.mxu0 0
        %2238 = vmatpush2.bf16.msra.mxu0 0
        %2239 = vmatprep.subr.bf16.mxu0 0
        %2240 = vmatpush2.bf16.msra.mxu0 0
        %2241 = vmatprep.mubr.bf16.mxu0 0
        %2242 = vmatmul.mubr.bf16.gmra.mxu0 %v1994
        %v2243 = vpop.f32.mrf.mxu0
        %v2244 = vadd.f32 %v2032, %v2243
        %v2245 = vpop.f32.mrf.mxu0
        %v2246 = vadd.f32 %v2036, %v2245
        %v2247 = vpop.f32.mrf.mxu0
        %v2248 = vadd.f32 %v2032, %v2247
        %v2249 = vpop.f32.mrf.mxu0
        %v2250 = vadd.f32 %v2036, %v2249
        %2251 = vdwg.mxu0
        %2252 = vmatprep.subr.bf16.mxu0 %v2176
        %2253 = vmatpush1.bf16.msra.mxu0 %v2175
        %2254 = vmatprep.subr.bf16.mxu0 %v2172
        %2255 = vmatpush1.bf16.msra.mxu0 %v2171
        %2256 = vmatprep.subr.bf16.mxu0 %v2168
        %2257 = vmatpush1.bf16.msra.mxu0 %v2167
        %2258 = vmatprep.subr.bf16.mxu0 %v2164
        %2259 = vmatpush1.bf16.msra.mxu0 %v2163
        %2260 = vmatprep.subr.bf16.mxu0 %v2160
        %2261 = vmatpush1.bf16.msra.mxu0 %v2159
        %2262 = vmatprep.subr.bf16.mxu0 %v2156
        %2263 = vmatpush1.bf16.msra.mxu0 %v2155
        %2264 = vmatprep.subr.bf16.mxu0 %v2152
        %2265 = vmatpush1.bf16.msra.mxu0 %v2151
        %2266 = vmatprep.subr.bf16.mxu0 %v2148
        %2267 = vmatpush1.bf16.msra.mxu0 %v2147
        %2268 = vmatprep.subr.bf16.mxu0 0
        %2269 = vmatpush2.bf16.msra.mxu0 0
        %2270 = vmatprep.subr.bf16.mxu0 0
        %2271 = vmatpush2.bf16.msra.mxu0 0
        %2272 = vmatprep.subr.bf16.mxu0 0
        %2273 = vmatpush2.bf16.msra.mxu0 0
        %2274 = vmatprep.subr.bf16.mxu0 0
        %2275 = vmatpush2.bf16.msra.mxu0 0
        %2276 = vmatprep.subr.bf16.mxu0 0
        %2277 = vmatpush2.bf16.msra.mxu0 0
        %2278 = vmatprep.subr.bf16.mxu0 0
        %2279 = vmatpush2.bf16.msra.mxu0 0
        %2280 = vmatprep.subr.bf16.mxu0 0
        %2281 = vmatpush2.bf16.msra.mxu0 0
        %2282 = vmatprep.subr.bf16.mxu0 0
        %2283 = vmatpush2.bf16.msra.mxu0 0
        %2284 = vmatprep.mubr.bf16.mxu0 0
        %2285 = vmatmul.mubr.bf16.gmra.mxu0 %v1994
        %v2286 = vpop.f32.mrf.mxu0
        %v2287 = vadd.f32 %v2040, %v2286
        %v2288 = vpop.f32.mrf.mxu0
        %v2289 = vadd.f32 %v2044, %v2288
        %v2290 = vpop.f32.mrf.mxu0
        %v2291 = vadd.f32 %v2040, %v2290
        %v2292 = vpop.f32.mrf.mxu0
        %v2293 = vadd.f32 %v2044, %v2292
        %2294 = vdwg.mxu0
        %v2295 = vmax.f32 %v2244, 0.0
        %v2296 = vmax.f32 %v2246, 0.0
        %v2297 = vmax.f32 %v2287, 0.0
        %v2298 = vmax.f32 %v2289, 0.0
        %v2299 = vmax.f32 %v2248, 0.0
        %v2300 = vmax.f32 %v2250, 0.0
        %v2301 = vmax.f32 %v2291, 0.0
        %v2302 = vmax.f32 %v2293, 0.0
        %v2303 = vpack.c.bf16 %v2299, %v2295
        %v2304 = vpack.c.bf16 %v2300, %v2296
        %v2305 = vpack.c.bf16 %v2301, %v2297
        %v2306 = vpack.c.bf16 %v2302, %v2298
        %v2307 = vld [vmem:[%s756] sm:$0xf]
        %v2308 = vld [vmem:[%s756 + $0x4] sm:$0xf]
        %v2309 = vld [vmem:[%s756 + $0x8] sm:$0xf]
        %v2310 = vld [vmem:[%s756 + $0xc] sm:$0xf]
        %v2311 = vld [vmem:[%s756 + $0x10] sm:$0xf]
        %v2312 = vld [vmem:[%s756 + $0x14] sm:$0xf]
        %v2313 = vld [vmem:[%s756 + $0x18] sm:$0xf]
        %v2314 = vld [vmem:[%s756 + $0x1c] sm:$0xf]
        %v2315 = vld [vmem:[%s756 + $0x20] sm:$0xf]
        %v2316 = vld [vmem:[%s756 + $0x24] sm:$0xf]
        %v2317 = vld [vmem:[%s756 + $0x28] sm:$0xf]
        %v2318 = vld [vmem:[%s756 + $0x2c] sm:$0xf]
        %v2319 = vld [vmem:[%s756 + $0x30] sm:$0xf]
        %v2320 = vld [vmem:[%s756 + $0x34] sm:$0xf]
        %v2321 = vld [vmem:[%s756 + $0x38] sm:$0xf]
        %v2322 = vld [vmem:[%s756 + $0x3c] sm:$0xf]
        %v2323 = vld [vmem:[%s756 + $0x40] sm:$0xf]
        %v2324 = vld [vmem:[%s756 + $0x44] sm:$0xf]
        %v2325 = vld [vmem:[%s756 + $0x48] sm:$0xf]
        %v2326 = vld [vmem:[%s756 + $0x4c] sm:$0xf]
        %v2327 = vld [vmem:[%s756 + $0x50] sm:$0xf]
        %v2328 = vld [vmem:[%s756 + $0x54] sm:$0xf]
        %v2329 = vld [vmem:[%s756 + $0x58] sm:$0xf]
        %v2330 = vld [vmem:[%s756 + $0x5c] sm:$0xf]
        %v2331 = vld [vmem:[%s756 + $0x60] sm:$0xf]
        %v2332 = vld [vmem:[%s756 + $0x64] sm:$0xf]
        %v2333 = vld [vmem:[%s756 + $0x68] sm:$0xf]
        %v2334 = vld [vmem:[%s756 + $0x6c] sm:$0xf]
        %v2335 = vld [vmem:[%s756 + $0x70] sm:$0xf]
        %v2336 = vld [vmem:[%s756 + $0x74] sm:$0xf]
        %v2337 = vld [vmem:[%s756 + $0x78] sm:$0xf]
        %v2338 = vld [vmem:[%s756 + $0x7c] sm:$0xf]
        %v2339 = vld [vmem:[%s756 + $0x80] sm:$0xf]
        %v2340 = vld [vmem:[%s756 + $0x84] sm:$0xf]
        %v2341 = vld [vmem:[%s756 + $0x88] sm:$0xf]
        %v2342 = vld [vmem:[%s756 + $0x8c] sm:$0xf]
        %v2343 = vld [vmem:[%s756 + $0x90] sm:$0xf]
        %v2344 = vld [vmem:[%s756 + $0x94] sm:$0xf]
        %v2345 = vld [vmem:[%s756 + $0x98] sm:$0xf]
        %v2346 = vld [vmem:[%s756 + $0x9c] sm:$0xf]
        %v2347 = vld [vmem:[%s756 + $0xa0] sm:$0xf]
        %v2348 = vld [vmem:[%s756 + $0xa4] sm:$0xf]
        %v2349 = vld [vmem:[%s756 + $0xa8] sm:$0xf]
        %v2350 = vld [vmem:[%s756 + $0xac] sm:$0xf]
        %v2351 = vld [vmem:[%s756 + $0xb0] sm:$0xf]
        %v2352 = vld [vmem:[%s756 + $0xb4] sm:$0xf]
        %v2353 = vld [vmem:[%s756 + $0xb8] sm:$0xf]
        %v2354 = vld [vmem:[%s756 + $0xbc] sm:$0xf]
        %v2355 = vld [vmem:[%s756 + $0xc0] sm:$0xf]
        %v2356 = vld [vmem:[%s756 + $0xc4] sm:$0xf]
        %v2357 = vld [vmem:[%s756 + $0xc8] sm:$0xf]
        %v2358 = vld [vmem:[%s756 + $0xcc] sm:$0xf]
        %v2359 = vld [vmem:[%s756 + $0xd0] sm:$0xf]
        %v2360 = vld [vmem:[%s756 + $0xd4] sm:$0xf]
        %v2361 = vld [vmem:[%s756 + $0xd8] sm:$0xf]
        %v2362 = vld [vmem:[%s756 + $0xdc] sm:$0xf]
        %v2363 = vld [vmem:[%s756 + $0xe0] sm:$0xf]
        %v2364 = vld [vmem:[%s756 + $0xe4] sm:$0xf]
        %v2365 = vld [vmem:[%s756 + $0xe8] sm:$0xf]
        %v2366 = vld [vmem:[%s756 + $0xec] sm:$0xf]
        %v2367 = vld [vmem:[%s756 + $0xf0] sm:$0xf]
        %v2368 = vld [vmem:[%s756 + $0xf4] sm:$0xf]
        %v2369 = vld [vmem:[%s756 + $0xf8] sm:$0xf]
        %v2370 = vld [vmem:[%s756 + $0xfc] sm:$0xf]
        %v2371 = vld [vmem:[%s764] sm:$0x1]
        %v2373 = vlaneseq
        %v2374 = vshrl.u32 %v2373, 7
        %v2375 = vsub.s32 0, %v2374
        %v2376 = vrot.slane %v2371, %v2375
        %v2442 = vunpack.c.l.b16 %v2307
        %v2443 = vunpack.c.l.b16 %v2308
        %v2444 = vunpack.c.l.b16 %v2309
        %v2445 = vunpack.c.l.b16 %v2310
        %v2446 = vunpack.c.l.b16 %v2311
        %v2447 = vunpack.c.l.b16 %v2312
        %v2448 = vunpack.c.l.b16 %v2313
        %v2449 = vunpack.c.l.b16 %v2314
        %v2450 = vunpack.c.l.b16 %v2315
        %v2451 = vunpack.c.l.b16 %v2316
        %v2452 = vunpack.c.l.b16 %v2317
        %v2453 = vunpack.c.l.b16 %v2318
        %v2454 = vunpack.c.l.b16 %v2319
        %v2455 = vunpack.c.l.b16 %v2320
        %v2456 = vunpack.c.l.b16 %v2321
        %v2457 = vunpack.c.l.b16 %v2322
        %v2458 = vunpack.c.l.b16 %v2323
        %v2459 = vunpack.c.l.b16 %v2324
        %v2460 = vunpack.c.l.b16 %v2325
        %v2461 = vunpack.c.l.b16 %v2326
        %v2462 = vunpack.c.l.b16 %v2327
        %v2463 = vunpack.c.l.b16 %v2328
        %v2464 = vunpack.c.l.b16 %v2329
        %v2465 = vunpack.c.l.b16 %v2330
        %v2466 = vunpack.c.l.b16 %v2331
        %v2467 = vunpack.c.l.b16 %v2332
        %v2468 = vunpack.c.l.b16 %v2333
        %v2469 = vunpack.c.l.b16 %v2334
        %v2470 = vunpack.c.l.b16 %v2335
        %v2471 = vunpack.c.l.b16 %v2336
        %v2472 = vunpack.c.l.b16 %v2337
        %v2473 = vunpack.c.l.b16 %v2338
        %v2474 = vunpack.c.l.b16 %v2339
        %v2475 = vunpack.c.l.b16 %v2340
        %v2476 = vunpack.c.l.b16 %v2341
        %v2477 = vunpack.c.l.b16 %v2342
        %v2478 = vunpack.c.l.b16 %v2343
        %v2479 = vunpack.c.l.b16 %v2344
        %v2480 = vunpack.c.l.b16 %v2345
        %v2481 = vunpack.c.l.b16 %v2346
        %v2482 = vunpack.c.l.b16 %v2347
        %v2483 = vunpack.c.l.b16 %v2348
        %v2484 = vunpack.c.l.b16 %v2349
        %v2485 = vunpack.c.l.b16 %v2350
        %v2486 = vunpack.c.l.b16 %v2351
        %v2487 = vunpack.c.l.b16 %v2352
        %v2488 = vunpack.c.l.b16 %v2353
        %v2489 = vunpack.c.l.b16 %v2354
        %v2490 = vunpack.c.l.b16 %v2355
        %v2491 = vunpack.c.l.b16 %v2356
        %v2492 = vunpack.c.l.b16 %v2357
        %v2493 = vunpack.c.l.b16 %v2358
        %v2494 = vunpack.c.l.b16 %v2359
        %v2495 = vunpack.c.l.b16 %v2360
        %v2496 = vunpack.c.l.b16 %v2361
        %v2497 = vunpack.c.l.b16 %v2362
        %v2498 = vunpack.c.l.b16 %v2363
        %v2499 = vunpack.c.l.b16 %v2364
        %v2500 = vunpack.c.l.b16 %v2365
        %v2501 = vunpack.c.l.b16 %v2366
        %v2502 = vunpack.c.l.b16 %v2367
        %v2503 = vunpack.c.l.b16 %v2368
        %v2504 = vunpack.c.l.b16 %v2369
        %v2505 = vunpack.c.l.b16 %v2370
        %v2506 = vpack.c.b16 %v2443, %v2442
        %v2507 = vpack.c.b16 %v2445, %v2444
        %v2508 = vpack.c.b16 %v2447, %v2446
        %v2509 = vpack.c.b16 %v2449, %v2448
        %v2510 = vpack.c.b16 %v2451, %v2450
        %v2511 = vpack.c.b16 %v2453, %v2452
        %v2512 = vpack.c.b16 %v2455, %v2454
        %v2513 = vpack.c.b16 %v2457, %v2456
        %v2514 = vpack.c.b16 %v2459, %v2458
        %v2515 = vpack.c.b16 %v2461, %v2460
        %v2516 = vpack.c.b16 %v2463, %v2462
        %v2517 = vpack.c.b16 %v2465, %v2464
        %v2518 = vpack.c.b16 %v2467, %v2466
        %v2519 = vpack.c.b16 %v2469, %v2468
        %v2520 = vpack.c.b16 %v2471, %v2470
        %v2521 = vpack.c.b16 %v2473, %v2472
        %v2522 = vpack.c.b16 %v2475, %v2474
        %v2523 = vpack.c.b16 %v2477, %v2476
        %v2524 = vpack.c.b16 %v2479, %v2478
        %v2525 = vpack.c.b16 %v2481, %v2480
        %v2526 = vpack.c.b16 %v2483, %v2482
        %v2527 = vpack.c.b16 %v2485, %v2484
        %v2528 = vpack.c.b16 %v2487, %v2486
        %v2529 = vpack.c.b16 %v2489, %v2488
        %v2530 = vpack.c.b16 %v2491, %v2490
        %v2531 = vpack.c.b16 %v2493, %v2492
        %v2532 = vpack.c.b16 %v2495, %v2494
        %v2533 = vpack.c.b16 %v2497, %v2496
        %v2534 = vpack.c.b16 %v2499, %v2498
        %v2535 = vpack.c.b16 %v2501, %v2500
        %v2536 = vpack.c.b16 %v2503, %v2502
        %v2537 = vpack.c.b16 %v2505, %v2504
        %2570 = vmatprep.subr.bf16.mxu0 0
        %2571 = vmatpush1.bf16.msra.mxu0 %v2513
        %2572 = vmatprep.subr.bf16.mxu0 0
        %2573 = vmatpush1.bf16.msra.mxu0 %v2512
        %2574 = vmatprep.subr.bf16.mxu0 0
        %2575 = vmatpush1.bf16.msra.mxu0 %v2511
        %2576 = vmatprep.subr.bf16.mxu0 0
        %2577 = vmatpush1.bf16.msra.mxu0 %v2510
        %2578 = vmatprep.subr.bf16.mxu0 0
        %2579 = vmatpush1.bf16.msra.mxu0 %v2509
        %2580 = vmatprep.subr.bf16.mxu0 0
        %2581 = vmatpush1.bf16.msra.mxu0 %v2508
        %2582 = vmatprep.subr.bf16.mxu0 0
        %2583 = vmatpush1.bf16.msra.mxu0 %v2507
        %2584 = vmatprep.subr.bf16.mxu0 0
        %2585 = vmatpush1.bf16.msra.mxu0 %v2506
        %2586 = vmatprep.subr.bf16.mxu0 0
        %2587 = vmatpush2.bf16.msra.mxu0 %v2521
        %2588 = vmatprep.subr.bf16.mxu0 0
        %2589 = vmatpush2.bf16.msra.mxu0 %v2520
        %2590 = vmatprep.subr.bf16.mxu0 0
        %2591 = vmatpush2.bf16.msra.mxu0 %v2519
        %2592 = vmatprep.subr.bf16.mxu0 0
        %2593 = vmatpush2.bf16.msra.mxu0 %v2518
        %2594 = vmatprep.subr.bf16.mxu0 0
        %2595 = vmatpush2.bf16.msra.mxu0 %v2517
        %2596 = vmatprep.subr.bf16.mxu0 0
        %2597 = vmatpush2.bf16.msra.mxu0 %v2516
        %2598 = vmatprep.subr.bf16.mxu0 0
        %2599 = vmatpush2.bf16.msra.mxu0 %v2515
        %2600 = vmatprep.subr.bf16.mxu0 0
        %2601 = vmatpush2.bf16.msra.mxu0 %v2514
        %2602 = vmatprep.mubr.bf16.mxu0 %v2304
        %2603 = vmatmul.mubr.bf16.gmra.mxu0 %v2303
        %v2604 = vpop.f32.mrf.mxu0
        %v2605 = vadd.f32 %v2376, %v2604
        %v2606 = vpop.f32.mrf.mxu0
        %v2607 = vpop.f32.mrf.mxu0
        %v2608 = vadd.f32 %v2376, %v2607
        %v2609 = vpop.f32.mrf.mxu0
        %2610 = vdwg.mxu0
        %2611 = vmatprep.subr.bf16.mxu0 0
        %2612 = vmatpush1.bf16.msra.mxu0 %v2529
        %2613 = vmatprep.subr.bf16.mxu0 0
        %2614 = vmatpush1.bf16.msra.mxu0 %v2528
        %2615 = vmatprep.subr.bf16.mxu0 0
        %2616 = vmatpush1.bf16.msra.mxu0 %v2527
        %2617 = vmatprep.subr.bf16.mxu0 0
        %2618 = vmatpush1.bf16.msra.mxu0 %v2526
        %2619 = vmatprep.subr.bf16.mxu0 0
        %2620 = vmatpush1.bf16.msra.mxu0 %v2525
        %2621 = vmatprep.subr.bf16.mxu0 0
        %2622 = vmatpush1.bf16.msra.mxu0 %v2524
        %2623 = vmatprep.subr.bf16.mxu0 0
        %2624 = vmatpush1.bf16.msra.mxu0 %v2523
        %2625 = vmatprep.subr.bf16.mxu0 0
        %2626 = vmatpush1.bf16.msra.mxu0 %v2522
        %2627 = vmatprep.subr.bf16.mxu0 0
        %2628 = vmatpush2.bf16.msra.mxu0 %v2537
        %2629 = vmatprep.subr.bf16.mxu0 0
        %2630 = vmatpush2.bf16.msra.mxu0 %v2536
        %2631 = vmatprep.subr.bf16.mxu0 0
        %2632 = vmatpush2.bf16.msra.mxu0 %v2535
        %2633 = vmatprep.subr.bf16.mxu0 0
        %2634 = vmatpush2.bf16.msra.mxu0 %v2534
        %2635 = vmatprep.subr.bf16.mxu0 0
        %2636 = vmatpush2.bf16.msra.mxu0 %v2533
        %2637 = vmatprep.subr.bf16.mxu0 0
        %2638 = vmatpush2.bf16.msra.mxu0 %v2532
        %2639 = vmatprep.subr.bf16.mxu0 0
        %2640 = vmatpush2.bf16.msra.mxu0 %v2531
        %2641 = vmatprep.subr.bf16.mxu0 0
        %2642 = vmatpush2.bf16.msra.mxu0 %v2530
        %2643 = vmatprep.mubr.bf16.mxu0 %v2306
        %2644 = vmatmul.mubr.bf16.gmra.mxu0 %v2305
        %v2645 = vpop.f32.mrf.mxu0
        %v2646 = vadd.f32 %v2605, %v2645
        %v2647 = vpop.f32.mrf.mxu0
        %v2648 = vpop.f32.mrf.mxu0
        %v2649 = vadd.f32 %v2608, %v2648
        %v2650 = vpop.f32.mrf.mxu0
        %2651 = vdwg.mxu0
        %v2652 = vadd.f32 %v1992, %v2646
        %v2653 = vadd.f32 %v1993, %v2649
        %v2654 = vld [vmem:[%s877] sm:$0x1]
        %v2655 = vld [vmem:[%s880] sm:$0x1]
        %2656 = vadd.xlane.f32.xlu0 %v2652
        %v2657 = vpop.xlane.xlu0 %2656
        %2658 = vadd.xlane.f32.xlu0 %v2653
        %v2659 = vpop.xlane.xlu0 %2658
        %v2660 = vmul.f32 %v2657, %v1959
        %v2661 = vmul.f32 %v2659, %v1959
        %v2662 = vsub.f32 %v2652, %v2660
        %v2663 = vsub.f32 %v2653, %v2661
        %v2664 = vmul.f32 %v2662, %v2662
        %v2665 = vmul.f32 %v2663, %v2663
        %2666 = vadd.xlane.f32.xlu0 %v2664
        %v2667 = vpop.xlane.xlu0 %2666
        %2668 = vadd.xlane.f32.xlu0 %v2665
        %v2669 = vpop.xlane.xlu0 %2668
        %v2670 = vmul.f32 %v2667, %v1959
        %v2671 = vmul.f32 %v2669, %v1959
        %v2672 = vadd.f32 %v2670, 1e-05
        %v2673 = vadd.f32 %v2671, 1e-05
        %v2674 = vrsqrt.pop %v2672
        %v2675 = vrsqrt.pop %v2673
        %v2676 = vmul.f32 %v2662, %v2674
        %v2677 = vmul.f32 %v2663, %v2675
        %v2679 = vlaneseq
        %v2680 = vshrl.u32 %v2679, 7
        %v2681 = vsub.s32 0, %v2680
        %v2682 = vrot.slane %v2654, %v2681
        %v2684 = vmul.f32 %v2676, %v2682
        %v2685 = vmul.f32 %v2677, %v2682
        %v2687 = vlaneseq
        %v2688 = vshrl.u32 %v2687, 7
        %v2689 = vsub.s32 0, %v2688
        %v2690 = vrot.slane %v2655, %v2689
        %v2692 = vadd.f32 %v2684, %v2690
        %v2693 = vadd.f32 %v2685, %v2690
        %2694 = vst [vmem:[#allocation2] sm:$0xff] %v2692
        %2695 = vst [vmem:[#allocation2 + $0x8] sm:$0xff] %v2693
        %p2696 = scmp.eq.s32.totalorder %s40, 3
        // Predicated region
        $region129: #{forward.1} parent=91 // pred_check
          %p2697 = pneg %p2696
        $region130: #{forward.1} parent=91 // pred_check_branch
          %2699 = sbr.rel (%p2697) target = $region132
        $region131: #{forward.1} parent=91 // pred_region
          %v2700 = vpack.c.bf16 %v2693, %v2692
          %v2701 = vld [vmem:[#allocation14] sm:$0xf]
          %v2702 = vld [vmem:[#allocation14 + $0x4] sm:$0xf]
          %v2703 = vld [vmem:[#allocation14 + $0x8] sm:$0xf]
          %v2704 = vld [vmem:[#allocation14 + $0xc] sm:$0xf]
          %v2705 = vld [vmem:[#allocation14 + $0x10] sm:$0xf]
          %v2706 = vld [vmem:[#allocation14 + $0x14] sm:$0xf]
          %v2707 = vld [vmem:[#allocation14 + $0x18] sm:$0xf]
          %v2708 = vld [vmem:[#allocation14 + $0x1c] sm:$0xf]
          %v2709 = vld [vmem:[#allocation14 + $0x20] sm:$0xf]
          %v2710 = vld [vmem:[#allocation14 + $0x24] sm:$0xf]
          %v2711 = vld [vmem:[#allocation14 + $0x28] sm:$0xf]
          %v2712 = vld [vmem:[#allocation14 + $0x2c] sm:$0xf]
          %v2713 = vld [vmem:[#allocation14 + $0x30] sm:$0xf]
          %v2714 = vld [vmem:[#allocation14 + $0x34] sm:$0xf]
          %v2715 = vld [vmem:[#allocation14 + $0x38] sm:$0xf]
          %v2716 = vld [vmem:[#allocation14 + $0x3c] sm:$0xf]
          %v2717 = vld [vmem:[%s17] sm:$0x1]
          %v2719 = vlaneseq
          %v2720 = vshrl.u32 %v2719, 7
          %v2721 = vsub.s32 0, %v2720
          %v2722 = vrot.slane %v2717, %v2721
          %v2740 = vunpack.c.l.b16 %v2701
          %v2741 = vunpack.c.l.b16 %v2702
          %v2742 = vunpack.c.l.b16 %v2703
          %v2743 = vunpack.c.l.b16 %v2704
          %v2744 = vunpack.c.l.b16 %v2705
          %v2745 = vunpack.c.l.b16 %v2706
          %v2746 = vunpack.c.l.b16 %v2707
          %v2747 = vunpack.c.l.b16 %v2708
          %v2748 = vunpack.c.l.b16 %v2709
          %v2749 = vunpack.c.l.b16 %v2710
          %v2750 = vunpack.c.l.b16 %v2711
          %v2751 = vunpack.c.l.b16 %v2712
          %v2752 = vunpack.c.l.b16 %v2713
          %v2753 = vunpack.c.l.b16 %v2714
          %v2754 = vunpack.c.l.b16 %v2715
          %v2755 = vunpack.c.l.b16 %v2716
          %v2756 = vpack.c.b16 %v2741, %v2740
          %v2757 = vpack.c.b16 %v2743, %v2742
          %v2758 = vpack.c.b16 %v2745, %v2744
          %v2759 = vpack.c.b16 %v2747, %v2746
          %v2760 = vpack.c.b16 %v2749, %v2748
          %v2761 = vpack.c.b16 %v2751, %v2750
          %v2762 = vpack.c.b16 %v2753, %v2752
          %v2763 = vpack.c.b16 %v2755, %v2754
          %2772 = vmatprep.subr.bf16.mxu0 0
          %2773 = vmatpush1.bf16.msra.mxu0 %v2763
          %2774 = vmatprep.subr.bf16.mxu0 0
          %2775 = vmatpush1.bf16.msra.mxu0 %v2762
          %2776 = vmatprep.subr.bf16.mxu0 0
          %2777 = vmatpush1.bf16.msra.mxu0 %v2761
          %2778 = vmatprep.subr.bf16.mxu0 0
          %2779 = vmatpush1.bf16.msra.mxu0 %v2760
          %2780 = vmatprep.subr.bf16.mxu0 0
          %2781 = vmatpush1.bf16.msra.mxu0 %v2759
          %2782 = vmatprep.subr.bf16.mxu0 0
          %2783 = vmatpush1.bf16.msra.mxu0 %v2758
          %2784 = vmatprep.subr.bf16.mxu0 0
          %2785 = vmatpush1.bf16.msra.mxu0 %v2757
          %2786 = vmatprep.subr.bf16.mxu0 0
          %2787 = vmatpush1.bf16.msra.mxu0 %v2756
          %2788 = vmatprep.subr.bf16.mxu0 0
          %2789 = vmatpush2.bf16.msra.mxu0 0
          %2790 = vmatprep.subr.bf16.mxu0 0
          %2791 = vmatpush2.bf16.msra.mxu0 0
          %2792 = vmatprep.subr.bf16.mxu0 0
          %2793 = vmatpush2.bf16.msra.mxu0 0
          %2794 = vmatprep.subr.bf16.mxu0 0
          %2795 = vmatpush2.bf16.msra.mxu0 0
          %2796 = vmatprep.subr.bf16.mxu0 0
          %2797 = vmatpush2.bf16.msra.mxu0 0
          %2798 = vmatprep.subr.bf16.mxu0 0
          %2799 = vmatpush2.bf16.msra.mxu0 0
          %2800 = vmatprep.subr.bf16.mxu0 0
          %2801 = vmatpush2.bf16.msra.mxu0 0
          %2802 = vmatprep.subr.bf16.mxu0 0
          %2803 = vmatpush2.bf16.msra.mxu0 0
          %2804 = vmatprep.mubr.bf16.mxu0 0
          %2805 = vmatmul.mubr.bf16.gmra.mxu0 %v2700
          %v2806 = vpop.f32.mrf.mxu0
          %v2807 = vadd.f32 %v2722, %v2806
          %v2808 = vpop.f32.mrf.mxu0
          %v2809 = vpop.f32.mrf.mxu0
          %v2810 = vadd.f32 %v2722, %v2809
          %v2811 = vpop.f32.mrf.mxu0
          %2812 = vdwg.mxu0
          %2813 = vst [vmem:[%s18] sm:$0xff] %v2807
          %2814 = vst [vmem:[%s18 + $0x8] sm:$0xff] %v2810
        $region132: #{forward.1} parent=91 // pred_fallthru
          _
        // Predicated region
        $region133: #{forward.1} parent=91 // pred_check
          %p2815 = pneg %p491
        $region134: #{forward.1} parent=91 // pred_check_branch
          %2817 = sbr.rel (%p2815) target = $region136
        $region135: #{forward.1} parent=91 // pred_region
          _
        $region136: #{forward.1} parent=91 // pred_fallthru
          _
        // Predicated region
        $region137: #{forward.1} parent=91 // pred_check
          %p2818 = pneg %p491
        $region138: #{forward.1} parent=91 // pred_check_branch
          %2820 = sbr.rel (%p2818) target = $region140
        $region139: #{forward.1} parent=91 // pred_region
          _
        $region140: #{forward.1} parent=91 // pred_fallthru
          _
      $region92: #{forward.1} parent=5 // pred_fallthru
        _
      %p2821 = scmp.le.s32.totalorder 2, %s35
      // Predicated region
      $region141: #{forward.1} parent=5 // pred_check
        %p2822 = pneg %p2821
      $region142: #{forward.1} parent=5 // pred_check_branch
        %2824 = sbr.rel (%p2822) target = $region144
      $region143: #{forward.1} parent=5 // pred_region
        %s2825 = ssub.s32 %s35, 2
      $region144: #{forward.1} parent=5 // pred_fallthru
        _
    $region6: #{forward.1} parent=1 // loop_footer
      %s39 = sadd.s32 1, %s35
    $region7: #{forward.1} parent=1 // loop_footer_branch
      %34 = sbr.rel target = $region3
    $region8: #{forward.1} parent=1 // loop_exit
      _
    %2826 = vsyncpa [#allocation4], 1
    %s2827 = scalar_lea.sflag [#allocation4], 1
    %2828 = vsyncpa %s2827, 1
    %2829 = vsyncpa [#allocation6], 1
    %s2830 = scalar_lea.sflag [#allocation6], 1
    %2831 = vsyncpa %s2830, 1
    %2832 = vsyncpa [#allocation9], 1
    %s2833 = scalar_lea.sflag [#allocation9], 1
    %2834 = vsyncpa %s2833, 1
    %2835 = vsyncpa [#allocation12], 1
    %s2836 = scalar_lea.sflag [#allocation12], 1
    %2837 = vsyncpa %s2836, 1
    %2838 = vsyncpa [#allocation15], 1

</llo_original>
